<compile_context>
chip_gen: v5e
topology: v5e:2x2
jax: 0.10.0
libtpu: 0.0.40
codegen_flags: <defaults>
</compile_context>

<pallas_src>
import jax
import jax.numpy as jnp
from jax import lax
from jax.experimental import pallas as pl
from jax.experimental.pallas import tpu as pltpu

_EPS = 1e-5  # torch.nn.BatchNorm2d default eps


def _resblock_kernel(xp_ref, w1_ref, b1_ref, g1_ref, be1_ref,
                     w2_ref, b2_ref, g2_ref, be2_ref, o_ref):
    """Fused ResBlock forward on one whole (N, H+2, W+2, C) block.

    xp_ref : (N, H+2, W+2, C) f32  zero-padded input, NHWC
    w1_ref : (9, C, C)        f32  3x3 conv weights, (tap, Cin, Cout)
    b1_ref : (1, C)           f32  conv1 bias
    g1_ref, be1_ref : (1, C)  f32  BN1 gamma / beta
    w2_ref : (C, C)           f32  1x1 conv weights, (Cin, Cout)
    b2_ref : (1, C)           f32  conv2 bias
    g2_ref, be2_ref : (1, C)  f32  BN2 gamma / beta
    o_ref  : (N, H, W, C)     f32  output, NHWC
    """
    n, hp_, wp_, c = xp_ref.shape
    h, w = hp_ - 2, wp_ - 2
    m = n * h * w

    xp = xp_ref[...]                           # (N, H+2, W+2, C)
    hpad = jnp.maximum(xp, 0.0)                # ReLU; relu(0)=0 keeps the zero pad

    # --- Conv2d(dim, dim, 3, stride=1, padding=1): 9 shifted MXU matmuls -----
    acc = jnp.zeros((m, c), jnp.float32)
    for k in range(9):                         # static unrolled taps
        dy, dx = k // 3, k % 3
        slab = hpad[:, dy:dy + h, dx:dx + w, :].reshape(m, c)
        acc = acc + jnp.dot(slab, w1_ref[k], preferred_element_type=jnp.float32)
    y = acc + b1_ref[...]

    # --- BatchNorm2d #1 (training-mode batch stats over N*H*W, per channel) --
    mean1 = jnp.mean(y, axis=0, keepdims=True)
    yc = y - mean1
    var1 = jnp.mean(yc * yc, axis=0, keepdims=True)     # biased, as in torch
    y = yc * lax.rsqrt(var1 + _EPS) * g1_ref[...] + be1_ref[...]

    # --- ReLU + Conv2d(dim, dim, 1): one MXU matmul ---------------------------
    y = jnp.maximum(y, 0.0)
    z = jnp.dot(y, w2_ref[...], preferred_element_type=jnp.float32) + b2_ref[...]

    # --- BatchNorm2d #2 -------------------------------------------------------
    mean2 = jnp.mean(z, axis=0, keepdims=True)
    zc = z - mean2
    var2 = jnp.mean(zc * zc, axis=0, keepdims=True)
    z = zc * lax.rsqrt(var2 + _EPS) * g2_ref[...] + be2_ref[...]

    # --- Residual add with the original (un-ReLU'd) interior -----------------
    x = xp[:, 1:1 + h, 1:1 + w, :].reshape(m, c)
    o_ref[...] = (x + z).reshape(n, h, w, c).astype(o_ref.dtype)


@jax.jit
def resblock_forward(x, w1, b1, g1, be1, w2, b2, g2, be2):
    """ResBlock.forward: x (N, C, H, W) f32 -> (N, C, H, W) f32."""
    n, c, h, w = x.shape

    # NCHW -> NHWC (channels on the 128-lane axis) and zero-pad H/W by 1 once.
    x_nhwc = jnp.transpose(x, (0, 2, 3, 1))
    xp = jnp.pad(x_nhwc, ((0, 0), (1, 1), (1, 1), (0, 0)))

    # Hoisted weight re-layouts (done once per call, outside the kernel).
    w1k = jnp.transpose(w1, (2, 3, 1, 0)).reshape(9, c, c)   # (tap, Cin, Cout)
    w2k = jnp.transpose(w2.reshape(c, c), (1, 0))            # (Cin, Cout)
    row = lambda v: v.reshape(1, c)

    out_nhwc = pl.pallas_call(
        _resblock_kernel,
        out_shape=jax.ShapeDtypeStruct((n, h, w, c), x.dtype),
        in_specs=[pl.BlockSpec(memory_space=pltpu.MemorySpace.VMEM)] * 9,
        out_specs=pl.BlockSpec(memory_space=pltpu.MemorySpace.VMEM),
        compiler_params=pltpu.CompilerParams(
            vmem_limit_bytes=32 * 1024 * 1024),
    )(xp, w1k, row(b1), row(g1), row(be1), w2k, row(b2), row(g2), row(be2))

    return jnp.transpose(out_nhwc, (0, 3, 1, 2))


def _reference(x, w1, b1, g1, be1, w2, b2, g2, be2):
    """Pure-JAX reference mirroring torch ResBlock.forward (training-mode BN)."""
    hi = lax.Precision.HIGHEST

    def bn(t, gamma, beta):
        mean = jnp.mean(t, axis=(0, 2, 3), keepdims=True)
        var = jnp.var(t, axis=(0, 2, 3), keepdims=True)    # biased (ddof=0)
        return ((t - mean) / jnp.sqrt(var + _EPS)
                * gamma[None, :, None, None] + beta[None, :, None, None])

    h = jnp.maximum(x, 0.0)
    y = lax.conv_general_dilated(h, w1, (1, 1), ((1, 1), (1, 1)),
                                 dimension_numbers=("NCHW", "OIHW", "NCHW"),
                                 precision=hi)
    y = bn(y + b1[None, :, None, None], g1, be1)
    y = jnp.maximum(y, 0.0)
    z = lax.conv_general_dilated(y, w2, (1, 1), ((0, 0), (0, 0)),
                                 dimension_numbers=("NCHW", "OIHW", "NCHW"),
                                 precision=hi)
    z = bn(z + b2[None, :, None, None], g2, be2)
    return x + z


if __name__ == "__main__":
    N, C, H, W = 2, 128, 16, 16   # dim=128 -> exactly one 128-lane group

    key = jax.random.PRNGKey(0)
    kx, kw1, kb1, kw2, kb2, kg1, kbe1, kg2, kbe2 = jax.random.split(key, 9)

    x = jax.random.normal(kx, (N, C, H, W), jnp.float32)
    w1 = jax.random.normal(kw1, (C, C, 3, 3), jnp.float32) / jnp.sqrt(9.0 * C)
    b1 = 0.1 * jax.random.normal(kb1, (C,), jnp.float32)
    w2 = jax.random.normal(kw2, (C, C, 1, 1), jnp.float32) / jnp.sqrt(1.0 * C)
    b2 = 0.1 * jax.random.normal(kb2, (C,), jnp.float32)
    g1 = 1.0 + 0.1 * jax.random.normal(kg1, (C,), jnp.float32)
    be1 = 0.1 * jax.random.normal(kbe1, (C,), jnp.float32)
    g2 = 1.0 + 0.1 * jax.random.normal(kg2, (C,), jnp.float32)
    be2 = 0.1 * jax.random.normal(kbe2, (C,), jnp.float32)

    out = resblock_forward(x, w1, b1, g1, be1, w2, b2, g2, be2)
    jax.block_until_ready(out)

    ref = _reference(x, w1, b1, g1, be1, w2, b2, g2, be2)
    assert out.shape == x.shape
    err = float(jnp.max(jnp.abs(out - ref)))
    assert bool(jnp.allclose(out, ref, atol=1e-2, rtol=1e-2)), err
    print("KERNEL_OK")
</pallas_src>

<mosaic_0001>
module attributes {stable_mosaic.version = 11 : i64} {
  func.func @_resblock_kernel(%arg0: memref<2x18x18x128xf32, #tpu.memory_space<vmem>>, %arg1: memref<9x128x128xf32, #tpu.memory_space<vmem>>, %arg2: memref<1x128xf32, #tpu.memory_space<vmem>>, %arg3: memref<1x128xf32, #tpu.memory_space<vmem>>, %arg4: memref<1x128xf32, #tpu.memory_space<vmem>>, %arg5: memref<128x128xf32, #tpu.memory_space<vmem>>, %arg6: memref<1x128xf32, #tpu.memory_space<vmem>>, %arg7: memref<1x128xf32, #tpu.memory_space<vmem>>, %arg8: memref<1x128xf32, #tpu.memory_space<vmem>>, %arg9: memref<2x16x16x128xf32, #tpu.memory_space<vmem>>) attributes {dimension_semantics = [], scalar_prefetch = 0 : i64, scratch_operands = 0 : i64, tpu.core_type = #tpu.core_type<tc>} {
    %c0 = arith.constant 0 : index
    %c0_0 = arith.constant 0 : index
    %c0_1 = arith.constant 0 : index
    %c0_2 = arith.constant 0 : index
    %0 = vector.load %arg0[%c0, %c0_0, %c0_1, %c0_2] : memref<2x18x18x128xf32, #tpu.memory_space<vmem>>, vector<2x18x18x128xf32>
    %cst = arith.constant 0.000000e+00 : f32
    %1 = vector.broadcast %cst : f32 to vector<2x18x18x128xf32>
    %2 = arith.maximumf %0, %1 : vector<2x18x18x128xf32>
    %cst_3 = arith.constant 0.000000e+00 : f32
    %3 = vector.broadcast %cst_3 : f32 to vector<512x128xf32>
    %4 = vector.extract_strided_slice %2 {offsets = [0, 0, 0, 0], sizes = [2, 16, 16, 128], strides = [1, 1, 1, 1]} : vector<2x18x18x128xf32> to vector<2x16x16x128xf32>
    %5 = vector.shape_cast %4 : vector<2x16x16x128xf32> to vector<512x128xf32>
    %c0_4 = arith.constant 0 : index
    %c0_5 = arith.constant 0 : index
    %c0_6 = arith.constant 0 : index
    %6 = vector.load %arg1[%c0_4, %c0_5, %c0_6] : memref<9x128x128xf32, #tpu.memory_space<vmem>>, vector<1x128x128xf32>
    %7 = vector.shape_cast %6 : vector<1x128x128xf32> to vector<128x128xf32>
    %cst_7 = arith.constant dense<0.000000e+00> : vector<512x128xf32>
    %8 = tpu.matmul %5, %7, %cst_7 {dimension_numbers = #tpu.dot_dimension_numbers<[1], [0], [0], [1], [0, 0, 1, 1], [], []>} : vector<512x128xf32>, vector<128x128xf32>, vector<512x128xf32> -> vector<512x128xf32>
    %9 = arith.addf %3, %8 : vector<512x128xf32>
    %10 = vector.extract_strided_slice %2 {offsets = [0, 0, 1, 0], sizes = [2, 16, 16, 128], strides = [1, 1, 1, 1]} : vector<2x18x18x128xf32> to vector<2x16x16x128xf32>
    %11 = vector.shape_cast %10 : vector<2x16x16x128xf32> to vector<512x128xf32>
    %c1 = arith.constant 1 : index
    %c0_8 = arith.constant 0 : index
    %c0_9 = arith.constant 0 : index
    %12 = vector.load %arg1[%c1, %c0_8, %c0_9] : memref<9x128x128xf32, #tpu.memory_space<vmem>>, vector<1x128x128xf32>
    %13 = vector.shape_cast %12 : vector<1x128x128xf32> to vector<128x128xf32>
    %cst_10 = arith.constant dense<0.000000e+00> : vector<512x128xf32>
    %14 = tpu.matmul %11, %13, %cst_10 {dimension_numbers = #tpu.dot_dimension_numbers<[1], [0], [0], [1], [0, 0, 1, 1], [], []>} : vector<512x128xf32>, vector<128x128xf32>, vector<512x128xf32> -> vector<512x128xf32>
    %15 = arith.addf %9, %14 : vector<512x128xf32>
    %16 = vector.extract_strided_slice %2 {offsets = [0, 0, 2, 0], sizes = [2, 16, 16, 128], strides = [1, 1, 1, 1]} : vector<2x18x18x128xf32> to vector<2x16x16x128xf32>
    %17 = vector.shape_cast %16 : vector<2x16x16x128xf32> to vector<512x128xf32>
    %c2 = arith.constant 2 : index
    %c0_11 = arith.constant 0 : index
    %c0_12 = arith.constant 0 : index
    %18 = vector.load %arg1[%c2, %c0_11, %c0_12] : memref<9x128x128xf32, #tpu.memory_space<vmem>>, vector<1x128x128xf32>
    %19 = vector.shape_cast %18 : vector<1x128x128xf32> to vector<128x128xf32>
    %cst_13 = arith.constant dense<0.000000e+00> : vector<512x128xf32>
    %20 = tpu.matmul %17, %19, %cst_13 {dimension_numbers = #tpu.dot_dimension_numbers<[1], [0], [0], [1], [0, 0, 1, 1], [], []>} : vector<512x128xf32>, vector<128x128xf32>, vector<512x128xf32> -> vector<512x128xf32>
    %21 = arith.addf %15, %20 : vector<512x128xf32>
    %22 = vector.extract_strided_slice %2 {offsets = [0, 1, 0, 0], sizes = [2, 16, 16, 128], strides = [1, 1, 1, 1]} : vector<2x18x18x128xf32> to vector<2x16x16x128xf32>
    %23 = vector.shape_cast %22 : vector<2x16x16x128xf32> to vector<512x128xf32>
    %c3 = arith.constant 3 : index
    %c0_14 = arith.constant 0 : index
    %c0_15 = arith.constant 0 : index
    %24 = vector.load %arg1[%c3, %c0_14, %c0_15] : memref<9x128x128xf32, #tpu.memory_space<vmem>>, vector<1x128x128xf32>
    %25 = vector.shape_cast %24 : vector<1x128x128xf32> to vector<128x128xf32>
    %cst_16 = arith.constant dense<0.000000e+00> : vector<512x128xf32>
    %26 = tpu.matmul %23, %25, %cst_16 {dimension_numbers = #tpu.dot_dimension_numbers<[1], [0], [0], [1], [0, 0, 1, 1], [], []>} : vector<512x128xf32>, vector<128x128xf32>, vector<512x128xf32> -> vector<512x128xf32>
    %27 = arith.addf %21, %26 : vector<512x128xf32>
    %28 = vector.extract_strided_slice %2 {offsets = [0, 1, 1, 0], sizes = [2, 16, 16, 128], strides = [1, 1, 1, 1]} : vector<2x18x18x128xf32> to vector<2x16x16x128xf32>
    %29 = vector.shape_cast %28 : vector<2x16x16x128xf32> to vector<512x128xf32>
    %c4 = arith.constant 4 : index
    %c0_17 = arith.constant 0 : index
    %c0_18 = arith.constant 0 : index
    %30 = vector.load %arg1[%c4, %c0_17, %c0_18] : memref<9x128x128xf32, #tpu.memory_space<vmem>>, vector<1x128x128xf32>
    %31 = vector.shape_cast %30 : vector<1x128x128xf32> to vector<128x128xf32>
    %cst_19 = arith.constant dense<0.000000e+00> : vector<512x128xf32>
    %32 = tpu.matmul %29, %31, %cst_19 {dimension_numbers = #tpu.dot_dimension_numbers<[1], [0], [0], [1], [0, 0, 1, 1], [], []>} : vector<512x128xf32>, vector<128x128xf32>, vector<512x128xf32> -> vector<512x128xf32>
    %33 = arith.addf %27, %32 : vector<512x128xf32>
    %34 = vector.extract_strided_slice %2 {offsets = [0, 1, 2, 0], sizes = [2, 16, 16, 128], strides = [1, 1, 1, 1]} : vector<2x18x18x128xf32> to vector<2x16x16x128xf32>
    %35 = vector.shape_cast %34 : vector<2x16x16x128xf32> to vector<512x128xf32>
    %c5 = arith.constant 5 : index
    %c0_20 = arith.constant 0 : index
    %c0_21 = arith.constant 0 : index
    %36 = vector.load %arg1[%c5, %c0_20, %c0_21] : memref<9x128x128xf32, #tpu.memory_space<vmem>>, vector<1x128x128xf32>
    %37 = vector.shape_cast %36 : vector<1x128x128xf32> to vector<128x128xf32>
    %cst_22 = arith.constant dense<0.000000e+00> : vector<512x128xf32>
    %38 = tpu.matmul %35, %37, %cst_22 {dimension_numbers = #tpu.dot_dimension_numbers<[1], [0], [0], [1], [0, 0, 1, 1], [], []>} : vector<512x128xf32>, vector<128x128xf32>, vector<512x128xf32> -> vector<512x128xf32>
    %39 = arith.addf %33, %38 : vector<512x128xf32>
    %40 = vector.extract_strided_slice %2 {offsets = [0, 2, 0, 0], sizes = [2, 16, 16, 128], strides = [1, 1, 1, 1]} : vector<2x18x18x128xf32> to vector<2x16x16x128xf32>
    %41 = vector.shape_cast %40 : vector<2x16x16x128xf32> to vector<512x128xf32>
    %c6 = arith.constant 6 : index
    %c0_23 = arith.constant 0 : index
    %c0_24 = arith.constant 0 : index
    %42 = vector.load %arg1[%c6, %c0_23, %c0_24] : memref<9x128x128xf32, #tpu.memory_space<vmem>>, vector<1x128x128xf32>
    %43 = vector.shape_cast %42 : vector<1x128x128xf32> to vector<128x128xf32>
    %cst_25 = arith.constant dense<0.000000e+00> : vector<512x128xf32>
    %44 = tpu.matmul %41, %43, %cst_25 {dimension_numbers = #tpu.dot_dimension_numbers<[1], [0], [0], [1], [0, 0, 1, 1], [], []>} : vector<512x128xf32>, vector<128x128xf32>, vector<512x128xf32> -> vector<512x128xf32>
    %45 = arith.addf %39, %44 : vector<512x128xf32>
    %46 = vector.extract_strided_slice %2 {offsets = [0, 2, 1, 0], sizes = [2, 16, 16, 128], strides = [1, 1, 1, 1]} : vector<2x18x18x128xf32> to vector<2x16x16x128xf32>
    %47 = vector.shape_cast %46 : vector<2x16x16x128xf32> to vector<512x128xf32>
    %c7 = arith.constant 7 : index
    %c0_26 = arith.constant 0 : index
    %c0_27 = arith.constant 0 : index
    %48 = vector.load %arg1[%c7, %c0_26, %c0_27] : memref<9x128x128xf32, #tpu.memory_space<vmem>>, vector<1x128x128xf32>
    %49 = vector.shape_cast %48 : vector<1x128x128xf32> to vector<128x128xf32>
    %cst_28 = arith.constant dense<0.000000e+00> : vector<512x128xf32>
    %50 = tpu.matmul %47, %49, %cst_28 {dimension_numbers = #tpu.dot_dimension_numbers<[1], [0], [0], [1], [0, 0, 1, 1], [], []>} : vector<512x128xf32>, vector<128x128xf32>, vector<512x128xf32> -> vector<512x128xf32>
    %51 = arith.addf %45, %50 : vector<512x128xf32>
    %52 = vector.extract_strided_slice %2 {offsets = [0, 2, 2, 0], sizes = [2, 16, 16, 128], strides = [1, 1, 1, 1]} : vector<2x18x18x128xf32> to vector<2x16x16x128xf32>
    %53 = vector.shape_cast %52 : vector<2x16x16x128xf32> to vector<512x128xf32>
    %c8 = arith.constant 8 : index
    %c0_29 = arith.constant 0 : index
    %c0_30 = arith.constant 0 : index
    %54 = vector.load %arg1[%c8, %c0_29, %c0_30] : memref<9x128x128xf32, #tpu.memory_space<vmem>>, vector<1x128x128xf32>
    %55 = vector.shape_cast %54 : vector<1x128x128xf32> to vector<128x128xf32>
    %cst_31 = arith.constant dense<0.000000e+00> : vector<512x128xf32>
    %56 = tpu.matmul %53, %55, %cst_31 {dimension_numbers = #tpu.dot_dimension_numbers<[1], [0], [0], [1], [0, 0, 1, 1], [], []>} : vector<512x128xf32>, vector<128x128xf32>, vector<512x128xf32> -> vector<512x128xf32>
    %57 = arith.addf %51, %56 : vector<512x128xf32>
    %c0_32 = arith.constant 0 : index
    %c0_33 = arith.constant 0 : index
    %58 = vector.load %arg2[%c0_32, %c0_33] : memref<1x128xf32, #tpu.memory_space<vmem>>, vector<1x128xf32>
    %59 = vector.broadcast %58 : vector<1x128xf32> to vector<512x128xf32>
    %60 = arith.addf %57, %59 : vector<512x128xf32>
    %cst_34 = arith.constant dense<0.000000e+00> : vector<128xf32>
    %61 = vector.multi_reduction <add>, %60, %cst_34 [0] : vector<512x128xf32> to vector<128xf32>
    %62 = vector.shape_cast %61 : vector<128xf32> to vector<1x128xf32>
    %cst_35 = arith.constant 5.120000e+02 : f32
    %63 = vector.broadcast %cst_35 : f32 to vector<1x128xf32>
    %64 = arith.divf %62, %63 : vector<1x128xf32>
    %65 = vector.broadcast %64 : vector<1x128xf32> to vector<512x128xf32>
    %66 = arith.subf %60, %65 : vector<512x128xf32>
    %67 = arith.mulf %66, %66 : vector<512x128xf32>
    %cst_36 = arith.constant dense<0.000000e+00> : vector<128xf32>
    %68 = vector.multi_reduction <add>, %67, %cst_36 [0] : vector<512x128xf32> to vector<128xf32>
    %69 = vector.shape_cast %68 : vector<128xf32> to vector<1x128xf32>
    %cst_37 = arith.constant 5.120000e+02 : f32
    %70 = vector.broadcast %cst_37 : f32 to vector<1x128xf32>
    %71 = arith.divf %69, %70 : vector<1x128xf32>
    %cst_38 = arith.constant 9.99999974E-6 : f32
    %72 = vector.broadcast %cst_38 : f32 to vector<1x128xf32>
    %73 = arith.addf %71, %72 : vector<1x128xf32>
    %74 = math.rsqrt %73 : vector<1x128xf32>
    %75 = vector.broadcast %74 : vector<1x128xf32> to vector<512x128xf32>
    %76 = arith.mulf %66, %75 : vector<512x128xf32>
    %c0_39 = arith.constant 0 : index
    %c0_40 = arith.constant 0 : index
    %77 = vector.load %arg3[%c0_39, %c0_40] : memref<1x128xf32, #tpu.memory_space<vmem>>, vector<1x128xf32>
    %78 = vector.broadcast %77 : vector<1x128xf32> to vector<512x128xf32>
    %79 = arith.mulf %76, %78 : vector<512x128xf32>
    %c0_41 = arith.constant 0 : index
    %c0_42 = arith.constant 0 : index
    %80 = vector.load %arg4[%c0_41, %c0_42] : memref<1x128xf32, #tpu.memory_space<vmem>>, vector<1x128xf32>
    %81 = vector.broadcast %80 : vector<1x128xf32> to vector<512x128xf32>
    %82 = arith.addf %79, %81 : vector<512x128xf32>
    %cst_43 = arith.constant 0.000000e+00 : f32
    %83 = vector.broadcast %cst_43 : f32 to vector<512x128xf32>
    %84 = arith.maximumf %82, %83 : vector<512x128xf32>
    %c0_44 = arith.constant 0 : index
    %c0_45 = arith.constant 0 : index
    %85 = vector.load %arg5[%c0_44, %c0_45] : memref<128x128xf32, #tpu.memory_space<vmem>>, vector<128x128xf32>
    %cst_46 = arith.constant dense<0.000000e+00> : vector<512x128xf32>
    %86 = tpu.matmul %84, %85, %cst_46 {dimension_numbers = #tpu.dot_dimension_numbers<[1], [0], [0], [1], [0, 0, 1, 1], [], []>} : vector<512x128xf32>, vector<128x128xf32>, vector<512x128xf32> -> vector<512x128xf32>
    %c0_47 = arith.constant 0 : index
    %c0_48 = arith.constant 0 : index
    %87 = vector.load %arg6[%c0_47, %c0_48] : memref<1x128xf32, #tpu.memory_space<vmem>>, vector<1x128xf32>
    %88 = vector.broadcast %87 : vector<1x128xf32> to vector<512x128xf32>
    %89 = arith.addf %86, %88 : vector<512x128xf32>
    %cst_49 = arith.constant dense<0.000000e+00> : vector<128xf32>
    %90 = vector.multi_reduction <add>, %89, %cst_49 [0] : vector<512x128xf32> to vector<128xf32>
    %91 = vector.shape_cast %90 : vector<128xf32> to vector<1x128xf32>
    %cst_50 = arith.constant 5.120000e+02 : f32
    %92 = vector.broadcast %cst_50 : f32 to vector<1x128xf32>
    %93 = arith.divf %91, %92 : vector<1x128xf32>
    %94 = vector.broadcast %93 : vector<1x128xf32> to vector<512x128xf32>
    %95 = arith.subf %89, %94 : vector<512x128xf32>
    %96 = arith.mulf %95, %95 : vector<512x128xf32>
    %cst_51 = arith.constant dense<0.000000e+00> : vector<128xf32>
    %97 = vector.multi_reduction <add>, %96, %cst_51 [0] : vector<512x128xf32> to vector<128xf32>
    %98 = vector.shape_cast %97 : vector<128xf32> to vector<1x128xf32>
    %cst_52 = arith.constant 5.120000e+02 : f32
    %99 = vector.broadcast %cst_52 : f32 to vector<1x128xf32>
    %100 = arith.divf %98, %99 : vector<1x128xf32>
    %cst_53 = arith.constant 9.99999974E-6 : f32
    %101 = vector.broadcast %cst_53 : f32 to vector<1x128xf32>
    %102 = arith.addf %100, %101 : vector<1x128xf32>
    %103 = math.rsqrt %102 : vector<1x128xf32>
    %104 = vector.broadcast %103 : vector<1x128xf32> to vector<512x128xf32>
    %105 = arith.mulf %95, %104 : vector<512x128xf32>
    %c0_54 = arith.constant 0 : index
    %c0_55 = arith.constant 0 : index
    %106 = vector.load %arg7[%c0_54, %c0_55] : memref<1x128xf32, #tpu.memory_space<vmem>>, vector<1x128xf32>
    %107 = vector.broadcast %106 : vector<1x128xf32> to vector<512x128xf32>
    %108 = arith.mulf %105, %107 : vector<512x128xf32>
    %c0_56 = arith.constant 0 : index
    %c0_57 = arith.constant 0 : index
    %109 = vector.load %arg8[%c0_56, %c0_57] : memref<1x128xf32, #tpu.memory_space<vmem>>, vector<1x128xf32>
    %110 = vector.broadcast %109 : vector<1x128xf32> to vector<512x128xf32>
    %111 = arith.addf %108, %110 : vector<512x128xf32>
    %112 = vector.extract_strided_slice %0 {offsets = [0, 1, 1, 0], sizes = [2, 16, 16, 128], strides = [1, 1, 1, 1]} : vector<2x18x18x128xf32> to vector<2x16x16x128xf32>
    %113 = vector.shape_cast %112 : vector<2x16x16x128xf32> to vector<512x128xf32>
    %114 = arith.addf %113, %111 : vector<512x128xf32>
    %115 = vector.shape_cast %114 : vector<512x128xf32> to vector<2x16x16x128xf32>
    %c0_58 = arith.constant 0 : index
    %c0_59 = arith.constant 0 : index
    %c0_60 = arith.constant 0 : index
    %c0_61 = arith.constant 0 : index
    %116 = vector.load %arg9[%c0_58, %c0_59, %c0_60, %c0_61] : memref<2x16x16x128xf32, #tpu.memory_space<vmem>>, vector<2x16x16x128xf32>
    tpu.vector_store %arg9[%c0_58, %c0_59, %c0_60, %c0_61], %115 {strides = array<i32>} : memref<2x16x16x128xf32, #tpu.memory_space<vmem>>, vector<2x16x16x128xf32>,
    return
  }
}

</mosaic_0001>

<llo_original>
// kernel: resblock_forward.1
$region0: #{resblock_forward.1}
  #allocation0 [shape = 'u32[]', space=smem, size = 0x4, offset = 0x4, fixed_abs, tag = 'smem constant byte address 0x4 - core index']
  #allocation1 [shape = 'u32[72,128]{1,0:T(1,128)}', space=vmem, size = 0x9000, scoped, tag = 'internal scratch']
  %s0 = inlined_call_operand.vmem [shape: f32[2,18,18,128], index: 0, kind: input, shape index: {}]
  %s1 = inlined_call_operand.vmem [shape: f32[9,128,128], index: 1, kind: input, shape index: {}]
  %s2 = inlined_call_operand.vmem [shape: f32[1,128], index: 2, kind: input, shape index: {}]
  %s3 = inlined_call_operand.vmem [shape: f32[1,128], index: 3, kind: input, shape index: {}]
  %s4 = inlined_call_operand.vmem [shape: f32[1,128], index: 4, kind: input, shape index: {}]
  %s5 = inlined_call_operand.vmem [shape: f32[128,128], index: 5, kind: input, shape index: {}]
  %s6 = inlined_call_operand.vmem [shape: f32[1,128], index: 6, kind: input, shape index: {}]
  %s7 = inlined_call_operand.vmem [shape: f32[1,128], index: 7, kind: input, shape index: {}]
  %s8 = inlined_call_operand.vmem [shape: f32[1,128], index: 8, kind: input, shape index: {}]
  %s9 = inlined_call_operand.hbm [shape: f32[2,16,16,128], index: 9, kind: output, shape index: {}]
  %s10 = sld [smem:[#allocation0]]
  $region46: #{resblock_forward.1} parent=0
    _
  %s12 = ssub.s32 1, %s10
  %s13 = scalar_select 0, %s12, %s10
  $region1: #{resblock_forward.1} parent=0
    #allocation2 [shape = 'u8[262144]{0}', space=vmem, size = 0x40000, scoped, tag = 'output window, operand 0, single buffered']
    #allocation3 [shape = 's32[1]{0}', space=sflag, size = 0x4, scoped, tag = 'scoped memory for resblock_forward.1']
    %14 = vsyncpa [#allocation3], 0
    // Predicated region
    $region2: #{resblock_forward.1} parent=1 // pred_check
      _
    $region3: #{resblock_forward.1} parent=1 // pred_check_branch
      %16 = sbr.rel (0) target = $region5
    $region4: #{resblock_forward.1} parent=1 // pred_region
      _
    $region5: #{resblock_forward.1} parent=1 // pred_fallthru
      _
    // Predicated region
    $region6: #{resblock_forward.1} parent=1 // pred_check
      _
    $region7: #{resblock_forward.1} parent=1 // pred_check_branch
      %18 = sbr.rel (0) target = $region9
    $region8: #{resblock_forward.1} parent=1 // pred_region
      _
    $region9: #{resblock_forward.1} parent=1 // pred_fallthru
      _
    // Predicated region
    $region10: #{resblock_forward.1} parent=1 // pred_check
      _
    $region11: #{resblock_forward.1} parent=1 // pred_check_branch
      %20 = sbr.rel (0) target = $region13
    $region12: #{resblock_forward.1} parent=1 // pred_region
      _
    $region13: #{resblock_forward.1} parent=1 // pred_fallthru
      _
    // Predicated region
    $region14: #{resblock_forward.1} parent=1 // pred_check
      _
    $region15: #{resblock_forward.1} parent=1 // pred_check_branch
      %22 = sbr.rel (0) target = $region17
    $region16: #{resblock_forward.1} parent=1 // pred_region
      _
    $region17: #{resblock_forward.1} parent=1 // pred_fallthru
      _
    // Predicated region
    $region18: #{resblock_forward.1} parent=1 // pred_check
      _
    $region19: #{resblock_forward.1} parent=1 // pred_check_branch
      %24 = sbr.rel (0) target = $region21
    $region20: #{resblock_forward.1} parent=1 // pred_region
      _
    $region21: #{resblock_forward.1} parent=1 // pred_fallthru
      _
    // Predicated region
    $region22: #{resblock_forward.1} parent=1 // pred_check
      _
    $region23: #{resblock_forward.1} parent=1 // pred_check_branch
      %26 = sbr.rel (0) target = $region25
    $region24: #{resblock_forward.1} parent=1 // pred_region
      _
    $region25: #{resblock_forward.1} parent=1 // pred_fallthru
      _
    // Predicated region
    $region26: #{resblock_forward.1} parent=1 // pred_check
      _
    $region27: #{resblock_forward.1} parent=1 // pred_check_branch
      %28 = sbr.rel (0) target = $region29
    $region28: #{resblock_forward.1} parent=1 // pred_region
      _
    $region29: #{resblock_forward.1} parent=1 // pred_fallthru
      _
    // Predicated region
    $region30: #{resblock_forward.1} parent=1 // pred_check
      _
    $region31: #{resblock_forward.1} parent=1 // pred_check_branch
      %30 = sbr.rel (0) target = $region33
    $region32: #{resblock_forward.1} parent=1 // pred_region
      _
    $region33: #{resblock_forward.1} parent=1 // pred_fallthru
      _
    // Predicated region
    $region34: #{resblock_forward.1} parent=1 // pred_check
      _
    $region35: #{resblock_forward.1} parent=1 // pred_check_branch
      %32 = sbr.rel (0) target = $region37
    $region36: #{resblock_forward.1} parent=1 // pred_region
      _
    $region37: #{resblock_forward.1} parent=1 // pred_fallthru
      _
    %v33 = vld [vmem:[%s0] sm:$0xff]
    %v34 = vld [vmem:[%s0 + $0x8] sm:$0xff]
    %v35 = vld [vmem:[%s0 + $0x10] sm:$0x3]
    %v36 = vld [vmem:[%s0 + $0x18] sm:$0xff]
    %v37 = vld [vmem:[%s0 + $0x20] sm:$0xff]
    %v38 = vld [vmem:[%s0 + $0x28] sm:$0x3]
    %v39 = vld [vmem:[%s0 + $0x30] sm:$0xff]
    %v40 = vld [vmem:[%s0 + $0x38] sm:$0xff]
    %v41 = vld [vmem:[%s0 + $0x40] sm:$0x3]
    %v42 = vld [vmem:[%s0 + $0x48] sm:$0xff]
    %v43 = vld [vmem:[%s0 + $0x50] sm:$0xff]
    %v44 = vld [vmem:[%s0 + $0x58] sm:$0x3]
    %v45 = vld [vmem:[%s0 + $0x60] sm:$0xff]
    %v46 = vld [vmem:[%s0 + $0x68] sm:$0xff]
    %v47 = vld [vmem:[%s0 + $0x70] sm:$0x3]
    %v48 = vld [vmem:[%s0 + $0x78] sm:$0xff]
    %v49 = vld [vmem:[%s0 + $0x80] sm:$0xff]
    %v50 = vld [vmem:[%s0 + $0x88] sm:$0x3]
    %v51 = vld [vmem:[%s0 + $0x90] sm:$0xff]
    %v52 = vld [vmem:[%s0 + $0x98] sm:$0xff]
    %v53 = vld [vmem:[%s0 + $0xa0] sm:$0x3]
    %v54 = vld [vmem:[%s0 + $0xa8] sm:$0xff]
    %v55 = vld [vmem:[%s0 + $0xb0] sm:$0xff]
    %v56 = vld [vmem:[%s0 + $0xb8] sm:$0x3]
    %v57 = vld [vmem:[%s0 + $0xc0] sm:$0xff]
    %v58 = vld [vmem:[%s0 + $0xc8] sm:$0xff]
    %v59 = vld [vmem:[%s0 + $0xd0] sm:$0x3]
    %v60 = vld [vmem:[%s0 + $0xd8] sm:$0xff]
    %v61 = vld [vmem:[%s0 + $0xe0] sm:$0xff]
    %v62 = vld [vmem:[%s0 + $0xe8] sm:$0x3]
    %v63 = vld [vmem:[%s0 + $0xf0] sm:$0xff]
    %v64 = vld [vmem:[%s0 + $0xf8] sm:$0xff]
    %v65 = vld [vmem:[%s0 + $0x100] sm:$0x3]
    %v66 = vld [vmem:[%s0 + $0x108] sm:$0xff]
    %v67 = vld [vmem:[%s0 + $0x110] sm:$0xff]
    %v68 = vld [vmem:[%s0 + $0x118] sm:$0x3]
    %v69 = vld [vmem:[%s0 + $0x120] sm:$0xff]
    %v70 = vld [vmem:[%s0 + $0x128] sm:$0xff]
    %v71 = vld [vmem:[%s0 + $0x130] sm:$0x3]
    %v72 = vld [vmem:[%s0 + $0x138] sm:$0xff]
    %v73 = vld [vmem:[%s0 + $0x140] sm:$0xff]
    %v74 = vld [vmem:[%s0 + $0x148] sm:$0x3]
    %v75 = vld [vmem:[%s0 + $0x150] sm:$0xff]
    %v76 = vld [vmem:[%s0 + $0x158] sm:$0xff]
    %v77 = vld [vmem:[%s0 + $0x160] sm:$0x3]
    %v78 = vld [vmem:[%s0 + $0x168] sm:$0xff]
    %v79 = vld [vmem:[%s0 + $0x170] sm:$0xff]
    %v80 = vld [vmem:[%s0 + $0x178] sm:$0x3]
    %v81 = vld [vmem:[%s0 + $0x180] sm:$0xff]
    %v82 = vld [vmem:[%s0 + $0x188] sm:$0xff]
    %v83 = vld [vmem:[%s0 + $0x190] sm:$0x3]
    %v84 = vld [vmem:[%s0 + $0x198] sm:$0xff]
    %v85 = vld [vmem:[%s0 + $0x1a0] sm:$0xff]
    %v86 = vld [vmem:[%s0 + $0x1a8] sm:$0x3]
    %v87 = vld [vmem:[%s0 + $0x1b0] sm:$0xff]
    %v88 = vld [vmem:[%s0 + $0x1b8] sm:$0xff]
    %v89 = vld [vmem:[%s0 + $0x1c0] sm:$0x3]
    %v90 = vld [vmem:[%s0 + $0x1c8] sm:$0xff]
    %v91 = vld [vmem:[%s0 + $0x1d0] sm:$0xff]
    %v92 = vld [vmem:[%s0 + $0x1d8] sm:$0x3]
    %v93 = vld [vmem:[%s0 + $0x1e0] sm:$0xff]
    %v94 = vld [vmem:[%s0 + $0x1e8] sm:$0xff]
    %v95 = vld [vmem:[%s0 + $0x1f0] sm:$0x3]
    %v96 = vld [vmem:[%s0 + $0x1f8] sm:$0xff]
    %v97 = vld [vmem:[%s0 + $0x200] sm:$0xff]
    %v98 = vld [vmem:[%s0 + $0x208] sm:$0x3]
    %v99 = vld [vmem:[%s0 + $0x210] sm:$0xff]
    %v100 = vld [vmem:[%s0 + $0x218] sm:$0xff]
    %v101 = vld [vmem:[%s0 + $0x220] sm:$0x3]
    %v102 = vld [vmem:[%s0 + $0x228] sm:$0xff]
    %v103 = vld [vmem:[%s0 + $0x230] sm:$0xff]
    %v104 = vld [vmem:[%s0 + $0x238] sm:$0x3]
    %v105 = vld [vmem:[%s0 + $0x240] sm:$0xff]
    %v106 = vld [vmem:[%s0 + $0x248] sm:$0xff]
    %v107 = vld [vmem:[%s0 + $0x250] sm:$0x3]
    %v108 = vld [vmem:[%s0 + $0x258] sm:$0xff]
    %v109 = vld [vmem:[%s0 + $0x260] sm:$0xff]
    %v110 = vld [vmem:[%s0 + $0x268] sm:$0x3]
    %v111 = vld [vmem:[%s0 + $0x270] sm:$0xff]
    %v112 = vld [vmem:[%s0 + $0x278] sm:$0xff]
    %v113 = vld [vmem:[%s0 + $0x280] sm:$0x3]
    %v114 = vld [vmem:[%s0 + $0x288] sm:$0xff]
    %v115 = vld [vmem:[%s0 + $0x290] sm:$0xff]
    %v116 = vld [vmem:[%s0 + $0x298] sm:$0x3]
    %v117 = vld [vmem:[%s0 + $0x2a0] sm:$0xff]
    %v118 = vld [vmem:[%s0 + $0x2a8] sm:$0xff]
    %v119 = vld [vmem:[%s0 + $0x2b0] sm:$0x3]
    %v120 = vld [vmem:[%s0 + $0x2b8] sm:$0xff]
    %v121 = vld [vmem:[%s0 + $0x2c0] sm:$0xff]
    %v122 = vld [vmem:[%s0 + $0x2c8] sm:$0x3]
    %v123 = vld [vmem:[%s0 + $0x2d0] sm:$0xff]
    %v124 = vld [vmem:[%s0 + $0x2d8] sm:$0xff]
    %v125 = vld [vmem:[%s0 + $0x2e0] sm:$0x3]
    %v126 = vld [vmem:[%s0 + $0x2e8] sm:$0xff]
    %v127 = vld [vmem:[%s0 + $0x2f0] sm:$0xff]
    %v128 = vld [vmem:[%s0 + $0x2f8] sm:$0x3]
    %v129 = vld [vmem:[%s0 + $0x300] sm:$0xff]
    %v130 = vld [vmem:[%s0 + $0x308] sm:$0xff]
    %v131 = vld [vmem:[%s0 + $0x310] sm:$0x3]
    %v132 = vld [vmem:[%s0 + $0x318] sm:$0xff]
    %v133 = vld [vmem:[%s0 + $0x320] sm:$0xff]
    %v134 = vld [vmem:[%s0 + $0x328] sm:$0x3]
    %v135 = vld [vmem:[%s0 + $0x330] sm:$0xff]
    %v136 = vld [vmem:[%s0 + $0x338] sm:$0xff]
    %v137 = vld [vmem:[%s0 + $0x340] sm:$0x3]
    %v138 = vld [vmem:[%s0 + $0x348] sm:$0xff]
    %v139 = vld [vmem:[%s0 + $0x350] sm:$0xff]
    %v140 = vld [vmem:[%s0 + $0x358] sm:$0x3]
    %v141 = vmax.f32 %v33, 0.0
    %v142 = vmax.f32 %v34, 0.0
    %v143 = vmax.f32 %v35, 0.0
    %v144 = vmax.f32 %v36, 0.0
    %v145 = vmax.f32 %v37, 0.0
    %v146 = vmax.f32 %v38, 0.0
    %v147 = vmax.f32 %v39, 0.0
    %v148 = vmax.f32 %v40, 0.0
    %v149 = vmax.f32 %v41, 0.0
    %v150 = vmax.f32 %v42, 0.0
    %v151 = vmax.f32 %v43, 0.0
    %v152 = vmax.f32 %v44, 0.0
    %v153 = vmax.f32 %v45, 0.0
    %v154 = vmax.f32 %v46, 0.0
    %v155 = vmax.f32 %v47, 0.0
    %v156 = vmax.f32 %v48, 0.0
    %v157 = vmax.f32 %v49, 0.0
    %v158 = vmax.f32 %v50, 0.0
    %v159 = vmax.f32 %v51, 0.0
    %v160 = vmax.f32 %v52, 0.0
    %v161 = vmax.f32 %v53, 0.0
    %v162 = vmax.f32 %v54, 0.0
    %v163 = vmax.f32 %v55, 0.0
    %v164 = vmax.f32 %v56, 0.0
    %v165 = vmax.f32 %v57, 0.0
    %v166 = vmax.f32 %v58, 0.0
    %v167 = vmax.f32 %v59, 0.0
    %v168 = vmax.f32 %v60, 0.0
    %v169 = vmax.f32 %v61, 0.0
    %v170 = vmax.f32 %v62, 0.0
    %v171 = vmax.f32 %v63, 0.0
    %v172 = vmax.f32 %v64, 0.0
    %v173 = vmax.f32 %v65, 0.0
    %v174 = vmax.f32 %v66, 0.0
    %v175 = vmax.f32 %v67, 0.0
    %v176 = vmax.f32 %v68, 0.0
    %v177 = vmax.f32 %v69, 0.0
    %v178 = vmax.f32 %v70, 0.0
    %v179 = vmax.f32 %v71, 0.0
    %v180 = vmax.f32 %v72, 0.0
    %v181 = vmax.f32 %v73, 0.0
    %v182 = vmax.f32 %v74, 0.0
    %v183 = vmax.f32 %v75, 0.0
    %v184 = vmax.f32 %v76, 0.0
    %v185 = vmax.f32 %v77, 0.0
    %v186 = vmax.f32 %v78, 0.0
    %v187 = vmax.f32 %v79, 0.0
    %v188 = vmax.f32 %v80, 0.0
    %v189 = vmax.f32 %v81, 0.0
    %v190 = vmax.f32 %v82, 0.0
    %v191 = vmax.f32 %v83, 0.0
    %v192 = vmax.f32 %v84, 0.0
    %v193 = vmax.f32 %v85, 0.0
    %v194 = vmax.f32 %v86, 0.0
    %v195 = vmax.f32 %v87, 0.0
    %v196 = vmax.f32 %v88, 0.0
    %v197 = vmax.f32 %v89, 0.0
    %v198 = vmax.f32 %v90, 0.0
    %v199 = vmax.f32 %v91, 0.0
    %v200 = vmax.f32 %v92, 0.0
    %v201 = vmax.f32 %v93, 0.0
    %v202 = vmax.f32 %v94, 0.0
    %v203 = vmax.f32 %v95, 0.0
    %v204 = vmax.f32 %v96, 0.0
    %v205 = vmax.f32 %v97, 0.0
    %v206 = vmax.f32 %v98, 0.0
    %v207 = vmax.f32 %v99, 0.0
    %v208 = vmax.f32 %v100, 0.0
    %v209 = vmax.f32 %v101, 0.0
    %v210 = vmax.f32 %v102, 0.0
    %v211 = vmax.f32 %v103, 0.0
    %v212 = vmax.f32 %v104, 0.0
    %v213 = vmax.f32 %v105, 0.0
    %v214 = vmax.f32 %v106, 0.0
    %v215 = vmax.f32 %v107, 0.0
    %v216 = vmax.f32 %v108, 0.0
    %v217 = vmax.f32 %v109, 0.0
    %v218 = vmax.f32 %v110, 0.0
    %v219 = vmax.f32 %v111, 0.0
    %v220 = vmax.f32 %v112, 0.0
    %v221 = vmax.f32 %v113, 0.0
    %v222 = vmax.f32 %v114, 0.0
    %v223 = vmax.f32 %v115, 0.0
    %v224 = vmax.f32 %v116, 0.0
    %v225 = vmax.f32 %v117, 0.0
    %v226 = vmax.f32 %v118, 0.0
    %v227 = vmax.f32 %v119, 0.0
    %v228 = vmax.f32 %v120, 0.0
    %v229 = vmax.f32 %v121, 0.0
    %v230 = vmax.f32 %v122, 0.0
    %v231 = vmax.f32 %v123, 0.0
    %v232 = vmax.f32 %v124, 0.0
    %v233 = vmax.f32 %v125, 0.0
    %v234 = vmax.f32 %v126, 0.0
    %v235 = vmax.f32 %v127, 0.0
    %v236 = vmax.f32 %v128, 0.0
    %v237 = vmax.f32 %v129, 0.0
    %v238 = vmax.f32 %v130, 0.0
    %v239 = vmax.f32 %v131, 0.0
    %v240 = vmax.f32 %v132, 0.0
    %v241 = vmax.f32 %v133, 0.0
    %v242 = vmax.f32 %v134, 0.0
    %v243 = vmax.f32 %v135, 0.0
    %v244 = vmax.f32 %v136, 0.0
    %v245 = vmax.f32 %v137, 0.0
    %v246 = vmax.f32 %v138, 0.0
    %v247 = vmax.f32 %v139, 0.0
    %v248 = vmax.f32 %v140, 0.0
    %v249 = vld [vmem:[%s1] sm:$0xff]
    %v250 = vld [vmem:[%s1 + $0x8] sm:$0xff]
    %v251 = vld [vmem:[%s1 + $0x10] sm:$0xff]
    %v252 = vld [vmem:[%s1 + $0x18] sm:$0xff]
    %v253 = vld [vmem:[%s1 + $0x20] sm:$0xff]
    %v254 = vld [vmem:[%s1 + $0x28] sm:$0xff]
    %v255 = vld [vmem:[%s1 + $0x30] sm:$0xff]
    %v256 = vld [vmem:[%s1 + $0x38] sm:$0xff]
    %v257 = vld [vmem:[%s1 + $0x40] sm:$0xff]
    %v258 = vld [vmem:[%s1 + $0x48] sm:$0xff]
    %v259 = vld [vmem:[%s1 + $0x50] sm:$0xff]
    %v260 = vld [vmem:[%s1 + $0x58] sm:$0xff]
    %v261 = vld [vmem:[%s1 + $0x60] sm:$0xff]
    %v262 = vld [vmem:[%s1 + $0x68] sm:$0xff]
    %v263 = vld [vmem:[%s1 + $0x70] sm:$0xff]
    %v264 = vld [vmem:[%s1 + $0x78] sm:$0xff]
    %vm361 = vcmask 1046528
    %v362 = vrot.slane %v141, 1
    %v363 = vrot.slane %v142, 1
    %v364 = vsel %vm361, %v362, %v363
    %v365 = vrot.slane %v143, 1
    %v366 = vsel %vm361, %v363, %v365
    %v367 = vrot.slane %v144, 1
    %v368 = vrot.slane %v145, 1
    %v369 = vsel %vm361, %v367, %v368
    %v370 = vrot.slane %v146, 1
    %v371 = vsel %vm361, %v368, %v370
    %v372 = vrot.slane %v147, 1
    %v373 = vrot.slane %v148, 1
    %v374 = vsel %vm361, %v372, %v373
    %v375 = vrot.slane %v149, 1
    %v376 = vsel %vm361, %v373, %v375
    %v377 = vrot.slane %v150, 1
    %v378 = vrot.slane %v151, 1
    %v379 = vsel %vm361, %v377, %v378
    %v380 = vrot.slane %v152, 1
    %v381 = vsel %vm361, %v378, %v380
    %v382 = vrot.slane %v153, 1
    %v383 = vrot.slane %v154, 1
    %v384 = vsel %vm361, %v382, %v383
    %v385 = vrot.slane %v155, 1
    %v386 = vsel %vm361, %v383, %v385
    %v387 = vrot.slane %v156, 1
    %v388 = vrot.slane %v157, 1
    %v389 = vsel %vm361, %v387, %v388
    %v390 = vrot.slane %v158, 1
    %v391 = vsel %vm361, %v388, %v390
    %v392 = vrot.slane %v159, 1
    %v393 = vrot.slane %v160, 1
    %v394 = vsel %vm361, %v392, %v393
    %v395 = vrot.slane %v161, 1
    %v396 = vsel %vm361, %v393, %v395
    %v397 = vrot.slane %v162, 1
    %v398 = vrot.slane %v163, 1
    %v399 = vsel %vm361, %v397, %v398
    %v400 = vrot.slane %v164, 1
    %v401 = vsel %vm361, %v398, %v400
    %v402 = vrot.slane %v165, 1
    %v403 = vrot.slane %v166, 1
    %v404 = vsel %vm361, %v402, %v403
    %v405 = vrot.slane %v167, 1
    %v406 = vsel %vm361, %v403, %v405
    %v407 = vrot.slane %v168, 1
    %v408 = vrot.slane %v169, 1
    %v409 = vsel %vm361, %v407, %v408
    %v410 = vrot.slane %v170, 1
    %v411 = vsel %vm361, %v408, %v410
    %v412 = vrot.slane %v171, 1
    %v413 = vrot.slane %v172, 1
    %v414 = vsel %vm361, %v412, %v413
    %v415 = vrot.slane %v173, 1
    %v416 = vsel %vm361, %v413, %v415
    %v417 = vrot.slane %v174, 1
    %v418 = vrot.slane %v175, 1
    %v419 = vsel %vm361, %v417, %v418
    %v420 = vrot.slane %v176, 1
    %v421 = vsel %vm361, %v418, %v420
    %v422 = vrot.slane %v177, 1
    %v423 = vrot.slane %v178, 1
    %v424 = vsel %vm361, %v422, %v423
    %v425 = vrot.slane %v179, 1
    %v426 = vsel %vm361, %v423, %v425
    %v427 = vrot.slane %v180, 1
    %v428 = vrot.slane %v181, 1
    %v429 = vsel %vm361, %v427, %v428
    %v430 = vrot.slane %v182, 1
    %v431 = vsel %vm361, %v428, %v430
    %v432 = vrot.slane %v183, 1
    %v433 = vrot.slane %v184, 1
    %v434 = vsel %vm361, %v432, %v433
    %v435 = vrot.slane %v185, 1
    %v436 = vsel %vm361, %v433, %v435
    %v437 = vrot.slane %v186, 1
    %v438 = vrot.slane %v187, 1
    %v439 = vsel %vm361, %v437, %v438
    %v440 = vrot.slane %v188, 1
    %v441 = vsel %vm361, %v438, %v440
    %v442 = vrot.slane %v195, 1
    %v443 = vrot.slane %v196, 1
    %v444 = vsel %vm361, %v442, %v443
    %v445 = vrot.slane %v197, 1
    %v446 = vsel %vm361, %v443, %v445
    %v447 = vrot.slane %v198, 1
    %v448 = vrot.slane %v199, 1
    %v449 = vsel %vm361, %v447, %v448
    %v450 = vrot.slane %v200, 1
    %v451 = vsel %vm361, %v448, %v450
    %v452 = vrot.slane %v201, 1
    %v453 = vrot.slane %v202, 1
    %v454 = vsel %vm361, %v452, %v453
    %v455 = vrot.slane %v203, 1
    %v456 = vsel %vm361, %v453, %v455
    %v457 = vrot.slane %v204, 1
    %v458 = vrot.slane %v205, 1
    %v459 = vsel %vm361, %v457, %v458
    %v460 = vrot.slane %v206, 1
    %v461 = vsel %vm361, %v458, %v460
    %v462 = vrot.slane %v207, 1
    %v463 = vrot.slane %v208, 1
    %v464 = vsel %vm361, %v462, %v463
    %v465 = vrot.slane %v209, 1
    %v466 = vsel %vm361, %v463, %v465
    %v467 = vrot.slane %v210, 1
    %v468 = vrot.slane %v211, 1
    %v469 = vsel %vm361, %v467, %v468
    %v470 = vrot.slane %v212, 1
    %v471 = vsel %vm361, %v468, %v470
    %v472 = vrot.slane %v213, 1
    %v473 = vrot.slane %v214, 1
    %v474 = vsel %vm361, %v472, %v473
    %v475 = vrot.slane %v215, 1
    %v476 = vsel %vm361, %v473, %v475
    %v477 = vrot.slane %v216, 1
    %v478 = vrot.slane %v217, 1
    %v479 = vsel %vm361, %v477, %v478
    %v480 = vrot.slane %v218, 1
    %v481 = vsel %vm361, %v478, %v480
    %v482 = vrot.slane %v219, 1
    %v483 = vrot.slane %v220, 1
    %v484 = vsel %vm361, %v482, %v483
    %v485 = vrot.slane %v221, 1
    %v486 = vsel %vm361, %v483, %v485
    %v487 = vrot.slane %v222, 1
    %v488 = vrot.slane %v223, 1
    %v489 = vsel %vm361, %v487, %v488
    %v490 = vrot.slane %v224, 1
    %v491 = vsel %vm361, %v488, %v490
    %v492 = vrot.slane %v225, 1
    %v493 = vrot.slane %v226, 1
    %v494 = vsel %vm361, %v492, %v493
    %v495 = vrot.slane %v227, 1
    %v496 = vsel %vm361, %v493, %v495
    %v497 = vrot.slane %v228, 1
    %v498 = vrot.slane %v229, 1
    %v499 = vsel %vm361, %v497, %v498
    %v500 = vrot.slane %v230, 1
    %v501 = vsel %vm361, %v498, %v500
    %v502 = vrot.slane %v231, 1
    %v503 = vrot.slane %v232, 1
    %v504 = vsel %vm361, %v502, %v503
    %v505 = vrot.slane %v233, 1
    %v506 = vsel %vm361, %v503, %v505
    %v507 = vrot.slane %v234, 1
    %v508 = vrot.slane %v235, 1
    %v509 = vsel %vm361, %v507, %v508
    %v510 = vrot.slane %v236, 1
    %v511 = vsel %vm361, %v508, %v510
    %v512 = vrot.slane %v237, 1
    %v513 = vrot.slane %v238, 1
    %v514 = vsel %vm361, %v512, %v513
    %v515 = vrot.slane %v239, 1
    %v516 = vsel %vm361, %v513, %v515
    %v517 = vrot.slane %v240, 1
    %v518 = vrot.slane %v241, 1
    %v519 = vsel %vm361, %v517, %v518
    %v520 = vrot.slane %v242, 1
    %v521 = vsel %vm361, %v518, %v520
    %s586 = scalar_lea.vmem %s1, 128
    %v587 = vld [vmem:[%s586] sm:$0xff]
    %v588 = vld [vmem:[%s586 + $0x8] sm:$0xff]
    %v589 = vld [vmem:[%s586 + $0x10] sm:$0xff]
    %v590 = vld [vmem:[%s586 + $0x18] sm:$0xff]
    %v591 = vld [vmem:[%s586 + $0x20] sm:$0xff]
    %v592 = vld [vmem:[%s586 + $0x28] sm:$0xff]
    %v593 = vld [vmem:[%s586 + $0x30] sm:$0xff]
    %v594 = vld [vmem:[%s586 + $0x38] sm:$0xff]
    %v595 = vld [vmem:[%s586 + $0x40] sm:$0xff]
    %v596 = vld [vmem:[%s586 + $0x48] sm:$0xff]
    %v597 = vld [vmem:[%s586 + $0x50] sm:$0xff]
    %v598 = vld [vmem:[%s586 + $0x58] sm:$0xff]
    %v599 = vld [vmem:[%s586 + $0x60] sm:$0xff]
    %v600 = vld [vmem:[%s586 + $0x68] sm:$0xff]
    %v601 = vld [vmem:[%s586 + $0x70] sm:$0xff]
    %v602 = vld [vmem:[%s586 + $0x78] sm:$0xff]
    %603 = vmatpush.msra.mxu0 %v602
    %604 = vmatpush.msra.mxu0 %v601
    %605 = vmatpush.msra.mxu0 %v600
    %606 = vmatpush.msra.mxu0 %v599
    %607 = vmatpush.msra.mxu0 %v598
    %608 = vmatpush.msra.mxu0 %v597
    %609 = vmatpush.msra.mxu0 %v596
    %610 = vmatpush.msra.mxu0 %v595
    %611 = vmatpush.msra.mxu0 %v594
    %612 = vmatpush.msra.mxu0 %v593
    %613 = vmatpush.msra.mxu0 %v592
    %614 = vmatpush.msra.mxu0 %v591
    %615 = vmatpush.msra.mxu0 %v590
    %616 = vmatpush.msra.mxu0 %v589
    %617 = vmatpush.msra.mxu0 %v588
    %618 = vmatpush.msra.mxu0 %v587
    %619 = vmatmul.f32.gmra.mxu0 %v364
    %v620 = vpop.f32.mrf.mxu0
    %v621 = vadd.f32 0.0, %v620
    %622 = vmatmul.f32.gmra.mxu0 %v366
    %v623 = vpop.f32.mrf.mxu0
    %v624 = vadd.f32 0.0, %v623
    %625 = vmatmul.f32.gmra.mxu0 %v369
    %v626 = vpop.f32.mrf.mxu0
    %v627 = vadd.f32 0.0, %v626
    %628 = vmatmul.f32.gmra.mxu0 %v371
    %v629 = vpop.f32.mrf.mxu0
    %v630 = vadd.f32 0.0, %v629
    %631 = vmatmul.f32.gmra.mxu0 %v374
    %v632 = vpop.f32.mrf.mxu0
    %v633 = vadd.f32 0.0, %v632
    %634 = vmatmul.f32.gmra.mxu0 %v376
    %v635 = vpop.f32.mrf.mxu0
    %v636 = vadd.f32 0.0, %v635
    %637 = vmatmul.f32.gmra.mxu0 %v379
    %v638 = vpop.f32.mrf.mxu0
    %v639 = vadd.f32 0.0, %v638
    %640 = vmatmul.f32.gmra.mxu0 %v381
    %v641 = vpop.f32.mrf.mxu0
    %v642 = vadd.f32 0.0, %v641
    %643 = vmatmul.f32.gmra.mxu0 %v384
    %v644 = vpop.f32.mrf.mxu0
    %v645 = vadd.f32 0.0, %v644
    %646 = vmatmul.f32.gmra.mxu0 %v386
    %v647 = vpop.f32.mrf.mxu0
    %v648 = vadd.f32 0.0, %v647
    %649 = vmatmul.f32.gmra.mxu0 %v389
    %v650 = vpop.f32.mrf.mxu0
    %v651 = vadd.f32 0.0, %v650
    %652 = vmatmul.f32.gmra.mxu0 %v391
    %v653 = vpop.f32.mrf.mxu0
    %v654 = vadd.f32 0.0, %v653
    %655 = vmatmul.f32.gmra.mxu0 %v394
    %v656 = vpop.f32.mrf.mxu0
    %v657 = vadd.f32 0.0, %v656
    %658 = vmatmul.f32.gmra.mxu0 %v396
    %v659 = vpop.f32.mrf.mxu0
    %v660 = vadd.f32 0.0, %v659
    %661 = vmatmul.f32.gmra.mxu0 %v399
    %v662 = vpop.f32.mrf.mxu0
    %v663 = vadd.f32 0.0, %v662
    %664 = vmatmul.f32.gmra.mxu0 %v401
    %v665 = vpop.f32.mrf.mxu0
    %v666 = vadd.f32 0.0, %v665
    %667 = vmatmul.f32.gmra.mxu0 %v404
    %v668 = vpop.f32.mrf.mxu0
    %v669 = vadd.f32 0.0, %v668
    %670 = vmatmul.f32.gmra.mxu0 %v406
    %v671 = vpop.f32.mrf.mxu0
    %v672 = vadd.f32 0.0, %v671
    %673 = vmatmul.f32.gmra.mxu0 %v409
    %v674 = vpop.f32.mrf.mxu0
    %v675 = vadd.f32 0.0, %v674
    %676 = vmatmul.f32.gmra.mxu0 %v411
    %v677 = vpop.f32.mrf.mxu0
    %v678 = vadd.f32 0.0, %v677
    %679 = vmatmul.f32.gmra.mxu0 %v414
    %v680 = vpop.f32.mrf.mxu0
    %v681 = vadd.f32 0.0, %v680
    %682 = vmatmul.f32.gmra.mxu0 %v416
    %v683 = vpop.f32.mrf.mxu0
    %v684 = vadd.f32 0.0, %v683
    %685 = vmatmul.f32.gmra.mxu0 %v419
    %v686 = vpop.f32.mrf.mxu0
    %v687 = vadd.f32 0.0, %v686
    %688 = vmatmul.f32.gmra.mxu0 %v421
    %v689 = vpop.f32.mrf.mxu0
    %v690 = vadd.f32 0.0, %v689
    %691 = vmatmul.f32.gmra.mxu0 %v424
    %v692 = vpop.f32.mrf.mxu0
    %v693 = vadd.f32 0.0, %v692
    %694 = vmatmul.f32.gmra.mxu0 %v426
    %v695 = vpop.f32.mrf.mxu0
    %v696 = vadd.f32 0.0, %v695
    %697 = vmatmul.f32.gmra.mxu0 %v429
    %v698 = vpop.f32.mrf.mxu0
    %v699 = vadd.f32 0.0, %v698
    %700 = vmatmul.f32.gmra.mxu0 %v431
    %v701 = vpop.f32.mrf.mxu0
    %v702 = vadd.f32 0.0, %v701
    %703 = vmatmul.f32.gmra.mxu0 %v434
    %v704 = vpop.f32.mrf.mxu0
    %v705 = vadd.f32 0.0, %v704
    %706 = vmatmul.f32.gmra.mxu0 %v436
    %v707 = vpop.f32.mrf.mxu0
    %v708 = vadd.f32 0.0, %v707
    %709 = vmatmul.f32.gmra.mxu0 %v439
    %v710 = vpop.f32.mrf.mxu0
    %v711 = vadd.f32 0.0, %v710
    %712 = vmatmul.f32.gmra.mxu0 %v441
    %v713 = vpop.f32.mrf.mxu0
    %v714 = vadd.f32 0.0, %v713
    %715 = vmatmul.f32.gmra.mxu0 %v444
    %v716 = vpop.f32.mrf.mxu0
    %v717 = vadd.f32 0.0, %v716
    %718 = vmatmul.f32.gmra.mxu0 %v446
    %v719 = vpop.f32.mrf.mxu0
    %v720 = vadd.f32 0.0, %v719
    %721 = vmatmul.f32.gmra.mxu0 %v449
    %v722 = vpop.f32.mrf.mxu0
    %v723 = vadd.f32 0.0, %v722
    %724 = vmatmul.f32.gmra.mxu0 %v451
    %v725 = vpop.f32.mrf.mxu0
    %v726 = vadd.f32 0.0, %v725
    %727 = vmatmul.f32.gmra.mxu0 %v454
    %v728 = vpop.f32.mrf.mxu0
    %v729 = vadd.f32 0.0, %v728
    %730 = vmatmul.f32.gmra.mxu0 %v456
    %v731 = vpop.f32.mrf.mxu0
    %v732 = vadd.f32 0.0, %v731
    %733 = vmatmul.f32.gmra.mxu0 %v459
    %v734 = vpop.f32.mrf.mxu0
    %v735 = vadd.f32 0.0, %v734
    %736 = vmatmul.f32.gmra.mxu0 %v461
    %v737 = vpop.f32.mrf.mxu0
    %v738 = vadd.f32 0.0, %v737
    %739 = vmatmul.f32.gmra.mxu0 %v464
    %v740 = vpop.f32.mrf.mxu0
    %v741 = vadd.f32 0.0, %v740
    %742 = vmatmul.f32.gmra.mxu0 %v466
    %v743 = vpop.f32.mrf.mxu0
    %v744 = vadd.f32 0.0, %v743
    %745 = vmatmul.f32.gmra.mxu0 %v469
    %v746 = vpop.f32.mrf.mxu0
    %v747 = vadd.f32 0.0, %v746
    %748 = vmatmul.f32.gmra.mxu0 %v471
    %v749 = vpop.f32.mrf.mxu0
    %v750 = vadd.f32 0.0, %v749
    %751 = vmatmul.f32.gmra.mxu0 %v474
    %v752 = vpop.f32.mrf.mxu0
    %v753 = vadd.f32 0.0, %v752
    %754 = vmatmul.f32.gmra.mxu0 %v476
    %v755 = vpop.f32.mrf.mxu0
    %v756 = vadd.f32 0.0, %v755
    %757 = vmatmul.f32.gmra.mxu0 %v479
    %v758 = vpop.f32.mrf.mxu0
    %v759 = vadd.f32 0.0, %v758
    %760 = vmatmul.f32.gmra.mxu0 %v481
    %v761 = vpop.f32.mrf.mxu0
    %v762 = vadd.f32 0.0, %v761
    %763 = vmatmul.f32.gmra.mxu0 %v484
    %v764 = vpop.f32.mrf.mxu0
    %v765 = vadd.f32 0.0, %v764
    %766 = vmatmul.f32.gmra.mxu0 %v486
    %v767 = vpop.f32.mrf.mxu0
    %v768 = vadd.f32 0.0, %v767
    %769 = vmatmul.f32.gmra.mxu0 %v489
    %v770 = vpop.f32.mrf.mxu0
    %v771 = vadd.f32 0.0, %v770
    %772 = vmatmul.f32.gmra.mxu0 %v491
    %v773 = vpop.f32.mrf.mxu0
    %v774 = vadd.f32 0.0, %v773
    %775 = vmatmul.f32.gmra.mxu0 %v494
    %v776 = vpop.f32.mrf.mxu0
    %v777 = vadd.f32 0.0, %v776
    %778 = vmatmul.f32.gmra.mxu0 %v496
    %v779 = vpop.f32.mrf.mxu0
    %v780 = vadd.f32 0.0, %v779
    %781 = vmatmul.f32.gmra.mxu0 %v499
    %v782 = vpop.f32.mrf.mxu0
    %v783 = vadd.f32 0.0, %v782
    %784 = vmatmul.f32.gmra.mxu0 %v501
    %v785 = vpop.f32.mrf.mxu0
    %v786 = vadd.f32 0.0, %v785
    %787 = vmatmul.f32.gmra.mxu0 %v504
    %v788 = vpop.f32.mrf.mxu0
    %v789 = vadd.f32 0.0, %v788
    %790 = vmatmul.f32.gmra.mxu0 %v506
    %v791 = vpop.f32.mrf.mxu0
    %v792 = vadd.f32 0.0, %v791
    %793 = vmatmul.f32.gmra.mxu0 %v509
    %v794 = vpop.f32.mrf.mxu0
    %v795 = vadd.f32 0.0, %v794
    %796 = vmatmul.f32.gmra.mxu0 %v511
    %v797 = vpop.f32.mrf.mxu0
    %v798 = vadd.f32 0.0, %v797
    %799 = vmatmul.f32.gmra.mxu0 %v514
    %v800 = vpop.f32.mrf.mxu0
    %v801 = vadd.f32 0.0, %v800
    %802 = vmatmul.f32.gmra.mxu0 %v516
    %v803 = vpop.f32.mrf.mxu0
    %v804 = vadd.f32 0.0, %v803
    %805 = vmatmul.f32.gmra.mxu0 %v519
    %v806 = vpop.f32.mrf.mxu0
    %v807 = vadd.f32 0.0, %v806
    %808 = vmatmul.f32.gmra.mxu0 %v521
    %v809 = vpop.f32.mrf.mxu0
    %v810 = vadd.f32 0.0, %v809
    %811 = vdwg.mxu0
    %812 = vmatpush.msra.mxu0 %v264
    %813 = vmatpush.msra.mxu0 %v263
    %814 = vmatpush.msra.mxu0 %v262
    %815 = vmatpush.msra.mxu0 %v261
    %816 = vmatpush.msra.mxu0 %v260
    %817 = vmatpush.msra.mxu0 %v259
    %818 = vmatpush.msra.mxu0 %v258
    %819 = vmatpush.msra.mxu0 %v257
    %820 = vmatpush.msra.mxu0 %v256
    %821 = vmatpush.msra.mxu0 %v255
    %822 = vmatpush.msra.mxu0 %v254
    %823 = vmatpush.msra.mxu0 %v253
    %824 = vmatpush.msra.mxu0 %v252
    %825 = vmatpush.msra.mxu0 %v251
    %826 = vmatpush.msra.mxu0 %v250
    %827 = vmatpush.msra.mxu0 %v249
    %828 = vmatmul.f32.gmra.mxu0 %v141
    %v829 = vpop.f32.mrf.mxu0
    %v830 = vadd.f32 %v621, %v829
    %831 = vmatmul.f32.gmra.mxu0 %v142
    %v832 = vpop.f32.mrf.mxu0
    %v833 = vadd.f32 %v624, %v832
    %834 = vmatmul.f32.gmra.mxu0 %v144
    %v835 = vpop.f32.mrf.mxu0
    %v836 = vadd.f32 %v627, %v835
    %837 = vmatmul.f32.gmra.mxu0 %v145
    %v838 = vpop.f32.mrf.mxu0
    %v839 = vadd.f32 %v630, %v838
    %840 = vmatmul.f32.gmra.mxu0 %v147
    %v841 = vpop.f32.mrf.mxu0
    %v842 = vadd.f32 %v633, %v841
    %843 = vmatmul.f32.gmra.mxu0 %v148
    %v844 = vpop.f32.mrf.mxu0
    %v845 = vadd.f32 %v636, %v844
    %846 = vmatmul.f32.gmra.mxu0 %v150
    %v847 = vpop.f32.mrf.mxu0
    %v848 = vadd.f32 %v639, %v847
    %849 = vmatmul.f32.gmra.mxu0 %v151
    %v850 = vpop.f32.mrf.mxu0
    %v851 = vadd.f32 %v642, %v850
    %852 = vmatmul.f32.gmra.mxu0 %v153
    %v853 = vpop.f32.mrf.mxu0
    %v854 = vadd.f32 %v645, %v853
    %855 = vmatmul.f32.gmra.mxu0 %v154
    %v856 = vpop.f32.mrf.mxu0
    %v857 = vadd.f32 %v648, %v856
    %858 = vmatmul.f32.gmra.mxu0 %v156
    %v859 = vpop.f32.mrf.mxu0
    %v860 = vadd.f32 %v651, %v859
    %861 = vmatmul.f32.gmra.mxu0 %v157
    %v862 = vpop.f32.mrf.mxu0
    %v863 = vadd.f32 %v654, %v862
    %864 = vmatmul.f32.gmra.mxu0 %v159
    %v865 = vpop.f32.mrf.mxu0
    %v866 = vadd.f32 %v657, %v865
    %867 = vmatmul.f32.gmra.mxu0 %v160
    %v868 = vpop.f32.mrf.mxu0
    %v869 = vadd.f32 %v660, %v868
    %870 = vmatmul.f32.gmra.mxu0 %v162
    %v871 = vpop.f32.mrf.mxu0
    %v872 = vadd.f32 %v663, %v871
    %873 = vmatmul.f32.gmra.mxu0 %v163
    %v874 = vpop.f32.mrf.mxu0
    %v875 = vadd.f32 %v666, %v874
    %876 = vmatmul.f32.gmra.mxu0 %v165
    %v877 = vpop.f32.mrf.mxu0
    %v878 = vadd.f32 %v669, %v877
    %879 = vmatmul.f32.gmra.mxu0 %v166
    %v880 = vpop.f32.mrf.mxu0
    %v881 = vadd.f32 %v672, %v880
    %882 = vmatmul.f32.gmra.mxu0 %v168
    %v883 = vpop.f32.mrf.mxu0
    %v884 = vadd.f32 %v675, %v883
    %885 = vmatmul.f32.gmra.mxu0 %v169
    %v886 = vpop.f32.mrf.mxu0
    %v887 = vadd.f32 %v678, %v886
    %888 = vmatmul.f32.gmra.mxu0 %v171
    %v889 = vpop.f32.mrf.mxu0
    %v890 = vadd.f32 %v681, %v889
    %891 = vmatmul.f32.gmra.mxu0 %v172
    %v892 = vpop.f32.mrf.mxu0
    %v893 = vadd.f32 %v684, %v892
    %894 = vmatmul.f32.gmra.mxu0 %v174
    %v895 = vpop.f32.mrf.mxu0
    %v896 = vadd.f32 %v687, %v895
    %897 = vmatmul.f32.gmra.mxu0 %v175
    %v898 = vpop.f32.mrf.mxu0
    %v899 = vadd.f32 %v690, %v898
    %900 = vmatmul.f32.gmra.mxu0 %v177
    %v901 = vpop.f32.mrf.mxu0
    %v902 = vadd.f32 %v693, %v901
    %903 = vmatmul.f32.gmra.mxu0 %v178
    %v904 = vpop.f32.mrf.mxu0
    %v905 = vadd.f32 %v696, %v904
    %906 = vmatmul.f32.gmra.mxu0 %v180
    %v907 = vpop.f32.mrf.mxu0
    %v908 = vadd.f32 %v699, %v907
    %909 = vmatmul.f32.gmra.mxu0 %v181
    %v910 = vpop.f32.mrf.mxu0
    %v911 = vadd.f32 %v702, %v910
    %912 = vmatmul.f32.gmra.mxu0 %v183
    %v913 = vpop.f32.mrf.mxu0
    %v914 = vadd.f32 %v705, %v913
    %915 = vmatmul.f32.gmra.mxu0 %v184
    %v916 = vpop.f32.mrf.mxu0
    %v917 = vadd.f32 %v708, %v916
    %918 = vmatmul.f32.gmra.mxu0 %v186
    %v919 = vpop.f32.mrf.mxu0
    %v920 = vadd.f32 %v711, %v919
    %921 = vmatmul.f32.gmra.mxu0 %v187
    %v922 = vpop.f32.mrf.mxu0
    %v923 = vadd.f32 %v714, %v922
    %924 = vmatmul.f32.gmra.mxu0 %v195
    %v925 = vpop.f32.mrf.mxu0
    %v926 = vadd.f32 %v717, %v925
    %927 = vmatmul.f32.gmra.mxu0 %v196
    %v928 = vpop.f32.mrf.mxu0
    %v929 = vadd.f32 %v720, %v928
    %930 = vmatmul.f32.gmra.mxu0 %v198
    %v931 = vpop.f32.mrf.mxu0
    %v932 = vadd.f32 %v723, %v931
    %933 = vmatmul.f32.gmra.mxu0 %v199
    %v934 = vpop.f32.mrf.mxu0
    %v935 = vadd.f32 %v726, %v934
    %936 = vmatmul.f32.gmra.mxu0 %v201
    %v937 = vpop.f32.mrf.mxu0
    %v938 = vadd.f32 %v729, %v937
    %939 = vmatmul.f32.gmra.mxu0 %v202
    %v940 = vpop.f32.mrf.mxu0
    %v941 = vadd.f32 %v732, %v940
    %942 = vmatmul.f32.gmra.mxu0 %v204
    %v943 = vpop.f32.mrf.mxu0
    %v944 = vadd.f32 %v735, %v943
    %945 = vmatmul.f32.gmra.mxu0 %v205
    %v946 = vpop.f32.mrf.mxu0
    %v947 = vadd.f32 %v738, %v946
    %948 = vmatmul.f32.gmra.mxu0 %v207
    %v949 = vpop.f32.mrf.mxu0
    %v950 = vadd.f32 %v741, %v949
    %951 = vmatmul.f32.gmra.mxu0 %v208
    %v952 = vpop.f32.mrf.mxu0
    %v953 = vadd.f32 %v744, %v952
    %954 = vmatmul.f32.gmra.mxu0 %v210
    %v955 = vpop.f32.mrf.mxu0
    %v956 = vadd.f32 %v747, %v955
    %957 = vmatmul.f32.gmra.mxu0 %v211
    %v958 = vpop.f32.mrf.mxu0
    %v959 = vadd.f32 %v750, %v958
    %960 = vmatmul.f32.gmra.mxu0 %v213
    %v961 = vpop.f32.mrf.mxu0
    %v962 = vadd.f32 %v753, %v961
    %963 = vmatmul.f32.gmra.mxu0 %v214
    %v964 = vpop.f32.mrf.mxu0
    %v965 = vadd.f32 %v756, %v964
    %966 = vmatmul.f32.gmra.mxu0 %v216
    %v967 = vpop.f32.mrf.mxu0
    %v968 = vadd.f32 %v759, %v967
    %969 = vmatmul.f32.gmra.mxu0 %v217
    %v970 = vpop.f32.mrf.mxu0
    %v971 = vadd.f32 %v762, %v970
    %972 = vmatmul.f32.gmra.mxu0 %v219
    %v973 = vpop.f32.mrf.mxu0
    %v974 = vadd.f32 %v765, %v973
    %975 = vmatmul.f32.gmra.mxu0 %v220
    %v976 = vpop.f32.mrf.mxu0
    %v977 = vadd.f32 %v768, %v976
    %978 = vmatmul.f32.gmra.mxu0 %v222
    %v979 = vpop.f32.mrf.mxu0
    %v980 = vadd.f32 %v771, %v979
    %981 = vmatmul.f32.gmra.mxu0 %v223
    %v982 = vpop.f32.mrf.mxu0
    %v983 = vadd.f32 %v774, %v982
    %984 = vmatmul.f32.gmra.mxu0 %v225
    %v985 = vpop.f32.mrf.mxu0
    %v986 = vadd.f32 %v777, %v985
    %987 = vmatmul.f32.gmra.mxu0 %v226
    %v988 = vpop.f32.mrf.mxu0
    %v989 = vadd.f32 %v780, %v988
    %990 = vmatmul.f32.gmra.mxu0 %v228
    %v991 = vpop.f32.mrf.mxu0
    %v992 = vadd.f32 %v783, %v991
    %993 = vmatmul.f32.gmra.mxu0 %v229
    %v994 = vpop.f32.mrf.mxu0
    %v995 = vadd.f32 %v786, %v994
    %996 = vmatmul.f32.gmra.mxu0 %v231
    %v997 = vpop.f32.mrf.mxu0
    %v998 = vadd.f32 %v789, %v997
    %999 = vmatmul.f32.gmra.mxu0 %v232
    %v1000 = vpop.f32.mrf.mxu0
    %v1001 = vadd.f32 %v792, %v1000
    %1002 = vmatmul.f32.gmra.mxu0 %v234
    %v1003 = vpop.f32.mrf.mxu0
    %v1004 = vadd.f32 %v795, %v1003
    %1005 = vmatmul.f32.gmra.mxu0 %v235
    %v1006 = vpop.f32.mrf.mxu0
    %v1007 = vadd.f32 %v798, %v1006
    %1008 = vmatmul.f32.gmra.mxu0 %v237
    %v1009 = vpop.f32.mrf.mxu0
    %v1010 = vadd.f32 %v801, %v1009
    %1011 = vmatmul.f32.gmra.mxu0 %v238
    %v1012 = vpop.f32.mrf.mxu0
    %v1013 = vadd.f32 %v804, %v1012
    %1014 = vmatmul.f32.gmra.mxu0 %v240
    %v1015 = vpop.f32.mrf.mxu0
    %v1016 = vadd.f32 %v807, %v1015
    %1017 = vmatmul.f32.gmra.mxu0 %v241
    %v1018 = vpop.f32.mrf.mxu0
    %v1019 = vadd.f32 %v810, %v1018
    %1020 = vdwg.mxu0
    %vm1021 = vcmask 1045504
    %v1022 = vrot.slane %v141, 2
    %v1023 = vrot.slane %v142, 2
    %v1024 = vsel %vm1021, %v1022, %v1023
    %v1025 = vrot.slane %v143, 2
    %v1026 = vsel %vm1021, %v1023, %v1025
    %v1027 = vrot.slane %v144, 2
    %v1028 = vrot.slane %v145, 2
    %v1029 = vsel %vm1021, %v1027, %v1028
    %v1030 = vrot.slane %v146, 2
    %v1031 = vsel %vm1021, %v1028, %v1030
    %v1032 = vrot.slane %v147, 2
    %v1033 = vrot.slane %v148, 2
    %v1034 = vsel %vm1021, %v1032, %v1033
    %v1035 = vrot.slane %v149, 2
    %v1036 = vsel %vm1021, %v1033, %v1035
    %v1037 = vrot.slane %v150, 2
    %v1038 = vrot.slane %v151, 2
    %v1039 = vsel %vm1021, %v1037, %v1038
    %v1040 = vrot.slane %v152, 2
    %v1041 = vsel %vm1021, %v1038, %v1040
    %v1042 = vrot.slane %v153, 2
    %v1043 = vrot.slane %v154, 2
    %v1044 = vsel %vm1021, %v1042, %v1043
    %v1045 = vrot.slane %v155, 2
    %v1046 = vsel %vm1021, %v1043, %v1045
    %v1047 = vrot.slane %v156, 2
    %v1048 = vrot.slane %v157, 2
    %v1049 = vsel %vm1021, %v1047, %v1048
    %v1050 = vrot.slane %v158, 2
    %v1051 = vsel %vm1021, %v1048, %v1050
    %v1052 = vrot.slane %v159, 2
    %v1053 = vrot.slane %v160, 2
    %v1054 = vsel %vm1021, %v1052, %v1053
    %v1055 = vrot.slane %v161, 2
    %v1056 = vsel %vm1021, %v1053, %v1055
    %v1057 = vrot.slane %v162, 2
    %v1058 = vrot.slane %v163, 2
    %v1059 = vsel %vm1021, %v1057, %v1058
    %v1060 = vrot.slane %v164, 2
    %v1061 = vsel %vm1021, %v1058, %v1060
    %v1062 = vrot.slane %v165, 2
    %v1063 = vrot.slane %v166, 2
    %v1064 = vsel %vm1021, %v1062, %v1063
    %v1065 = vrot.slane %v167, 2
    %v1066 = vsel %vm1021, %v1063, %v1065
    %v1067 = vrot.slane %v168, 2
    %v1068 = vrot.slane %v169, 2
    %v1069 = vsel %vm1021, %v1067, %v1068
    %v1070 = vrot.slane %v170, 2
    %v1071 = vsel %vm1021, %v1068, %v1070
    %v1072 = vrot.slane %v171, 2
    %v1073 = vrot.slane %v172, 2
    %v1074 = vsel %vm1021, %v1072, %v1073
    %v1075 = vrot.slane %v173, 2
    %v1076 = vsel %vm1021, %v1073, %v1075
    %v1077 = vrot.slane %v174, 2
    %v1078 = vrot.slane %v175, 2
    %v1079 = vsel %vm1021, %v1077, %v1078
    %v1080 = vrot.slane %v176, 2
    %v1081 = vsel %vm1021, %v1078, %v1080
    %v1082 = vrot.slane %v177, 2
    %v1083 = vrot.slane %v178, 2
    %v1084 = vsel %vm1021, %v1082, %v1083
    %v1085 = vrot.slane %v179, 2
    %v1086 = vsel %vm1021, %v1083, %v1085
    %v1087 = vrot.slane %v180, 2
    %v1088 = vrot.slane %v181, 2
    %v1089 = vsel %vm1021, %v1087, %v1088
    %v1090 = vrot.slane %v182, 2
    %v1091 = vsel %vm1021, %v1088, %v1090
    %v1092 = vrot.slane %v183, 2
    %v1093 = vrot.slane %v184, 2
    %v1094 = vsel %vm1021, %v1092, %v1093
    %v1095 = vrot.slane %v185, 2
    %v1096 = vsel %vm1021, %v1093, %v1095
    %v1097 = vrot.slane %v186, 2
    %v1098 = vrot.slane %v187, 2
    %v1099 = vsel %vm1021, %v1097, %v1098
    %v1100 = vrot.slane %v188, 2
    %v1101 = vsel %vm1021, %v1098, %v1100
    %v1102 = vrot.slane %v195, 2
    %v1103 = vrot.slane %v196, 2
    %v1104 = vsel %vm1021, %v1102, %v1103
    %v1105 = vrot.slane %v197, 2
    %v1106 = vsel %vm1021, %v1103, %v1105
    %v1107 = vrot.slane %v198, 2
    %v1108 = vrot.slane %v199, 2
    %v1109 = vsel %vm1021, %v1107, %v1108
    %v1110 = vrot.slane %v200, 2
    %v1111 = vsel %vm1021, %v1108, %v1110
    %v1112 = vrot.slane %v201, 2
    %v1113 = vrot.slane %v202, 2
    %v1114 = vsel %vm1021, %v1112, %v1113
    %v1115 = vrot.slane %v203, 2
    %v1116 = vsel %vm1021, %v1113, %v1115
    %v1117 = vrot.slane %v204, 2
    %v1118 = vrot.slane %v205, 2
    %v1119 = vsel %vm1021, %v1117, %v1118
    %v1120 = vrot.slane %v206, 2
    %v1121 = vsel %vm1021, %v1118, %v1120
    %v1122 = vrot.slane %v207, 2
    %v1123 = vrot.slane %v208, 2
    %v1124 = vsel %vm1021, %v1122, %v1123
    %v1125 = vrot.slane %v209, 2
    %v1126 = vsel %vm1021, %v1123, %v1125
    %v1127 = vrot.slane %v210, 2
    %v1128 = vrot.slane %v211, 2
    %v1129 = vsel %vm1021, %v1127, %v1128
    %v1130 = vrot.slane %v212, 2
    %v1131 = vsel %vm1021, %v1128, %v1130
    %v1132 = vrot.slane %v213, 2
    %v1133 = vrot.slane %v214, 2
    %v1134 = vsel %vm1021, %v1132, %v1133
    %v1135 = vrot.slane %v215, 2
    %v1136 = vsel %vm1021, %v1133, %v1135
    %v1137 = vrot.slane %v216, 2
    %v1138 = vrot.slane %v217, 2
    %v1139 = vsel %vm1021, %v1137, %v1138
    %v1140 = vrot.slane %v218, 2
    %v1141 = vsel %vm1021, %v1138, %v1140
    %v1142 = vrot.slane %v219, 2
    %v1143 = vrot.slane %v220, 2
    %v1144 = vsel %vm1021, %v1142, %v1143
    %v1145 = vrot.slane %v221, 2
    %v1146 = vsel %vm1021, %v1143, %v1145
    %v1147 = vrot.slane %v222, 2
    %v1148 = vrot.slane %v223, 2
    %v1149 = vsel %vm1021, %v1147, %v1148
    %v1150 = vrot.slane %v224, 2
    %v1151 = vsel %vm1021, %v1148, %v1150
    %v1152 = vrot.slane %v225, 2
    %v1153 = vrot.slane %v226, 2
    %v1154 = vsel %vm1021, %v1152, %v1153
    %v1155 = vrot.slane %v227, 2
    %v1156 = vsel %vm1021, %v1153, %v1155
    %v1157 = vrot.slane %v228, 2
    %v1158 = vrot.slane %v229, 2
    %v1159 = vsel %vm1021, %v1157, %v1158
    %v1160 = vrot.slane %v230, 2
    %v1161 = vsel %vm1021, %v1158, %v1160
    %v1162 = vrot.slane %v231, 2
    %v1163 = vrot.slane %v232, 2
    %v1164 = vsel %vm1021, %v1162, %v1163
    %v1165 = vrot.slane %v233, 2
    %v1166 = vsel %vm1021, %v1163, %v1165
    %v1167 = vrot.slane %v234, 2
    %v1168 = vrot.slane %v235, 2
    %v1169 = vsel %vm1021, %v1167, %v1168
    %v1170 = vrot.slane %v236, 2
    %v1171 = vsel %vm1021, %v1168, %v1170
    %v1172 = vrot.slane %v237, 2
    %v1173 = vrot.slane %v238, 2
    %v1174 = vsel %vm1021, %v1172, %v1173
    %v1175 = vrot.slane %v239, 2
    %v1176 = vsel %vm1021, %v1173, %v1175
    %v1177 = vrot.slane %v240, 2
    %v1178 = vrot.slane %v241, 2
    %v1179 = vsel %vm1021, %v1177, %v1178
    %v1180 = vrot.slane %v242, 2
    %v1181 = vsel %vm1021, %v1178, %v1180
    %s1246 = scalar_lea.vmem %s1, 256
    %v1247 = vld [vmem:[%s1246] sm:$0xff]
    %v1248 = vld [vmem:[%s1246 + $0x8] sm:$0xff]
    %v1249 = vld [vmem:[%s1246 + $0x10] sm:$0xff]
    %v1250 = vld [vmem:[%s1246 + $0x18] sm:$0xff]
    %v1251 = vld [vmem:[%s1246 + $0x20] sm:$0xff]
    %v1252 = vld [vmem:[%s1246 + $0x28] sm:$0xff]
    %v1253 = vld [vmem:[%s1246 + $0x30] sm:$0xff]
    %v1254 = vld [vmem:[%s1246 + $0x38] sm:$0xff]
    %v1255 = vld [vmem:[%s1246 + $0x40] sm:$0xff]
    %v1256 = vld [vmem:[%s1246 + $0x48] sm:$0xff]
    %v1257 = vld [vmem:[%s1246 + $0x50] sm:$0xff]
    %v1258 = vld [vmem:[%s1246 + $0x58] sm:$0xff]
    %v1259 = vld [vmem:[%s1246 + $0x60] sm:$0xff]
    %v1260 = vld [vmem:[%s1246 + $0x68] sm:$0xff]
    %v1261 = vld [vmem:[%s1246 + $0x70] sm:$0xff]
    %v1262 = vld [vmem:[%s1246 + $0x78] sm:$0xff]
    %1263 = vmatpush.msra.mxu0 %v1262
    %1264 = vmatpush.msra.mxu0 %v1261
    %1265 = vmatpush.msra.mxu0 %v1260
    %1266 = vmatpush.msra.mxu0 %v1259
    %1267 = vmatpush.msra.mxu0 %v1258
    %1268 = vmatpush.msra.mxu0 %v1257
    %1269 = vmatpush.msra.mxu0 %v1256
    %1270 = vmatpush.msra.mxu0 %v1255
    %1271 = vmatpush.msra.mxu0 %v1254
    %1272 = vmatpush.msra.mxu0 %v1253
    %1273 = vmatpush.msra.mxu0 %v1252
    %1274 = vmatpush.msra.mxu0 %v1251
    %1275 = vmatpush.msra.mxu0 %v1250
    %1276 = vmatpush.msra.mxu0 %v1249
    %1277 = vmatpush.msra.mxu0 %v1248
    %1278 = vmatpush.msra.mxu0 %v1247
    %1279 = vmatmul.f32.gmra.mxu0 %v1024
    %v1280 = vpop.f32.mrf.mxu0
    %v1281 = vadd.f32 0.0, %v1280
    %1282 = vmatmul.f32.gmra.mxu0 %v1026
    %v1283 = vpop.f32.mrf.mxu0
    %v1284 = vadd.f32 0.0, %v1283
    %1285 = vmatmul.f32.gmra.mxu0 %v1029
    %v1286 = vpop.f32.mrf.mxu0
    %v1287 = vadd.f32 0.0, %v1286
    %1288 = vmatmul.f32.gmra.mxu0 %v1031
    %v1289 = vpop.f32.mrf.mxu0
    %v1290 = vadd.f32 0.0, %v1289
    %1291 = vmatmul.f32.gmra.mxu0 %v1034
    %v1292 = vpop.f32.mrf.mxu0
    %v1293 = vadd.f32 0.0, %v1292
    %1294 = vmatmul.f32.gmra.mxu0 %v1036
    %v1295 = vpop.f32.mrf.mxu0
    %v1296 = vadd.f32 0.0, %v1295
    %1297 = vmatmul.f32.gmra.mxu0 %v1039
    %v1298 = vpop.f32.mrf.mxu0
    %v1299 = vadd.f32 0.0, %v1298
    %1300 = vmatmul.f32.gmra.mxu0 %v1041
    %v1301 = vpop.f32.mrf.mxu0
    %v1302 = vadd.f32 0.0, %v1301
    %1303 = vmatmul.f32.gmra.mxu0 %v1044
    %v1304 = vpop.f32.mrf.mxu0
    %v1305 = vadd.f32 0.0, %v1304
    %1306 = vmatmul.f32.gmra.mxu0 %v1046
    %v1307 = vpop.f32.mrf.mxu0
    %v1308 = vadd.f32 0.0, %v1307
    %1309 = vmatmul.f32.gmra.mxu0 %v1049
    %v1310 = vpop.f32.mrf.mxu0
    %v1311 = vadd.f32 0.0, %v1310
    %1312 = vmatmul.f32.gmra.mxu0 %v1051
    %v1313 = vpop.f32.mrf.mxu0
    %v1314 = vadd.f32 0.0, %v1313
    %1315 = vmatmul.f32.gmra.mxu0 %v1054
    %v1316 = vpop.f32.mrf.mxu0
    %v1317 = vadd.f32 0.0, %v1316
    %1318 = vmatmul.f32.gmra.mxu0 %v1056
    %v1319 = vpop.f32.mrf.mxu0
    %v1320 = vadd.f32 0.0, %v1319
    %1321 = vmatmul.f32.gmra.mxu0 %v1059
    %v1322 = vpop.f32.mrf.mxu0
    %v1323 = vadd.f32 0.0, %v1322
    %1324 = vmatmul.f32.gmra.mxu0 %v1061
    %v1325 = vpop.f32.mrf.mxu0
    %v1326 = vadd.f32 0.0, %v1325
    %1327 = vmatmul.f32.gmra.mxu0 %v1064
    %v1328 = vpop.f32.mrf.mxu0
    %v1329 = vadd.f32 0.0, %v1328
    %1330 = vmatmul.f32.gmra.mxu0 %v1066
    %v1331 = vpop.f32.mrf.mxu0
    %v1332 = vadd.f32 0.0, %v1331
    %1333 = vmatmul.f32.gmra.mxu0 %v1069
    %v1334 = vpop.f32.mrf.mxu0
    %v1335 = vadd.f32 0.0, %v1334
    %1336 = vmatmul.f32.gmra.mxu0 %v1071
    %v1337 = vpop.f32.mrf.mxu0
    %v1338 = vadd.f32 0.0, %v1337
    %1339 = vmatmul.f32.gmra.mxu0 %v1074
    %v1340 = vpop.f32.mrf.mxu0
    %v1341 = vadd.f32 0.0, %v1340
    %1342 = vmatmul.f32.gmra.mxu0 %v1076
    %v1343 = vpop.f32.mrf.mxu0
    %v1344 = vadd.f32 0.0, %v1343
    %1345 = vmatmul.f32.gmra.mxu0 %v1079
    %v1346 = vpop.f32.mrf.mxu0
    %v1347 = vadd.f32 0.0, %v1346
    %1348 = vmatmul.f32.gmra.mxu0 %v1081
    %v1349 = vpop.f32.mrf.mxu0
    %v1350 = vadd.f32 0.0, %v1349
    %1351 = vmatmul.f32.gmra.mxu0 %v1084
    %v1352 = vpop.f32.mrf.mxu0
    %v1353 = vadd.f32 0.0, %v1352
    %1354 = vmatmul.f32.gmra.mxu0 %v1086
    %v1355 = vpop.f32.mrf.mxu0
    %v1356 = vadd.f32 0.0, %v1355
    %1357 = vmatmul.f32.gmra.mxu0 %v1089
    %v1358 = vpop.f32.mrf.mxu0
    %v1359 = vadd.f32 0.0, %v1358
    %1360 = vmatmul.f32.gmra.mxu0 %v1091
    %v1361 = vpop.f32.mrf.mxu0
    %v1362 = vadd.f32 0.0, %v1361
    %1363 = vmatmul.f32.gmra.mxu0 %v1094
    %v1364 = vpop.f32.mrf.mxu0
    %v1365 = vadd.f32 0.0, %v1364
    %1366 = vmatmul.f32.gmra.mxu0 %v1096
    %v1367 = vpop.f32.mrf.mxu0
    %v1368 = vadd.f32 0.0, %v1367
    %1369 = vmatmul.f32.gmra.mxu0 %v1099
    %v1370 = vpop.f32.mrf.mxu0
    %v1371 = vadd.f32 0.0, %v1370
    %1372 = vmatmul.f32.gmra.mxu0 %v1101
    %v1373 = vpop.f32.mrf.mxu0
    %v1374 = vadd.f32 0.0, %v1373
    %1375 = vmatmul.f32.gmra.mxu0 %v1104
    %v1376 = vpop.f32.mrf.mxu0
    %v1377 = vadd.f32 0.0, %v1376
    %1378 = vmatmul.f32.gmra.mxu0 %v1106
    %v1379 = vpop.f32.mrf.mxu0
    %v1380 = vadd.f32 0.0, %v1379
    %1381 = vmatmul.f32.gmra.mxu0 %v1109
    %v1382 = vpop.f32.mrf.mxu0
    %v1383 = vadd.f32 0.0, %v1382
    %1384 = vmatmul.f32.gmra.mxu0 %v1111
    %v1385 = vpop.f32.mrf.mxu0
    %v1386 = vadd.f32 0.0, %v1385
    %1387 = vmatmul.f32.gmra.mxu0 %v1114
    %v1388 = vpop.f32.mrf.mxu0
    %v1389 = vadd.f32 0.0, %v1388
    %1390 = vmatmul.f32.gmra.mxu0 %v1116
    %v1391 = vpop.f32.mrf.mxu0
    %v1392 = vadd.f32 0.0, %v1391
    %1393 = vmatmul.f32.gmra.mxu0 %v1119
    %v1394 = vpop.f32.mrf.mxu0
    %v1395 = vadd.f32 0.0, %v1394
    %1396 = vmatmul.f32.gmra.mxu0 %v1121
    %v1397 = vpop.f32.mrf.mxu0
    %v1398 = vadd.f32 0.0, %v1397
    %1399 = vmatmul.f32.gmra.mxu0 %v1124
    %v1400 = vpop.f32.mrf.mxu0
    %v1401 = vadd.f32 0.0, %v1400
    %1402 = vmatmul.f32.gmra.mxu0 %v1126
    %v1403 = vpop.f32.mrf.mxu0
    %v1404 = vadd.f32 0.0, %v1403
    %1405 = vmatmul.f32.gmra.mxu0 %v1129
    %v1406 = vpop.f32.mrf.mxu0
    %v1407 = vadd.f32 0.0, %v1406
    %1408 = vmatmul.f32.gmra.mxu0 %v1131
    %v1409 = vpop.f32.mrf.mxu0
    %v1410 = vadd.f32 0.0, %v1409
    %1411 = vmatmul.f32.gmra.mxu0 %v1134
    %v1412 = vpop.f32.mrf.mxu0
    %v1413 = vadd.f32 0.0, %v1412
    %1414 = vmatmul.f32.gmra.mxu0 %v1136
    %v1415 = vpop.f32.mrf.mxu0
    %v1416 = vadd.f32 0.0, %v1415
    %1417 = vmatmul.f32.gmra.mxu0 %v1139
    %v1418 = vpop.f32.mrf.mxu0
    %v1419 = vadd.f32 0.0, %v1418
    %1420 = vmatmul.f32.gmra.mxu0 %v1141
    %v1421 = vpop.f32.mrf.mxu0
    %v1422 = vadd.f32 0.0, %v1421
    %1423 = vmatmul.f32.gmra.mxu0 %v1144
    %v1424 = vpop.f32.mrf.mxu0
    %v1425 = vadd.f32 0.0, %v1424
    %1426 = vmatmul.f32.gmra.mxu0 %v1146
    %v1427 = vpop.f32.mrf.mxu0
    %v1428 = vadd.f32 0.0, %v1427
    %1429 = vmatmul.f32.gmra.mxu0 %v1149
    %v1430 = vpop.f32.mrf.mxu0
    %v1431 = vadd.f32 0.0, %v1430
    %1432 = vmatmul.f32.gmra.mxu0 %v1151
    %v1433 = vpop.f32.mrf.mxu0
    %v1434 = vadd.f32 0.0, %v1433
    %1435 = vmatmul.f32.gmra.mxu0 %v1154
    %v1436 = vpop.f32.mrf.mxu0
    %v1437 = vadd.f32 0.0, %v1436
    %1438 = vmatmul.f32.gmra.mxu0 %v1156
    %v1439 = vpop.f32.mrf.mxu0
    %v1440 = vadd.f32 0.0, %v1439
    %1441 = vmatmul.f32.gmra.mxu0 %v1159
    %v1442 = vpop.f32.mrf.mxu0
    %v1443 = vadd.f32 0.0, %v1442
    %1444 = vmatmul.f32.gmra.mxu0 %v1161
    %v1445 = vpop.f32.mrf.mxu0
    %v1446 = vadd.f32 0.0, %v1445
    %1447 = vmatmul.f32.gmra.mxu0 %v1164
    %v1448 = vpop.f32.mrf.mxu0
    %v1449 = vadd.f32 0.0, %v1448
    %1450 = vmatmul.f32.gmra.mxu0 %v1166
    %v1451 = vpop.f32.mrf.mxu0
    %v1452 = vadd.f32 0.0, %v1451
    %1453 = vmatmul.f32.gmra.mxu0 %v1169
    %v1454 = vpop.f32.mrf.mxu0
    %v1455 = vadd.f32 0.0, %v1454
    %1456 = vmatmul.f32.gmra.mxu0 %v1171
    %v1457 = vpop.f32.mrf.mxu0
    %v1458 = vadd.f32 0.0, %v1457
    %1459 = vmatmul.f32.gmra.mxu0 %v1174
    %v1460 = vpop.f32.mrf.mxu0
    %v1461 = vadd.f32 0.0, %v1460
    %1462 = vmatmul.f32.gmra.mxu0 %v1176
    %v1463 = vpop.f32.mrf.mxu0
    %v1464 = vadd.f32 0.0, %v1463
    %1465 = vmatmul.f32.gmra.mxu0 %v1179
    %v1466 = vpop.f32.mrf.mxu0
    %v1467 = vadd.f32 0.0, %v1466
    %1468 = vmatmul.f32.gmra.mxu0 %v1181
    %v1469 = vpop.f32.mrf.mxu0
    %v1470 = vadd.f32 0.0, %v1469
    %1471 = vdwg.mxu0
    %v1472 = vadd.f32 %v830, %v1281
    %v1473 = vadd.f32 %v833, %v1284
    %v1474 = vadd.f32 %v836, %v1287
    %v1475 = vadd.f32 %v839, %v1290
    %v1476 = vadd.f32 %v842, %v1293
    %v1477 = vadd.f32 %v845, %v1296
    %v1478 = vadd.f32 %v848, %v1299
    %v1479 = vadd.f32 %v851, %v1302
    %v1480 = vadd.f32 %v854, %v1305
    %v1481 = vadd.f32 %v857, %v1308
    %v1482 = vadd.f32 %v860, %v1311
    %v1483 = vadd.f32 %v863, %v1314
    %v1484 = vadd.f32 %v866, %v1317
    %v1485 = vadd.f32 %v869, %v1320
    %v1486 = vadd.f32 %v872, %v1323
    %v1487 = vadd.f32 %v875, %v1326
    %v1488 = vadd.f32 %v878, %v1329
    %v1489 = vadd.f32 %v881, %v1332
    %v1490 = vadd.f32 %v884, %v1335
    %v1491 = vadd.f32 %v887, %v1338
    %v1492 = vadd.f32 %v890, %v1341
    %v1493 = vadd.f32 %v893, %v1344
    %v1494 = vadd.f32 %v896, %v1347
    %v1495 = vadd.f32 %v899, %v1350
    %v1496 = vadd.f32 %v902, %v1353
    %v1497 = vadd.f32 %v905, %v1356
    %v1498 = vadd.f32 %v908, %v1359
    %v1499 = vadd.f32 %v911, %v1362
    %v1500 = vadd.f32 %v914, %v1365
    %v1501 = vadd.f32 %v917, %v1368
    %v1502 = vadd.f32 %v920, %v1371
    %v1503 = vadd.f32 %v923, %v1374
    %v1504 = vadd.f32 %v926, %v1377
    %v1505 = vadd.f32 %v929, %v1380
    %v1506 = vadd.f32 %v932, %v1383
    %v1507 = vadd.f32 %v935, %v1386
    %v1508 = vadd.f32 %v938, %v1389
    %v1509 = vadd.f32 %v941, %v1392
    %v1510 = vadd.f32 %v944, %v1395
    %v1511 = vadd.f32 %v947, %v1398
    %v1512 = vadd.f32 %v950, %v1401
    %v1513 = vadd.f32 %v953, %v1404
    %v1514 = vadd.f32 %v956, %v1407
    %v1515 = vadd.f32 %v959, %v1410
    %v1516 = vadd.f32 %v962, %v1413
    %v1517 = vadd.f32 %v965, %v1416
    %v1518 = vadd.f32 %v968, %v1419
    %v1519 = vadd.f32 %v971, %v1422
    %v1520 = vadd.f32 %v974, %v1425
    %v1521 = vadd.f32 %v977, %v1428
    %v1522 = vadd.f32 %v980, %v1431
    %v1523 = vadd.f32 %v983, %v1434
    %v1524 = vadd.f32 %v986, %v1437
    %v1525 = vadd.f32 %v989, %v1440
    %v1526 = vadd.f32 %v992, %v1443
    %v1527 = vadd.f32 %v995, %v1446
    %v1528 = vadd.f32 %v998, %v1449
    %v1529 = vadd.f32 %v1001, %v1452
    %v1530 = vadd.f32 %v1004, %v1455
    %v1531 = vadd.f32 %v1007, %v1458
    %v1532 = vadd.f32 %v1010, %v1461
    %v1533 = vadd.f32 %v1013, %v1464
    %v1534 = vadd.f32 %v1016, %v1467
    %v1535 = vadd.f32 %v1019, %v1470
    %s1536 = scalar_lea.vmem %s1, 384
    %v1537 = vld [vmem:[%s1536] sm:$0xff]
    %v1538 = vld [vmem:[%s1536 + $0x8] sm:$0xff]
    %v1539 = vld [vmem:[%s1536 + $0x10] sm:$0xff]
    %v1540 = vld [vmem:[%s1536 + $0x18] sm:$0xff]
    %v1541 = vld [vmem:[%s1536 + $0x20] sm:$0xff]
    %v1542 = vld [vmem:[%s1536 + $0x28] sm:$0xff]
    %v1543 = vld [vmem:[%s1536 + $0x30] sm:$0xff]
    %v1544 = vld [vmem:[%s1536 + $0x38] sm:$0xff]
    %v1545 = vld [vmem:[%s1536 + $0x40] sm:$0xff]
    %v1546 = vld [vmem:[%s1536 + $0x48] sm:$0xff]
    %v1547 = vld [vmem:[%s1536 + $0x50] sm:$0xff]
    %v1548 = vld [vmem:[%s1536 + $0x58] sm:$0xff]
    %v1549 = vld [vmem:[%s1536 + $0x60] sm:$0xff]
    %v1550 = vld [vmem:[%s1536 + $0x68] sm:$0xff]
    %v1551 = vld [vmem:[%s1536 + $0x70] sm:$0xff]
    %v1552 = vld [vmem:[%s1536 + $0x78] sm:$0xff]
    %1553 = vmatpush.msra.mxu0 %v1552
    %1554 = vmatpush.msra.mxu0 %v1551
    %1555 = vmatpush.msra.mxu0 %v1550
    %1556 = vmatpush.msra.mxu0 %v1549
    %1557 = vmatpush.msra.mxu0 %v1548
    %1558 = vmatpush.msra.mxu0 %v1547
    %1559 = vmatpush.msra.mxu0 %v1546
    %1560 = vmatpush.msra.mxu0 %v1545
    %1561 = vmatpush.msra.mxu0 %v1544
    %1562 = vmatpush.msra.mxu0 %v1543
    %1563 = vmatpush.msra.mxu0 %v1542
    %1564 = vmatpush.msra.mxu0 %v1541
    %1565 = vmatpush.msra.mxu0 %v1540
    %1566 = vmatpush.msra.mxu0 %v1539
    %1567 = vmatpush.msra.mxu0 %v1538
    %1568 = vmatpush.msra.mxu0 %v1537
    %1569 = vmatmul.f32.gmra.mxu0 %v144
    %v1570 = vpop.f32.mrf.mxu0
    %v1571 = vadd.f32 0.0, %v1570
    %1572 = vmatmul.f32.gmra.mxu0 %v145
    %v1573 = vpop.f32.mrf.mxu0
    %v1574 = vadd.f32 0.0, %v1573
    %1575 = vmatmul.f32.gmra.mxu0 %v147
    %v1576 = vpop.f32.mrf.mxu0
    %v1577 = vadd.f32 0.0, %v1576
    %1578 = vmatmul.f32.gmra.mxu0 %v148
    %v1579 = vpop.f32.mrf.mxu0
    %v1580 = vadd.f32 0.0, %v1579
    %1581 = vmatmul.f32.gmra.mxu0 %v150
    %v1582 = vpop.f32.mrf.mxu0
    %v1583 = vadd.f32 0.0, %v1582
    %1584 = vmatmul.f32.gmra.mxu0 %v151
    %v1585 = vpop.f32.mrf.mxu0
    %v1586 = vadd.f32 0.0, %v1585
    %1587 = vmatmul.f32.gmra.mxu0 %v153
    %v1588 = vpop.f32.mrf.mxu0
    %v1589 = vadd.f32 0.0, %v1588
    %1590 = vmatmul.f32.gmra.mxu0 %v154
    %v1591 = vpop.f32.mrf.mxu0
    %v1592 = vadd.f32 0.0, %v1591
    %1593 = vmatmul.f32.gmra.mxu0 %v156
    %v1594 = vpop.f32.mrf.mxu0
    %v1595 = vadd.f32 0.0, %v1594
    %1596 = vmatmul.f32.gmra.mxu0 %v157
    %v1597 = vpop.f32.mrf.mxu0
    %v1598 = vadd.f32 0.0, %v1597
    %1599 = vmatmul.f32.gmra.mxu0 %v159
    %v1600 = vpop.f32.mrf.mxu0
    %v1601 = vadd.f32 0.0, %v1600
    %1602 = vmatmul.f32.gmra.mxu0 %v160
    %v1603 = vpop.f32.mrf.mxu0
    %v1604 = vadd.f32 0.0, %v1603
    %1605 = vmatmul.f32.gmra.mxu0 %v162
    %v1606 = vpop.f32.mrf.mxu0
    %v1607 = vadd.f32 0.0, %v1606
    %1608 = vmatmul.f32.gmra.mxu0 %v163
    %v1609 = vpop.f32.mrf.mxu0
    %v1610 = vadd.f32 0.0, %v1609
    %1611 = vmatmul.f32.gmra.mxu0 %v165
    %v1612 = vpop.f32.mrf.mxu0
    %v1613 = vadd.f32 0.0, %v1612
    %1614 = vmatmul.f32.gmra.mxu0 %v166
    %v1615 = vpop.f32.mrf.mxu0
    %v1616 = vadd.f32 0.0, %v1615
    %1617 = vmatmul.f32.gmra.mxu0 %v168
    %v1618 = vpop.f32.mrf.mxu0
    %v1619 = vadd.f32 0.0, %v1618
    %1620 = vmatmul.f32.gmra.mxu0 %v169
    %v1621 = vpop.f32.mrf.mxu0
    %v1622 = vadd.f32 0.0, %v1621
    %1623 = vmatmul.f32.gmra.mxu0 %v171
    %v1624 = vpop.f32.mrf.mxu0
    %v1625 = vadd.f32 0.0, %v1624
    %1626 = vmatmul.f32.gmra.mxu0 %v172
    %v1627 = vpop.f32.mrf.mxu0
    %v1628 = vadd.f32 0.0, %v1627
    %1629 = vmatmul.f32.gmra.mxu0 %v174
    %v1630 = vpop.f32.mrf.mxu0
    %v1631 = vadd.f32 0.0, %v1630
    %1632 = vmatmul.f32.gmra.mxu0 %v175
    %v1633 = vpop.f32.mrf.mxu0
    %v1634 = vadd.f32 0.0, %v1633
    %1635 = vmatmul.f32.gmra.mxu0 %v177
    %v1636 = vpop.f32.mrf.mxu0
    %v1637 = vadd.f32 0.0, %v1636
    %1638 = vmatmul.f32.gmra.mxu0 %v178
    %v1639 = vpop.f32.mrf.mxu0
    %v1640 = vadd.f32 0.0, %v1639
    %1641 = vmatmul.f32.gmra.mxu0 %v180
    %v1642 = vpop.f32.mrf.mxu0
    %v1643 = vadd.f32 0.0, %v1642
    %1644 = vmatmul.f32.gmra.mxu0 %v181
    %v1645 = vpop.f32.mrf.mxu0
    %v1646 = vadd.f32 0.0, %v1645
    %1647 = vmatmul.f32.gmra.mxu0 %v183
    %v1648 = vpop.f32.mrf.mxu0
    %v1649 = vadd.f32 0.0, %v1648
    %1650 = vmatmul.f32.gmra.mxu0 %v184
    %v1651 = vpop.f32.mrf.mxu0
    %v1652 = vadd.f32 0.0, %v1651
    %1653 = vmatmul.f32.gmra.mxu0 %v186
    %v1654 = vpop.f32.mrf.mxu0
    %v1655 = vadd.f32 0.0, %v1654
    %1656 = vmatmul.f32.gmra.mxu0 %v187
    %v1657 = vpop.f32.mrf.mxu0
    %v1658 = vadd.f32 0.0, %v1657
    %1659 = vmatmul.f32.gmra.mxu0 %v189
    %v1660 = vpop.f32.mrf.mxu0
    %v1661 = vadd.f32 0.0, %v1660
    %1662 = vmatmul.f32.gmra.mxu0 %v190
    %v1663 = vpop.f32.mrf.mxu0
    %v1664 = vadd.f32 0.0, %v1663
    %1665 = vmatmul.f32.gmra.mxu0 %v198
    %v1666 = vpop.f32.mrf.mxu0
    %v1667 = vadd.f32 0.0, %v1666
    %1668 = vmatmul.f32.gmra.mxu0 %v199
    %v1669 = vpop.f32.mrf.mxu0
    %v1670 = vadd.f32 0.0, %v1669
    %1671 = vmatmul.f32.gmra.mxu0 %v201
    %v1672 = vpop.f32.mrf.mxu0
    %v1673 = vadd.f32 0.0, %v1672
    %1674 = vmatmul.f32.gmra.mxu0 %v202
    %v1675 = vpop.f32.mrf.mxu0
    %v1676 = vadd.f32 0.0, %v1675
    %1677 = vmatmul.f32.gmra.mxu0 %v204
    %v1678 = vpop.f32.mrf.mxu0
    %v1679 = vadd.f32 0.0, %v1678
    %1680 = vmatmul.f32.gmra.mxu0 %v205
    %v1681 = vpop.f32.mrf.mxu0
    %v1682 = vadd.f32 0.0, %v1681
    %1683 = vmatmul.f32.gmra.mxu0 %v207
    %v1684 = vpop.f32.mrf.mxu0
    %v1685 = vadd.f32 0.0, %v1684
    %1686 = vmatmul.f32.gmra.mxu0 %v208
    %v1687 = vpop.f32.mrf.mxu0
    %v1688 = vadd.f32 0.0, %v1687
    %1689 = vmatmul.f32.gmra.mxu0 %v210
    %v1690 = vpop.f32.mrf.mxu0
    %v1691 = vadd.f32 0.0, %v1690
    %1692 = vmatmul.f32.gmra.mxu0 %v211
    %v1693 = vpop.f32.mrf.mxu0
    %v1694 = vadd.f32 0.0, %v1693
    %1695 = vmatmul.f32.gmra.mxu0 %v213
    %v1696 = vpop.f32.mrf.mxu0
    %v1697 = vadd.f32 0.0, %v1696
    %1698 = vmatmul.f32.gmra.mxu0 %v214
    %v1699 = vpop.f32.mrf.mxu0
    %v1700 = vadd.f32 0.0, %v1699
    %1701 = vmatmul.f32.gmra.mxu0 %v216
    %v1702 = vpop.f32.mrf.mxu0
    %v1703 = vadd.f32 0.0, %v1702
    %1704 = vmatmul.f32.gmra.mxu0 %v217
    %v1705 = vpop.f32.mrf.mxu0
    %v1706 = vadd.f32 0.0, %v1705
    %1707 = vmatmul.f32.gmra.mxu0 %v219
    %v1708 = vpop.f32.mrf.mxu0
    %v1709 = vadd.f32 0.0, %v1708
    %1710 = vmatmul.f32.gmra.mxu0 %v220
    %v1711 = vpop.f32.mrf.mxu0
    %v1712 = vadd.f32 0.0, %v1711
    %1713 = vmatmul.f32.gmra.mxu0 %v222
    %v1714 = vpop.f32.mrf.mxu0
    %v1715 = vadd.f32 0.0, %v1714
    %1716 = vmatmul.f32.gmra.mxu0 %v223
    %v1717 = vpop.f32.mrf.mxu0
    %v1718 = vadd.f32 0.0, %v1717
    %1719 = vmatmul.f32.gmra.mxu0 %v225
    %v1720 = vpop.f32.mrf.mxu0
    %v1721 = vadd.f32 0.0, %v1720
    %1722 = vmatmul.f32.gmra.mxu0 %v226
    %v1723 = vpop.f32.mrf.mxu0
    %v1724 = vadd.f32 0.0, %v1723
    %1725 = vmatmul.f32.gmra.mxu0 %v228
    %v1726 = vpop.f32.mrf.mxu0
    %v1727 = vadd.f32 0.0, %v1726
    %1728 = vmatmul.f32.gmra.mxu0 %v229
    %v1729 = vpop.f32.mrf.mxu0
    %v1730 = vadd.f32 0.0, %v1729
    %1731 = vmatmul.f32.gmra.mxu0 %v231
    %v1732 = vpop.f32.mrf.mxu0
    %v1733 = vadd.f32 0.0, %v1732
    %1734 = vmatmul.f32.gmra.mxu0 %v232
    %v1735 = vpop.f32.mrf.mxu0
    %v1736 = vadd.f32 0.0, %v1735
    %1737 = vmatmul.f32.gmra.mxu0 %v234
    %v1738 = vpop.f32.mrf.mxu0
    %v1739 = vadd.f32 0.0, %v1738
    %1740 = vmatmul.f32.gmra.mxu0 %v235
    %v1741 = vpop.f32.mrf.mxu0
    %v1742 = vadd.f32 0.0, %v1741
    %1743 = vmatmul.f32.gmra.mxu0 %v237
    %v1744 = vpop.f32.mrf.mxu0
    %v1745 = vadd.f32 0.0, %v1744
    %1746 = vmatmul.f32.gmra.mxu0 %v238
    %v1747 = vpop.f32.mrf.mxu0
    %v1748 = vadd.f32 0.0, %v1747
    %1749 = vmatmul.f32.gmra.mxu0 %v240
    %v1750 = vpop.f32.mrf.mxu0
    %v1751 = vadd.f32 0.0, %v1750
    %1752 = vmatmul.f32.gmra.mxu0 %v241
    %v1753 = vpop.f32.mrf.mxu0
    %v1754 = vadd.f32 0.0, %v1753
    %1755 = vmatmul.f32.gmra.mxu0 %v243
    %v1756 = vpop.f32.mrf.mxu0
    %v1757 = vadd.f32 0.0, %v1756
    %1758 = vmatmul.f32.gmra.mxu0 %v244
    %v1759 = vpop.f32.mrf.mxu0
    %v1760 = vadd.f32 0.0, %v1759
    %1761 = vdwg.mxu0
    %v1762 = vadd.f32 %v1472, %v1571
    %v1763 = vadd.f32 %v1473, %v1574
    %v1764 = vadd.f32 %v1474, %v1577
    %v1765 = vadd.f32 %v1475, %v1580
    %v1766 = vadd.f32 %v1476, %v1583
    %v1767 = vadd.f32 %v1477, %v1586
    %v1768 = vadd.f32 %v1478, %v1589
    %v1769 = vadd.f32 %v1479, %v1592
    %v1770 = vadd.f32 %v1480, %v1595
    %v1771 = vadd.f32 %v1481, %v1598
    %v1772 = vadd.f32 %v1482, %v1601
    %v1773 = vadd.f32 %v1483, %v1604
    %v1774 = vadd.f32 %v1484, %v1607
    %v1775 = vadd.f32 %v1485, %v1610
    %v1776 = vadd.f32 %v1486, %v1613
    %v1777 = vadd.f32 %v1487, %v1616
    %v1778 = vadd.f32 %v1488, %v1619
    %v1779 = vadd.f32 %v1489, %v1622
    %v1780 = vadd.f32 %v1490, %v1625
    %v1781 = vadd.f32 %v1491, %v1628
    %v1782 = vadd.f32 %v1492, %v1631
    %v1783 = vadd.f32 %v1493, %v1634
    %v1784 = vadd.f32 %v1494, %v1637
    %v1785 = vadd.f32 %v1495, %v1640
    %v1786 = vadd.f32 %v1496, %v1643
    %v1787 = vadd.f32 %v1497, %v1646
    %v1788 = vadd.f32 %v1498, %v1649
    %v1789 = vadd.f32 %v1499, %v1652
    %v1790 = vadd.f32 %v1500, %v1655
    %v1791 = vadd.f32 %v1501, %v1658
    %v1792 = vadd.f32 %v1502, %v1661
    %v1793 = vadd.f32 %v1503, %v1664
    %v1794 = vadd.f32 %v1504, %v1667
    %v1795 = vadd.f32 %v1505, %v1670
    %v1796 = vadd.f32 %v1506, %v1673
    %v1797 = vadd.f32 %v1507, %v1676
    %v1798 = vadd.f32 %v1508, %v1679
    %v1799 = vadd.f32 %v1509, %v1682
    %v1800 = vadd.f32 %v1510, %v1685
    %v1801 = vadd.f32 %v1511, %v1688
    %v1802 = vadd.f32 %v1512, %v1691
    %v1803 = vadd.f32 %v1513, %v1694
    %v1804 = vadd.f32 %v1514, %v1697
    %v1805 = vadd.f32 %v1515, %v1700
    %v1806 = vadd.f32 %v1516, %v1703
    %v1807 = vadd.f32 %v1517, %v1706
    %v1808 = vadd.f32 %v1518, %v1709
    %v1809 = vadd.f32 %v1519, %v1712
    %v1810 = vadd.f32 %v1520, %v1715
    %v1811 = vadd.f32 %v1521, %v1718
    %v1812 = vadd.f32 %v1522, %v1721
    %v1813 = vadd.f32 %v1523, %v1724
    %v1814 = vadd.f32 %v1524, %v1727
    %v1815 = vadd.f32 %v1525, %v1730
    %v1816 = vadd.f32 %v1526, %v1733
    %v1817 = vadd.f32 %v1527, %v1736
    %v1818 = vadd.f32 %v1528, %v1739
    %v1819 = vadd.f32 %v1529, %v1742
    %v1820 = vadd.f32 %v1530, %v1745
    %v1821 = vadd.f32 %v1531, %v1748
    %v1822 = vadd.f32 %v1532, %v1751
    %v1823 = vadd.f32 %v1533, %v1754
    %v1824 = vadd.f32 %v1534, %v1757
    %v1825 = vadd.f32 %v1535, %v1760
    %v1832 = vrot.slane %v189, 1
    %v1833 = vrot.slane %v190, 1
    %v1834 = vsel %vm361, %v1832, %v1833
    %v1835 = vrot.slane %v191, 1
    %v1836 = vsel %vm361, %v1833, %v1835
    %v1837 = vrot.slane %v243, 1
    %v1838 = vrot.slane %v244, 1
    %v1839 = vsel %vm361, %v1837, %v1838
    %v1840 = vrot.slane %v245, 1
    %v1841 = vsel %vm361, %v1838, %v1840
    %s1846 = scalar_lea.vmem %s1, 512
    %v1847 = vld [vmem:[%s1846] sm:$0xff]
    %v1848 = vld [vmem:[%s1846 + $0x8] sm:$0xff]
    %v1849 = vld [vmem:[%s1846 + $0x10] sm:$0xff]
    %v1850 = vld [vmem:[%s1846 + $0x18] sm:$0xff]
    %v1851 = vld [vmem:[%s1846 + $0x20] sm:$0xff]
    %v1852 = vld [vmem:[%s1846 + $0x28] sm:$0xff]
    %v1853 = vld [vmem:[%s1846 + $0x30] sm:$0xff]
    %v1854 = vld [vmem:[%s1846 + $0x38] sm:$0xff]
    %v1855 = vld [vmem:[%s1846 + $0x40] sm:$0xff]
    %v1856 = vld [vmem:[%s1846 + $0x48] sm:$0xff]
    %v1857 = vld [vmem:[%s1846 + $0x50] sm:$0xff]
    %v1858 = vld [vmem:[%s1846 + $0x58] sm:$0xff]
    %v1859 = vld [vmem:[%s1846 + $0x60] sm:$0xff]
    %v1860 = vld [vmem:[%s1846 + $0x68] sm:$0xff]
    %v1861 = vld [vmem:[%s1846 + $0x70] sm:$0xff]
    %v1862 = vld [vmem:[%s1846 + $0x78] sm:$0xff]
    %1863 = vmatpush.msra.mxu0 %v1862
    %1864 = vmatpush.msra.mxu0 %v1861
    %1865 = vmatpush.msra.mxu0 %v1860
    %1866 = vmatpush.msra.mxu0 %v1859
    %1867 = vmatpush.msra.mxu0 %v1858
    %1868 = vmatpush.msra.mxu0 %v1857
    %1869 = vmatpush.msra.mxu0 %v1856
    %1870 = vmatpush.msra.mxu0 %v1855
    %1871 = vmatpush.msra.mxu0 %v1854
    %1872 = vmatpush.msra.mxu0 %v1853
    %1873 = vmatpush.msra.mxu0 %v1852
    %1874 = vmatpush.msra.mxu0 %v1851
    %1875 = vmatpush.msra.mxu0 %v1850
    %1876 = vmatpush.msra.mxu0 %v1849
    %1877 = vmatpush.msra.mxu0 %v1848
    %1878 = vmatpush.msra.mxu0 %v1847
    %1879 = vmatmul.f32.gmra.mxu0 %v369
    %v1880 = vpop.f32.mrf.mxu0
    %v1881 = vadd.f32 0.0, %v1880
    %1882 = vmatmul.f32.gmra.mxu0 %v371
    %v1883 = vpop.f32.mrf.mxu0
    %v1884 = vadd.f32 0.0, %v1883
    %1885 = vmatmul.f32.gmra.mxu0 %v374
    %v1886 = vpop.f32.mrf.mxu0
    %v1887 = vadd.f32 0.0, %v1886
    %1888 = vmatmul.f32.gmra.mxu0 %v376
    %v1889 = vpop.f32.mrf.mxu0
    %v1890 = vadd.f32 0.0, %v1889
    %1891 = vmatmul.f32.gmra.mxu0 %v379
    %v1892 = vpop.f32.mrf.mxu0
    %v1893 = vadd.f32 0.0, %v1892
    %1894 = vmatmul.f32.gmra.mxu0 %v381
    %v1895 = vpop.f32.mrf.mxu0
    %v1896 = vadd.f32 0.0, %v1895
    %1897 = vmatmul.f32.gmra.mxu0 %v384
    %v1898 = vpop.f32.mrf.mxu0
    %v1899 = vadd.f32 0.0, %v1898
    %1900 = vmatmul.f32.gmra.mxu0 %v386
    %v1901 = vpop.f32.mrf.mxu0
    %v1902 = vadd.f32 0.0, %v1901
    %1903 = vmatmul.f32.gmra.mxu0 %v389
    %v1904 = vpop.f32.mrf.mxu0
    %v1905 = vadd.f32 0.0, %v1904
    %1906 = vmatmul.f32.gmra.mxu0 %v391
    %v1907 = vpop.f32.mrf.mxu0
    %v1908 = vadd.f32 0.0, %v1907
    %1909 = vmatmul.f32.gmra.mxu0 %v394
    %v1910 = vpop.f32.mrf.mxu0
    %v1911 = vadd.f32 0.0, %v1910
    %1912 = vmatmul.f32.gmra.mxu0 %v396
    %v1913 = vpop.f32.mrf.mxu0
    %v1914 = vadd.f32 0.0, %v1913
    %1915 = vmatmul.f32.gmra.mxu0 %v399
    %v1916 = vpop.f32.mrf.mxu0
    %v1917 = vadd.f32 0.0, %v1916
    %1918 = vmatmul.f32.gmra.mxu0 %v401
    %v1919 = vpop.f32.mrf.mxu0
    %v1920 = vadd.f32 0.0, %v1919
    %1921 = vmatmul.f32.gmra.mxu0 %v404
    %v1922 = vpop.f32.mrf.mxu0
    %v1923 = vadd.f32 0.0, %v1922
    %1924 = vmatmul.f32.gmra.mxu0 %v406
    %v1925 = vpop.f32.mrf.mxu0
    %v1926 = vadd.f32 0.0, %v1925
    %1927 = vmatmul.f32.gmra.mxu0 %v409
    %v1928 = vpop.f32.mrf.mxu0
    %v1929 = vadd.f32 0.0, %v1928
    %1930 = vmatmul.f32.gmra.mxu0 %v411
    %v1931 = vpop.f32.mrf.mxu0
    %v1932 = vadd.f32 0.0, %v1931
    %1933 = vmatmul.f32.gmra.mxu0 %v414
    %v1934 = vpop.f32.mrf.mxu0
    %v1935 = vadd.f32 0.0, %v1934
    %1936 = vmatmul.f32.gmra.mxu0 %v416
    %v1937 = vpop.f32.mrf.mxu0
    %v1938 = vadd.f32 0.0, %v1937
    %1939 = vmatmul.f32.gmra.mxu0 %v419
    %v1940 = vpop.f32.mrf.mxu0
    %v1941 = vadd.f32 0.0, %v1940
    %1942 = vmatmul.f32.gmra.mxu0 %v421
    %v1943 = vpop.f32.mrf.mxu0
    %v1944 = vadd.f32 0.0, %v1943
    %1945 = vmatmul.f32.gmra.mxu0 %v424
    %v1946 = vpop.f32.mrf.mxu0
    %v1947 = vadd.f32 0.0, %v1946
    %1948 = vmatmul.f32.gmra.mxu0 %v426
    %v1949 = vpop.f32.mrf.mxu0
    %v1950 = vadd.f32 0.0, %v1949
    %1951 = vmatmul.f32.gmra.mxu0 %v429
    %v1952 = vpop.f32.mrf.mxu0
    %v1953 = vadd.f32 0.0, %v1952
    %1954 = vmatmul.f32.gmra.mxu0 %v431
    %v1955 = vpop.f32.mrf.mxu0
    %v1956 = vadd.f32 0.0, %v1955
    %1957 = vmatmul.f32.gmra.mxu0 %v434
    %v1958 = vpop.f32.mrf.mxu0
    %v1959 = vadd.f32 0.0, %v1958
    %1960 = vmatmul.f32.gmra.mxu0 %v436
    %v1961 = vpop.f32.mrf.mxu0
    %v1962 = vadd.f32 0.0, %v1961
    %1963 = vmatmul.f32.gmra.mxu0 %v439
    %v1964 = vpop.f32.mrf.mxu0
    %v1965 = vadd.f32 0.0, %v1964
    %1966 = vmatmul.f32.gmra.mxu0 %v441
    %v1967 = vpop.f32.mrf.mxu0
    %v1968 = vadd.f32 0.0, %v1967
    %1969 = vmatmul.f32.gmra.mxu0 %v1834
    %v1970 = vpop.f32.mrf.mxu0
    %v1971 = vadd.f32 0.0, %v1970
    %1972 = vmatmul.f32.gmra.mxu0 %v1836
    %v1973 = vpop.f32.mrf.mxu0
    %v1974 = vadd.f32 0.0, %v1973
    %1975 = vmatmul.f32.gmra.mxu0 %v449
    %v1976 = vpop.f32.mrf.mxu0
    %v1977 = vadd.f32 0.0, %v1976
    %1978 = vmatmul.f32.gmra.mxu0 %v451
    %v1979 = vpop.f32.mrf.mxu0
    %v1980 = vadd.f32 0.0, %v1979
    %1981 = vmatmul.f32.gmra.mxu0 %v454
    %v1982 = vpop.f32.mrf.mxu0
    %v1983 = vadd.f32 0.0, %v1982
    %1984 = vmatmul.f32.gmra.mxu0 %v456
    %v1985 = vpop.f32.mrf.mxu0
    %v1986 = vadd.f32 0.0, %v1985
    %1987 = vmatmul.f32.gmra.mxu0 %v459
    %v1988 = vpop.f32.mrf.mxu0
    %v1989 = vadd.f32 0.0, %v1988
    %1990 = vmatmul.f32.gmra.mxu0 %v461
    %v1991 = vpop.f32.mrf.mxu0
    %v1992 = vadd.f32 0.0, %v1991
    %1993 = vmatmul.f32.gmra.mxu0 %v464
    %v1994 = vpop.f32.mrf.mxu0
    %v1995 = vadd.f32 0.0, %v1994
    %1996 = vmatmul.f32.gmra.mxu0 %v466
    %v1997 = vpop.f32.mrf.mxu0
    %v1998 = vadd.f32 0.0, %v1997
    %1999 = vmatmul.f32.gmra.mxu0 %v469
    %v2000 = vpop.f32.mrf.mxu0
    %v2001 = vadd.f32 0.0, %v2000
    %2002 = vmatmul.f32.gmra.mxu0 %v471
    %v2003 = vpop.f32.mrf.mxu0
    %v2004 = vadd.f32 0.0, %v2003
    %2005 = vmatmul.f32.gmra.mxu0 %v474
    %v2006 = vpop.f32.mrf.mxu0
    %v2007 = vadd.f32 0.0, %v2006
    %2008 = vmatmul.f32.gmra.mxu0 %v476
    %v2009 = vpop.f32.mrf.mxu0
    %v2010 = vadd.f32 0.0, %v2009
    %2011 = vmatmul.f32.gmra.mxu0 %v479
    %v2012 = vpop.f32.mrf.mxu0
    %v2013 = vadd.f32 0.0, %v2012
    %2014 = vmatmul.f32.gmra.mxu0 %v481
    %v2015 = vpop.f32.mrf.mxu0
    %v2016 = vadd.f32 0.0, %v2015
    %2017 = vmatmul.f32.gmra.mxu0 %v484
    %v2018 = vpop.f32.mrf.mxu0
    %v2019 = vadd.f32 0.0, %v2018
    %2020 = vmatmul.f32.gmra.mxu0 %v486
    %v2021 = vpop.f32.mrf.mxu0
    %v2022 = vadd.f32 0.0, %v2021
    %2023 = vmatmul.f32.gmra.mxu0 %v489
    %v2024 = vpop.f32.mrf.mxu0
    %v2025 = vadd.f32 0.0, %v2024
    %2026 = vmatmul.f32.gmra.mxu0 %v491
    %v2027 = vpop.f32.mrf.mxu0
    %v2028 = vadd.f32 0.0, %v2027
    %2029 = vmatmul.f32.gmra.mxu0 %v494
    %v2030 = vpop.f32.mrf.mxu0
    %v2031 = vadd.f32 0.0, %v2030
    %2032 = vmatmul.f32.gmra.mxu0 %v496
    %v2033 = vpop.f32.mrf.mxu0
    %v2034 = vadd.f32 0.0, %v2033
    %2035 = vmatmul.f32.gmra.mxu0 %v499
    %v2036 = vpop.f32.mrf.mxu0
    %v2037 = vadd.f32 0.0, %v2036
    %2038 = vmatmul.f32.gmra.mxu0 %v501
    %v2039 = vpop.f32.mrf.mxu0
    %v2040 = vadd.f32 0.0, %v2039
    %2041 = vmatmul.f32.gmra.mxu0 %v504
    %v2042 = vpop.f32.mrf.mxu0
    %v2043 = vadd.f32 0.0, %v2042
    %2044 = vmatmul.f32.gmra.mxu0 %v506
    %v2045 = vpop.f32.mrf.mxu0
    %v2046 = vadd.f32 0.0, %v2045
    %2047 = vmatmul.f32.gmra.mxu0 %v509
    %v2048 = vpop.f32.mrf.mxu0
    %v2049 = vadd.f32 0.0, %v2048
    %2050 = vmatmul.f32.gmra.mxu0 %v511
    %v2051 = vpop.f32.mrf.mxu0
    %v2052 = vadd.f32 0.0, %v2051
    %2053 = vmatmul.f32.gmra.mxu0 %v514
    %v2054 = vpop.f32.mrf.mxu0
    %v2055 = vadd.f32 0.0, %v2054
    %2056 = vmatmul.f32.gmra.mxu0 %v516
    %v2057 = vpop.f32.mrf.mxu0
    %v2058 = vadd.f32 0.0, %v2057
    %2059 = vmatmul.f32.gmra.mxu0 %v519
    %v2060 = vpop.f32.mrf.mxu0
    %v2061 = vadd.f32 0.0, %v2060
    %2062 = vmatmul.f32.gmra.mxu0 %v521
    %v2063 = vpop.f32.mrf.mxu0
    %v2064 = vadd.f32 0.0, %v2063
    %2065 = vmatmul.f32.gmra.mxu0 %v1839
    %v2066 = vpop.f32.mrf.mxu0
    %v2067 = vadd.f32 0.0, %v2066
    %2068 = vmatmul.f32.gmra.mxu0 %v1841
    %v2069 = vpop.f32.mrf.mxu0
    %v2070 = vadd.f32 0.0, %v2069
    %2071 = vdwg.mxu0
    %v2072 = vadd.f32 %v1762, %v1881
    %v2073 = vadd.f32 %v1763, %v1884
    %v2074 = vadd.f32 %v1764, %v1887
    %v2075 = vadd.f32 %v1765, %v1890
    %v2076 = vadd.f32 %v1766, %v1893
    %v2077 = vadd.f32 %v1767, %v1896
    %v2078 = vadd.f32 %v1768, %v1899
    %v2079 = vadd.f32 %v1769, %v1902
    %v2080 = vadd.f32 %v1770, %v1905
    %v2081 = vadd.f32 %v1771, %v1908
    %v2082 = vadd.f32 %v1772, %v1911
    %v2083 = vadd.f32 %v1773, %v1914
    %v2084 = vadd.f32 %v1774, %v1917
    %v2085 = vadd.f32 %v1775, %v1920
    %v2086 = vadd.f32 %v1776, %v1923
    %v2087 = vadd.f32 %v1777, %v1926
    %v2088 = vadd.f32 %v1778, %v1929
    %v2089 = vadd.f32 %v1779, %v1932
    %v2090 = vadd.f32 %v1780, %v1935
    %v2091 = vadd.f32 %v1781, %v1938
    %v2092 = vadd.f32 %v1782, %v1941
    %v2093 = vadd.f32 %v1783, %v1944
    %v2094 = vadd.f32 %v1784, %v1947
    %v2095 = vadd.f32 %v1785, %v1950
    %v2096 = vadd.f32 %v1786, %v1953
    %v2097 = vadd.f32 %v1787, %v1956
    %v2098 = vadd.f32 %v1788, %v1959
    %v2099 = vadd.f32 %v1789, %v1962
    %v2100 = vadd.f32 %v1790, %v1965
    %v2101 = vadd.f32 %v1791, %v1968
    %v2102 = vadd.f32 %v1792, %v1971
    %v2103 = vadd.f32 %v1793, %v1974
    %v2104 = vadd.f32 %v1794, %v1977
    %v2105 = vadd.f32 %v1795, %v1980
    %v2106 = vadd.f32 %v1796, %v1983
    %v2107 = vadd.f32 %v1797, %v1986
    %v2108 = vadd.f32 %v1798, %v1989
    %v2109 = vadd.f32 %v1799, %v1992
    %v2110 = vadd.f32 %v1800, %v1995
    %v2111 = vadd.f32 %v1801, %v1998
    %v2112 = vadd.f32 %v1802, %v2001
    %v2113 = vadd.f32 %v1803, %v2004
    %v2114 = vadd.f32 %v1804, %v2007
    %v2115 = vadd.f32 %v1805, %v2010
    %v2116 = vadd.f32 %v1806, %v2013
    %v2117 = vadd.f32 %v1807, %v2016
    %v2118 = vadd.f32 %v1808, %v2019
    %v2119 = vadd.f32 %v1809, %v2022
    %v2120 = vadd.f32 %v1810, %v2025
    %v2121 = vadd.f32 %v1811, %v2028
    %v2122 = vadd.f32 %v1812, %v2031
    %v2123 = vadd.f32 %v1813, %v2034
    %v2124 = vadd.f32 %v1814, %v2037
    %v2125 = vadd.f32 %v1815, %v2040
    %v2126 = vadd.f32 %v1816, %v2043
    %v2127 = vadd.f32 %v1817, %v2046
    %v2128 = vadd.f32 %v1818, %v2049
    %v2129 = vadd.f32 %v1819, %v2052
    %v2130 = vadd.f32 %v1820, %v2055
    %v2131 = vadd.f32 %v1821, %v2058
    %v2132 = vadd.f32 %v1822, %v2061
    %v2133 = vadd.f32 %v1823, %v2064
    %v2134 = vadd.f32 %v1824, %v2067
    %v2135 = vadd.f32 %v1825, %v2070
    %v2136 = vrot.slane %v189, 2
    %v2137 = vrot.slane %v190, 2
    %v2138 = vsel %vm1021, %v2136, %v2137
    %v2139 = vrot.slane %v191, 2
    %v2140 = vsel %vm1021, %v2137, %v2139
    %v2141 = vrot.slane %v243, 2
    %v2142 = vrot.slane %v244, 2
    %v2143 = vsel %vm1021, %v2141, %v2142
    %v2144 = vrot.slane %v245, 2
    %v2145 = vsel %vm1021, %v2142, %v2144
    %s2150 = scalar_lea.vmem %s1, 640
    %v2151 = vld [vmem:[%s2150] sm:$0xff]
    %v2152 = vld [vmem:[%s2150 + $0x8] sm:$0xff]
    %v2153 = vld [vmem:[%s2150 + $0x10] sm:$0xff]
    %v2154 = vld [vmem:[%s2150 + $0x18] sm:$0xff]
    %v2155 = vld [vmem:[%s2150 + $0x20] sm:$0xff]
    %v2156 = vld [vmem:[%s2150 + $0x28] sm:$0xff]
    %v2157 = vld [vmem:[%s2150 + $0x30] sm:$0xff]
    %v2158 = vld [vmem:[%s2150 + $0x38] sm:$0xff]
    %v2159 = vld [vmem:[%s2150 + $0x40] sm:$0xff]
    %v2160 = vld [vmem:[%s2150 + $0x48] sm:$0xff]
    %v2161 = vld [vmem:[%s2150 + $0x50] sm:$0xff]
    %v2162 = vld [vmem:[%s2150 + $0x58] sm:$0xff]
    %v2163 = vld [vmem:[%s2150 + $0x60] sm:$0xff]
    %v2164 = vld [vmem:[%s2150 + $0x68] sm:$0xff]
    %v2165 = vld [vmem:[%s2150 + $0x70] sm:$0xff]
    %v2166 = vld [vmem:[%s2150 + $0x78] sm:$0xff]
    %2167 = vmatpush.msra.mxu0 %v2166
    %2168 = vmatpush.msra.mxu0 %v2165
    %2169 = vmatpush.msra.mxu0 %v2164
    %2170 = vmatpush.msra.mxu0 %v2163
    %2171 = vmatpush.msra.mxu0 %v2162
    %2172 = vmatpush.msra.mxu0 %v2161
    %2173 = vmatpush.msra.mxu0 %v2160
    %2174 = vmatpush.msra.mxu0 %v2159
    %2175 = vmatpush.msra.mxu0 %v2158
    %2176 = vmatpush.msra.mxu0 %v2157
    %2177 = vmatpush.msra.mxu0 %v2156
    %2178 = vmatpush.msra.mxu0 %v2155
    %2179 = vmatpush.msra.mxu0 %v2154
    %2180 = vmatpush.msra.mxu0 %v2153
    %2181 = vmatpush.msra.mxu0 %v2152
    %2182 = vmatpush.msra.mxu0 %v2151
    %2183 = vmatmul.f32.gmra.mxu0 %v1029
    %v2184 = vpop.f32.mrf.mxu0
    %v2185 = vadd.f32 0.0, %v2184
    %2186 = vmatmul.f32.gmra.mxu0 %v1031
    %v2187 = vpop.f32.mrf.mxu0
    %v2188 = vadd.f32 0.0, %v2187
    %2189 = vmatmul.f32.gmra.mxu0 %v1034
    %v2190 = vpop.f32.mrf.mxu0
    %v2191 = vadd.f32 0.0, %v2190
    %2192 = vmatmul.f32.gmra.mxu0 %v1036
    %v2193 = vpop.f32.mrf.mxu0
    %v2194 = vadd.f32 0.0, %v2193
    %2195 = vmatmul.f32.gmra.mxu0 %v1039
    %v2196 = vpop.f32.mrf.mxu0
    %v2197 = vadd.f32 0.0, %v2196
    %2198 = vmatmul.f32.gmra.mxu0 %v1041
    %v2199 = vpop.f32.mrf.mxu0
    %v2200 = vadd.f32 0.0, %v2199
    %2201 = vmatmul.f32.gmra.mxu0 %v1044
    %v2202 = vpop.f32.mrf.mxu0
    %v2203 = vadd.f32 0.0, %v2202
    %2204 = vmatmul.f32.gmra.mxu0 %v1046
    %v2205 = vpop.f32.mrf.mxu0
    %v2206 = vadd.f32 0.0, %v2205
    %2207 = vmatmul.f32.gmra.mxu0 %v1049
    %v2208 = vpop.f32.mrf.mxu0
    %v2209 = vadd.f32 0.0, %v2208
    %2210 = vmatmul.f32.gmra.mxu0 %v1051
    %v2211 = vpop.f32.mrf.mxu0
    %v2212 = vadd.f32 0.0, %v2211
    %2213 = vmatmul.f32.gmra.mxu0 %v1054
    %v2214 = vpop.f32.mrf.mxu0
    %v2215 = vadd.f32 0.0, %v2214
    %2216 = vmatmul.f32.gmra.mxu0 %v1056
    %v2217 = vpop.f32.mrf.mxu0
    %v2218 = vadd.f32 0.0, %v2217
    %2219 = vmatmul.f32.gmra.mxu0 %v1059
    %v2220 = vpop.f32.mrf.mxu0
    %v2221 = vadd.f32 0.0, %v2220
    %2222 = vmatmul.f32.gmra.mxu0 %v1061
    %v2223 = vpop.f32.mrf.mxu0
    %v2224 = vadd.f32 0.0, %v2223
    %2225 = vmatmul.f32.gmra.mxu0 %v1064
    %v2226 = vpop.f32.mrf.mxu0
    %v2227 = vadd.f32 0.0, %v2226
    %2228 = vmatmul.f32.gmra.mxu0 %v1066
    %v2229 = vpop.f32.mrf.mxu0
    %v2230 = vadd.f32 0.0, %v2229
    %2231 = vmatmul.f32.gmra.mxu0 %v1069
    %v2232 = vpop.f32.mrf.mxu0
    %v2233 = vadd.f32 0.0, %v2232
    %2234 = vmatmul.f32.gmra.mxu0 %v1071
    %v2235 = vpop.f32.mrf.mxu0
    %v2236 = vadd.f32 0.0, %v2235
    %2237 = vmatmul.f32.gmra.mxu0 %v1074
    %v2238 = vpop.f32.mrf.mxu0
    %v2239 = vadd.f32 0.0, %v2238
    %2240 = vmatmul.f32.gmra.mxu0 %v1076
    %v2241 = vpop.f32.mrf.mxu0
    %v2242 = vadd.f32 0.0, %v2241
    %2243 = vmatmul.f32.gmra.mxu0 %v1079
    %v2244 = vpop.f32.mrf.mxu0
    %v2245 = vadd.f32 0.0, %v2244
    %2246 = vmatmul.f32.gmra.mxu0 %v1081
    %v2247 = vpop.f32.mrf.mxu0
    %v2248 = vadd.f32 0.0, %v2247
    %2249 = vmatmul.f32.gmra.mxu0 %v1084
    %v2250 = vpop.f32.mrf.mxu0
    %v2251 = vadd.f32 0.0, %v2250
    %2252 = vmatmul.f32.gmra.mxu0 %v1086
    %v2253 = vpop.f32.mrf.mxu0
    %v2254 = vadd.f32 0.0, %v2253
    %2255 = vmatmul.f32.gmra.mxu0 %v1089
    %v2256 = vpop.f32.mrf.mxu0
    %v2257 = vadd.f32 0.0, %v2256
    %2258 = vmatmul.f32.gmra.mxu0 %v1091
    %v2259 = vpop.f32.mrf.mxu0
    %v2260 = vadd.f32 0.0, %v2259
    %2261 = vmatmul.f32.gmra.mxu0 %v1094
    %v2262 = vpop.f32.mrf.mxu0
    %v2263 = vadd.f32 0.0, %v2262
    %2264 = vmatmul.f32.gmra.mxu0 %v1096
    %v2265 = vpop.f32.mrf.mxu0
    %v2266 = vadd.f32 0.0, %v2265
    %2267 = vmatmul.f32.gmra.mxu0 %v1099
    %v2268 = vpop.f32.mrf.mxu0
    %v2269 = vadd.f32 0.0, %v2268
    %2270 = vmatmul.f32.gmra.mxu0 %v1101
    %v2271 = vpop.f32.mrf.mxu0
    %v2272 = vadd.f32 0.0, %v2271
    %2273 = vmatmul.f32.gmra.mxu0 %v2138
    %v2274 = vpop.f32.mrf.mxu0
    %v2275 = vadd.f32 0.0, %v2274
    %2276 = vmatmul.f32.gmra.mxu0 %v2140
    %v2277 = vpop.f32.mrf.mxu0
    %v2278 = vadd.f32 0.0, %v2277
    %2279 = vmatmul.f32.gmra.mxu0 %v1109
    %v2280 = vpop.f32.mrf.mxu0
    %v2281 = vadd.f32 0.0, %v2280
    %2282 = vmatmul.f32.gmra.mxu0 %v1111
    %v2283 = vpop.f32.mrf.mxu0
    %v2284 = vadd.f32 0.0, %v2283
    %2285 = vmatmul.f32.gmra.mxu0 %v1114
    %v2286 = vpop.f32.mrf.mxu0
    %v2287 = vadd.f32 0.0, %v2286
    %2288 = vmatmul.f32.gmra.mxu0 %v1116
    %v2289 = vpop.f32.mrf.mxu0
    %v2290 = vadd.f32 0.0, %v2289
    %2291 = vmatmul.f32.gmra.mxu0 %v1119
    %v2292 = vpop.f32.mrf.mxu0
    %v2293 = vadd.f32 0.0, %v2292
    %2294 = vmatmul.f32.gmra.mxu0 %v1121
    %v2295 = vpop.f32.mrf.mxu0
    %v2296 = vadd.f32 0.0, %v2295
    %2297 = vmatmul.f32.gmra.mxu0 %v1124
    %v2298 = vpop.f32.mrf.mxu0
    %v2299 = vadd.f32 0.0, %v2298
    %2300 = vmatmul.f32.gmra.mxu0 %v1126
    %v2301 = vpop.f32.mrf.mxu0
    %v2302 = vadd.f32 0.0, %v2301
    %2303 = vmatmul.f32.gmra.mxu0 %v1129
    %v2304 = vpop.f32.mrf.mxu0
    %v2305 = vadd.f32 0.0, %v2304
    %2306 = vmatmul.f32.gmra.mxu0 %v1131
    %v2307 = vpop.f32.mrf.mxu0
    %v2308 = vadd.f32 0.0, %v2307
    %2309 = vmatmul.f32.gmra.mxu0 %v1134
    %v2310 = vpop.f32.mrf.mxu0
    %v2311 = vadd.f32 0.0, %v2310
    %2312 = vmatmul.f32.gmra.mxu0 %v1136
    %v2313 = vpop.f32.mrf.mxu0
    %v2314 = vadd.f32 0.0, %v2313
    %2315 = vmatmul.f32.gmra.mxu0 %v1139
    %v2316 = vpop.f32.mrf.mxu0
    %v2317 = vadd.f32 0.0, %v2316
    %2318 = vmatmul.f32.gmra.mxu0 %v1141
    %v2319 = vpop.f32.mrf.mxu0
    %v2320 = vadd.f32 0.0, %v2319
    %2321 = vmatmul.f32.gmra.mxu0 %v1144
    %v2322 = vpop.f32.mrf.mxu0
    %v2323 = vadd.f32 0.0, %v2322
    %2324 = vmatmul.f32.gmra.mxu0 %v1146
    %v2325 = vpop.f32.mrf.mxu0
    %v2326 = vadd.f32 0.0, %v2325
    %2327 = vmatmul.f32.gmra.mxu0 %v1149
    %v2328 = vpop.f32.mrf.mxu0
    %v2329 = vadd.f32 0.0, %v2328
    %2330 = vmatmul.f32.gmra.mxu0 %v1151
    %v2331 = vpop.f32.mrf.mxu0
    %v2332 = vadd.f32 0.0, %v2331
    %2333 = vmatmul.f32.gmra.mxu0 %v1154
    %v2334 = vpop.f32.mrf.mxu0
    %v2335 = vadd.f32 0.0, %v2334
    %2336 = vmatmul.f32.gmra.mxu0 %v1156
    %v2337 = vpop.f32.mrf.mxu0
    %v2338 = vadd.f32 0.0, %v2337
    %2339 = vmatmul.f32.gmra.mxu0 %v1159
    %v2340 = vpop.f32.mrf.mxu0
    %v2341 = vadd.f32 0.0, %v2340
    %2342 = vmatmul.f32.gmra.mxu0 %v1161
    %v2343 = vpop.f32.mrf.mxu0
    %v2344 = vadd.f32 0.0, %v2343
    %2345 = vmatmul.f32.gmra.mxu0 %v1164
    %v2346 = vpop.f32.mrf.mxu0
    %v2347 = vadd.f32 0.0, %v2346
    %2348 = vmatmul.f32.gmra.mxu0 %v1166
    %v2349 = vpop.f32.mrf.mxu0
    %v2350 = vadd.f32 0.0, %v2349
    %2351 = vmatmul.f32.gmra.mxu0 %v1169
    %v2352 = vpop.f32.mrf.mxu0
    %v2353 = vadd.f32 0.0, %v2352
    %2354 = vmatmul.f32.gmra.mxu0 %v1171
    %v2355 = vpop.f32.mrf.mxu0
    %v2356 = vadd.f32 0.0, %v2355
    %2357 = vmatmul.f32.gmra.mxu0 %v1174
    %v2358 = vpop.f32.mrf.mxu0
    %v2359 = vadd.f32 0.0, %v2358
    %2360 = vmatmul.f32.gmra.mxu0 %v1176
    %v2361 = vpop.f32.mrf.mxu0
    %v2362 = vadd.f32 0.0, %v2361
    %2363 = vmatmul.f32.gmra.mxu0 %v1179
    %v2364 = vpop.f32.mrf.mxu0
    %v2365 = vadd.f32 0.0, %v2364
    %2366 = vmatmul.f32.gmra.mxu0 %v1181
    %v2367 = vpop.f32.mrf.mxu0
    %v2368 = vadd.f32 0.0, %v2367
    %2369 = vmatmul.f32.gmra.mxu0 %v2143
    %v2370 = vpop.f32.mrf.mxu0
    %v2371 = vadd.f32 0.0, %v2370
    %2372 = vmatmul.f32.gmra.mxu0 %v2145
    %v2373 = vpop.f32.mrf.mxu0
    %v2374 = vadd.f32 0.0, %v2373
    %2375 = vdwg.mxu0
    %v2376 = vadd.f32 %v2072, %v2185
    %v2377 = vadd.f32 %v2073, %v2188
    %v2378 = vadd.f32 %v2074, %v2191
    %v2379 = vadd.f32 %v2075, %v2194
    %v2380 = vadd.f32 %v2076, %v2197
    %v2381 = vadd.f32 %v2077, %v2200
    %v2382 = vadd.f32 %v2078, %v2203
    %v2383 = vadd.f32 %v2079, %v2206
    %v2384 = vadd.f32 %v2080, %v2209
    %v2385 = vadd.f32 %v2081, %v2212
    %v2386 = vadd.f32 %v2082, %v2215
    %v2387 = vadd.f32 %v2083, %v2218
    %v2388 = vadd.f32 %v2084, %v2221
    %v2389 = vadd.f32 %v2085, %v2224
    %v2390 = vadd.f32 %v2086, %v2227
    %v2391 = vadd.f32 %v2087, %v2230
    %v2392 = vadd.f32 %v2088, %v2233
    %v2393 = vadd.f32 %v2089, %v2236
    %v2394 = vadd.f32 %v2090, %v2239
    %v2395 = vadd.f32 %v2091, %v2242
    %v2396 = vadd.f32 %v2092, %v2245
    %v2397 = vadd.f32 %v2093, %v2248
    %v2398 = vadd.f32 %v2094, %v2251
    %v2399 = vadd.f32 %v2095, %v2254
    %v2400 = vadd.f32 %v2096, %v2257
    %v2401 = vadd.f32 %v2097, %v2260
    %v2402 = vadd.f32 %v2098, %v2263
    %v2403 = vadd.f32 %v2099, %v2266
    %v2404 = vadd.f32 %v2100, %v2269
    %v2405 = vadd.f32 %v2101, %v2272
    %v2406 = vadd.f32 %v2102, %v2275
    %v2407 = vadd.f32 %v2103, %v2278
    %v2408 = vadd.f32 %v2104, %v2281
    %v2409 = vadd.f32 %v2105, %v2284
    %v2410 = vadd.f32 %v2106, %v2287
    %v2411 = vadd.f32 %v2107, %v2290
    %v2412 = vadd.f32 %v2108, %v2293
    %v2413 = vadd.f32 %v2109, %v2296
    %v2414 = vadd.f32 %v2110, %v2299
    %v2415 = vadd.f32 %v2111, %v2302
    %v2416 = vadd.f32 %v2112, %v2305
    %v2417 = vadd.f32 %v2113, %v2308
    %v2418 = vadd.f32 %v2114, %v2311
    %v2419 = vadd.f32 %v2115, %v2314
    %v2420 = vadd.f32 %v2116, %v2317
    %v2421 = vadd.f32 %v2117, %v2320
    %v2422 = vadd.f32 %v2118, %v2323
    %v2423 = vadd.f32 %v2119, %v2326
    %v2424 = vadd.f32 %v2120, %v2329
    %v2425 = vadd.f32 %v2121, %v2332
    %v2426 = vadd.f32 %v2122, %v2335
    %v2427 = vadd.f32 %v2123, %v2338
    %v2428 = vadd.f32 %v2124, %v2341
    %v2429 = vadd.f32 %v2125, %v2344
    %v2430 = vadd.f32 %v2126, %v2347
    %v2431 = vadd.f32 %v2127, %v2350
    %v2432 = vadd.f32 %v2128, %v2353
    %v2433 = vadd.f32 %v2129, %v2356
    %v2434 = vadd.f32 %v2130, %v2359
    %v2435 = vadd.f32 %v2131, %v2362
    %v2436 = vadd.f32 %v2132, %v2365
    %v2437 = vadd.f32 %v2133, %v2368
    %v2438 = vadd.f32 %v2134, %v2371
    %v2439 = vadd.f32 %v2135, %v2374
    %s2440 = scalar_lea.vmem %s1, 768
    %v2441 = vld [vmem:[%s2440] sm:$0xff]
    %v2442 = vld [vmem:[%s2440 + $0x8] sm:$0xff]
    %v2443 = vld [vmem:[%s2440 + $0x10] sm:$0xff]
    %v2444 = vld [vmem:[%s2440 + $0x18] sm:$0xff]
    %v2445 = vld [vmem:[%s2440 + $0x20] sm:$0xff]
    %v2446 = vld [vmem:[%s2440 + $0x28] sm:$0xff]
    %v2447 = vld [vmem:[%s2440 + $0x30] sm:$0xff]
    %v2448 = vld [vmem:[%s2440 + $0x38] sm:$0xff]
    %v2449 = vld [vmem:[%s2440 + $0x40] sm:$0xff]
    %v2450 = vld [vmem:[%s2440 + $0x48] sm:$0xff]
    %v2451 = vld [vmem:[%s2440 + $0x50] sm:$0xff]
    %v2452 = vld [vmem:[%s2440 + $0x58] sm:$0xff]
    %v2453 = vld [vmem:[%s2440 + $0x60] sm:$0xff]
    %v2454 = vld [vmem:[%s2440 + $0x68] sm:$0xff]
    %v2455 = vld [vmem:[%s2440 + $0x70] sm:$0xff]
    %v2456 = vld [vmem:[%s2440 + $0x78] sm:$0xff]
    %2457 = vmatpush.msra.mxu0 %v2456
    %2458 = vmatpush.msra.mxu0 %v2455
    %2459 = vmatpush.msra.mxu0 %v2454
    %2460 = vmatpush.msra.mxu0 %v2453
    %2461 = vmatpush.msra.mxu0 %v2452
    %2462 = vmatpush.msra.mxu0 %v2451
    %2463 = vmatpush.msra.mxu0 %v2450
    %2464 = vmatpush.msra.mxu0 %v2449
    %2465 = vmatpush.msra.mxu0 %v2448
    %2466 = vmatpush.msra.mxu0 %v2447
    %2467 = vmatpush.msra.mxu0 %v2446
    %2468 = vmatpush.msra.mxu0 %v2445
    %2469 = vmatpush.msra.mxu0 %v2444
    %2470 = vmatpush.msra.mxu0 %v2443
    %2471 = vmatpush.msra.mxu0 %v2442
    %2472 = vmatpush.msra.mxu0 %v2441
    %2473 = vmatmul.f32.gmra.mxu0 %v147
    %v2474 = vpop.f32.mrf.mxu0
    %v2475 = vadd.f32 0.0, %v2474
    %2476 = vmatmul.f32.gmra.mxu0 %v148
    %v2477 = vpop.f32.mrf.mxu0
    %v2478 = vadd.f32 0.0, %v2477
    %2479 = vmatmul.f32.gmra.mxu0 %v150
    %v2480 = vpop.f32.mrf.mxu0
    %v2481 = vadd.f32 0.0, %v2480
    %2482 = vmatmul.f32.gmra.mxu0 %v151
    %v2483 = vpop.f32.mrf.mxu0
    %v2484 = vadd.f32 0.0, %v2483
    %2485 = vmatmul.f32.gmra.mxu0 %v153
    %v2486 = vpop.f32.mrf.mxu0
    %v2487 = vadd.f32 0.0, %v2486
    %2488 = vmatmul.f32.gmra.mxu0 %v154
    %v2489 = vpop.f32.mrf.mxu0
    %v2490 = vadd.f32 0.0, %v2489
    %2491 = vmatmul.f32.gmra.mxu0 %v156
    %v2492 = vpop.f32.mrf.mxu0
    %v2493 = vadd.f32 0.0, %v2492
    %2494 = vmatmul.f32.gmra.mxu0 %v157
    %v2495 = vpop.f32.mrf.mxu0
    %v2496 = vadd.f32 0.0, %v2495
    %2497 = vmatmul.f32.gmra.mxu0 %v159
    %v2498 = vpop.f32.mrf.mxu0
    %v2499 = vadd.f32 0.0, %v2498
    %2500 = vmatmul.f32.gmra.mxu0 %v160
    %v2501 = vpop.f32.mrf.mxu0
    %v2502 = vadd.f32 0.0, %v2501
    %2503 = vmatmul.f32.gmra.mxu0 %v162
    %v2504 = vpop.f32.mrf.mxu0
    %v2505 = vadd.f32 0.0, %v2504
    %2506 = vmatmul.f32.gmra.mxu0 %v163
    %v2507 = vpop.f32.mrf.mxu0
    %v2508 = vadd.f32 0.0, %v2507
    %2509 = vmatmul.f32.gmra.mxu0 %v165
    %v2510 = vpop.f32.mrf.mxu0
    %v2511 = vadd.f32 0.0, %v2510
    %2512 = vmatmul.f32.gmra.mxu0 %v166
    %v2513 = vpop.f32.mrf.mxu0
    %v2514 = vadd.f32 0.0, %v2513
    %2515 = vmatmul.f32.gmra.mxu0 %v168
    %v2516 = vpop.f32.mrf.mxu0
    %v2517 = vadd.f32 0.0, %v2516
    %2518 = vmatmul.f32.gmra.mxu0 %v169
    %v2519 = vpop.f32.mrf.mxu0
    %v2520 = vadd.f32 0.0, %v2519
    %2521 = vmatmul.f32.gmra.mxu0 %v171
    %v2522 = vpop.f32.mrf.mxu0
    %v2523 = vadd.f32 0.0, %v2522
    %2524 = vmatmul.f32.gmra.mxu0 %v172
    %v2525 = vpop.f32.mrf.mxu0
    %v2526 = vadd.f32 0.0, %v2525
    %2527 = vmatmul.f32.gmra.mxu0 %v174
    %v2528 = vpop.f32.mrf.mxu0
    %v2529 = vadd.f32 0.0, %v2528
    %2530 = vmatmul.f32.gmra.mxu0 %v175
    %v2531 = vpop.f32.mrf.mxu0
    %v2532 = vadd.f32 0.0, %v2531
    %2533 = vmatmul.f32.gmra.mxu0 %v177
    %v2534 = vpop.f32.mrf.mxu0
    %v2535 = vadd.f32 0.0, %v2534
    %2536 = vmatmul.f32.gmra.mxu0 %v178
    %v2537 = vpop.f32.mrf.mxu0
    %v2538 = vadd.f32 0.0, %v2537
    %2539 = vmatmul.f32.gmra.mxu0 %v180
    %v2540 = vpop.f32.mrf.mxu0
    %v2541 = vadd.f32 0.0, %v2540
    %2542 = vmatmul.f32.gmra.mxu0 %v181
    %v2543 = vpop.f32.mrf.mxu0
    %v2544 = vadd.f32 0.0, %v2543
    %2545 = vmatmul.f32.gmra.mxu0 %v183
    %v2546 = vpop.f32.mrf.mxu0
    %v2547 = vadd.f32 0.0, %v2546
    %2548 = vmatmul.f32.gmra.mxu0 %v184
    %v2549 = vpop.f32.mrf.mxu0
    %v2550 = vadd.f32 0.0, %v2549
    %2551 = vmatmul.f32.gmra.mxu0 %v186
    %v2552 = vpop.f32.mrf.mxu0
    %v2553 = vadd.f32 0.0, %v2552
    %2554 = vmatmul.f32.gmra.mxu0 %v187
    %v2555 = vpop.f32.mrf.mxu0
    %v2556 = vadd.f32 0.0, %v2555
    %2557 = vmatmul.f32.gmra.mxu0 %v189
    %v2558 = vpop.f32.mrf.mxu0
    %v2559 = vadd.f32 0.0, %v2558
    %2560 = vmatmul.f32.gmra.mxu0 %v190
    %v2561 = vpop.f32.mrf.mxu0
    %v2562 = vadd.f32 0.0, %v2561
    %2563 = vmatmul.f32.gmra.mxu0 %v192
    %v2564 = vpop.f32.mrf.mxu0
    %v2565 = vadd.f32 0.0, %v2564
    %2566 = vmatmul.f32.gmra.mxu0 %v193
    %v2567 = vpop.f32.mrf.mxu0
    %v2568 = vadd.f32 0.0, %v2567
    %2569 = vmatmul.f32.gmra.mxu0 %v201
    %v2570 = vpop.f32.mrf.mxu0
    %v2571 = vadd.f32 0.0, %v2570
    %2572 = vmatmul.f32.gmra.mxu0 %v202
    %v2573 = vpop.f32.mrf.mxu0
    %v2574 = vadd.f32 0.0, %v2573
    %2575 = vmatmul.f32.gmra.mxu0 %v204
    %v2576 = vpop.f32.mrf.mxu0
    %v2577 = vadd.f32 0.0, %v2576
    %2578 = vmatmul.f32.gmra.mxu0 %v205
    %v2579 = vpop.f32.mrf.mxu0
    %v2580 = vadd.f32 0.0, %v2579
    %2581 = vmatmul.f32.gmra.mxu0 %v207
    %v2582 = vpop.f32.mrf.mxu0
    %v2583 = vadd.f32 0.0, %v2582
    %2584 = vmatmul.f32.gmra.mxu0 %v208
    %v2585 = vpop.f32.mrf.mxu0
    %v2586 = vadd.f32 0.0, %v2585
    %2587 = vmatmul.f32.gmra.mxu0 %v210
    %v2588 = vpop.f32.mrf.mxu0
    %v2589 = vadd.f32 0.0, %v2588
    %2590 = vmatmul.f32.gmra.mxu0 %v211
    %v2591 = vpop.f32.mrf.mxu0
    %v2592 = vadd.f32 0.0, %v2591
    %2593 = vmatmul.f32.gmra.mxu0 %v213
    %v2594 = vpop.f32.mrf.mxu0
    %v2595 = vadd.f32 0.0, %v2594
    %2596 = vmatmul.f32.gmra.mxu0 %v214
    %v2597 = vpop.f32.mrf.mxu0
    %v2598 = vadd.f32 0.0, %v2597
    %2599 = vmatmul.f32.gmra.mxu0 %v216
    %v2600 = vpop.f32.mrf.mxu0
    %v2601 = vadd.f32 0.0, %v2600
    %2602 = vmatmul.f32.gmra.mxu0 %v217
    %v2603 = vpop.f32.mrf.mxu0
    %v2604 = vadd.f32 0.0, %v2603
    %2605 = vmatmul.f32.gmra.mxu0 %v219
    %v2606 = vpop.f32.mrf.mxu0
    %v2607 = vadd.f32 0.0, %v2606
    %2608 = vmatmul.f32.gmra.mxu0 %v220
    %v2609 = vpop.f32.mrf.mxu0
    %v2610 = vadd.f32 0.0, %v2609
    %2611 = vmatmul.f32.gmra.mxu0 %v222
    %v2612 = vpop.f32.mrf.mxu0
    %v2613 = vadd.f32 0.0, %v2612
    %2614 = vmatmul.f32.gmra.mxu0 %v223
    %v2615 = vpop.f32.mrf.mxu0
    %v2616 = vadd.f32 0.0, %v2615
    %2617 = vmatmul.f32.gmra.mxu0 %v225
    %v2618 = vpop.f32.mrf.mxu0
    %v2619 = vadd.f32 0.0, %v2618
    %2620 = vmatmul.f32.gmra.mxu0 %v226
    %v2621 = vpop.f32.mrf.mxu0
    %v2622 = vadd.f32 0.0, %v2621
    %2623 = vmatmul.f32.gmra.mxu0 %v228
    %v2624 = vpop.f32.mrf.mxu0
    %v2625 = vadd.f32 0.0, %v2624
    %2626 = vmatmul.f32.gmra.mxu0 %v229
    %v2627 = vpop.f32.mrf.mxu0
    %v2628 = vadd.f32 0.0, %v2627
    %2629 = vmatmul.f32.gmra.mxu0 %v231
    %v2630 = vpop.f32.mrf.mxu0
    %v2631 = vadd.f32 0.0, %v2630
    %2632 = vmatmul.f32.gmra.mxu0 %v232
    %v2633 = vpop.f32.mrf.mxu0
    %v2634 = vadd.f32 0.0, %v2633
    %2635 = vmatmul.f32.gmra.mxu0 %v234
    %v2636 = vpop.f32.mrf.mxu0
    %v2637 = vadd.f32 0.0, %v2636
    %2638 = vmatmul.f32.gmra.mxu0 %v235
    %v2639 = vpop.f32.mrf.mxu0
    %v2640 = vadd.f32 0.0, %v2639
    %2641 = vmatmul.f32.gmra.mxu0 %v237
    %v2642 = vpop.f32.mrf.mxu0
    %v2643 = vadd.f32 0.0, %v2642
    %2644 = vmatmul.f32.gmra.mxu0 %v238
    %v2645 = vpop.f32.mrf.mxu0
    %v2646 = vadd.f32 0.0, %v2645
    %2647 = vmatmul.f32.gmra.mxu0 %v240
    %v2648 = vpop.f32.mrf.mxu0
    %v2649 = vadd.f32 0.0, %v2648
    %2650 = vmatmul.f32.gmra.mxu0 %v241
    %v2651 = vpop.f32.mrf.mxu0
    %v2652 = vadd.f32 0.0, %v2651
    %2653 = vmatmul.f32.gmra.mxu0 %v243
    %v2654 = vpop.f32.mrf.mxu0
    %v2655 = vadd.f32 0.0, %v2654
    %2656 = vmatmul.f32.gmra.mxu0 %v244
    %v2657 = vpop.f32.mrf.mxu0
    %v2658 = vadd.f32 0.0, %v2657
    %2659 = vmatmul.f32.gmra.mxu0 %v246
    %v2660 = vpop.f32.mrf.mxu0
    %v2661 = vadd.f32 0.0, %v2660
    %2662 = vmatmul.f32.gmra.mxu0 %v247
    %v2663 = vpop.f32.mrf.mxu0
    %v2664 = vadd.f32 0.0, %v2663
    %2665 = vdwg.mxu0
    %v2666 = vadd.f32 %v2376, %v2475
    %v2667 = vadd.f32 %v2377, %v2478
    %v2668 = vadd.f32 %v2378, %v2481
    %v2669 = vadd.f32 %v2379, %v2484
    %v2670 = vadd.f32 %v2380, %v2487
    %v2671 = vadd.f32 %v2381, %v2490
    %v2672 = vadd.f32 %v2382, %v2493
    %v2673 = vadd.f32 %v2383, %v2496
    %v2674 = vadd.f32 %v2384, %v2499
    %v2675 = vadd.f32 %v2385, %v2502
    %v2676 = vadd.f32 %v2386, %v2505
    %v2677 = vadd.f32 %v2387, %v2508
    %v2678 = vadd.f32 %v2388, %v2511
    %v2679 = vadd.f32 %v2389, %v2514
    %v2680 = vadd.f32 %v2390, %v2517
    %v2681 = vadd.f32 %v2391, %v2520
    %v2682 = vadd.f32 %v2392, %v2523
    %v2683 = vadd.f32 %v2393, %v2526
    %v2684 = vadd.f32 %v2394, %v2529
    %v2685 = vadd.f32 %v2395, %v2532
    %v2686 = vadd.f32 %v2396, %v2535
    %v2687 = vadd.f32 %v2397, %v2538
    %v2688 = vadd.f32 %v2398, %v2541
    %v2689 = vadd.f32 %v2399, %v2544
    %v2690 = vadd.f32 %v2400, %v2547
    %v2691 = vadd.f32 %v2401, %v2550
    %v2692 = vadd.f32 %v2402, %v2553
    %v2693 = vadd.f32 %v2403, %v2556
    %v2694 = vadd.f32 %v2404, %v2559
    %v2695 = vadd.f32 %v2405, %v2562
    %v2696 = vadd.f32 %v2406, %v2565
    %v2697 = vadd.f32 %v2407, %v2568
    %v2698 = vadd.f32 %v2408, %v2571
    %v2699 = vadd.f32 %v2409, %v2574
    %v2700 = vadd.f32 %v2410, %v2577
    %v2701 = vadd.f32 %v2411, %v2580
    %v2702 = vadd.f32 %v2412, %v2583
    %v2703 = vadd.f32 %v2413, %v2586
    %v2704 = vadd.f32 %v2414, %v2589
    %v2705 = vadd.f32 %v2415, %v2592
    %v2706 = vadd.f32 %v2416, %v2595
    %v2707 = vadd.f32 %v2417, %v2598
    %v2708 = vadd.f32 %v2418, %v2601
    %v2709 = vadd.f32 %v2419, %v2604
    %v2710 = vadd.f32 %v2420, %v2607
    %v2711 = vadd.f32 %v2421, %v2610
    %v2712 = vadd.f32 %v2422, %v2613
    %v2713 = vadd.f32 %v2423, %v2616
    %v2714 = vadd.f32 %v2424, %v2619
    %v2715 = vadd.f32 %v2425, %v2622
    %v2716 = vadd.f32 %v2426, %v2625
    %v2717 = vadd.f32 %v2427, %v2628
    %v2718 = vadd.f32 %v2428, %v2631
    %v2719 = vadd.f32 %v2429, %v2634
    %v2720 = vadd.f32 %v2430, %v2637
    %v2721 = vadd.f32 %v2431, %v2640
    %v2722 = vadd.f32 %v2432, %v2643
    %v2723 = vadd.f32 %v2433, %v2646
    %v2724 = vadd.f32 %v2434, %v2649
    %v2725 = vadd.f32 %v2435, %v2652
    %v2726 = vadd.f32 %v2436, %v2655
    %v2727 = vadd.f32 %v2437, %v2658
    %v2728 = vadd.f32 %v2438, %v2661
    %v2729 = vadd.f32 %v2439, %v2664
    %v2736 = vrot.slane %v192, 1
    %v2737 = vrot.slane %v193, 1
    %v2738 = vsel %vm361, %v2736, %v2737
    %v2739 = vrot.slane %v194, 1
    %v2740 = vsel %vm361, %v2737, %v2739
    %v2741 = vrot.slane %v246, 1
    %v2742 = vrot.slane %v247, 1
    %v2743 = vsel %vm361, %v2741, %v2742
    %v2744 = vrot.slane %v248, 1
    %v2745 = vsel %vm361, %v2742, %v2744
    %s2750 = scalar_lea.vmem %s1, 896
    %v2751 = vld [vmem:[%s2750] sm:$0xff]
    %v2752 = vld [vmem:[%s2750 + $0x8] sm:$0xff]
    %v2753 = vld [vmem:[%s2750 + $0x10] sm:$0xff]
    %v2754 = vld [vmem:[%s2750 + $0x18] sm:$0xff]
    %v2755 = vld [vmem:[%s2750 + $0x20] sm:$0xff]
    %v2756 = vld [vmem:[%s2750 + $0x28] sm:$0xff]
    %v2757 = vld [vmem:[%s2750 + $0x30] sm:$0xff]
    %v2758 = vld [vmem:[%s2750 + $0x38] sm:$0xff]
    %v2759 = vld [vmem:[%s2750 + $0x40] sm:$0xff]
    %v2760 = vld [vmem:[%s2750 + $0x48] sm:$0xff]
    %v2761 = vld [vmem:[%s2750 + $0x50] sm:$0xff]
    %v2762 = vld [vmem:[%s2750 + $0x58] sm:$0xff]
    %v2763 = vld [vmem:[%s2750 + $0x60] sm:$0xff]
    %v2764 = vld [vmem:[%s2750 + $0x68] sm:$0xff]
    %v2765 = vld [vmem:[%s2750 + $0x70] sm:$0xff]
    %v2766 = vld [vmem:[%s2750 + $0x78] sm:$0xff]
    %2767 = vmatpush.msra.mxu0 %v2766
    %2768 = vmatpush.msra.mxu0 %v2765
    %2769 = vmatpush.msra.mxu0 %v2764
    %2770 = vmatpush.msra.mxu0 %v2763
    %2771 = vmatpush.msra.mxu0 %v2762
    %2772 = vmatpush.msra.mxu0 %v2761
    %2773 = vmatpush.msra.mxu0 %v2760
    %2774 = vmatpush.msra.mxu0 %v2759
    %2775 = vmatpush.msra.mxu0 %v2758
    %2776 = vmatpush.msra.mxu0 %v2757
    %2777 = vmatpush.msra.mxu0 %v2756
    %2778 = vmatpush.msra.mxu0 %v2755
    %2779 = vmatpush.msra.mxu0 %v2754
    %2780 = vmatpush.msra.mxu0 %v2753
    %2781 = vmatpush.msra.mxu0 %v2752
    %2782 = vmatpush.msra.mxu0 %v2751
    %2783 = vmatmul.f32.gmra.mxu0 %v374
    %v2784 = vpop.f32.mrf.mxu0
    %v2785 = vadd.f32 0.0, %v2784
    %2786 = vmatmul.f32.gmra.mxu0 %v376
    %v2787 = vpop.f32.mrf.mxu0
    %v2788 = vadd.f32 0.0, %v2787
    %2789 = vmatmul.f32.gmra.mxu0 %v379
    %v2790 = vpop.f32.mrf.mxu0
    %v2791 = vadd.f32 0.0, %v2790
    %2792 = vmatmul.f32.gmra.mxu0 %v381
    %v2793 = vpop.f32.mrf.mxu0
    %v2794 = vadd.f32 0.0, %v2793
    %2795 = vmatmul.f32.gmra.mxu0 %v384
    %v2796 = vpop.f32.mrf.mxu0
    %v2797 = vadd.f32 0.0, %v2796
    %2798 = vmatmul.f32.gmra.mxu0 %v386
    %v2799 = vpop.f32.mrf.mxu0
    %v2800 = vadd.f32 0.0, %v2799
    %2801 = vmatmul.f32.gmra.mxu0 %v389
    %v2802 = vpop.f32.mrf.mxu0
    %v2803 = vadd.f32 0.0, %v2802
    %2804 = vmatmul.f32.gmra.mxu0 %v391
    %v2805 = vpop.f32.mrf.mxu0
    %v2806 = vadd.f32 0.0, %v2805
    %2807 = vmatmul.f32.gmra.mxu0 %v394
    %v2808 = vpop.f32.mrf.mxu0
    %v2809 = vadd.f32 0.0, %v2808
    %2810 = vmatmul.f32.gmra.mxu0 %v396
    %v2811 = vpop.f32.mrf.mxu0
    %v2812 = vadd.f32 0.0, %v2811
    %2813 = vmatmul.f32.gmra.mxu0 %v399
    %v2814 = vpop.f32.mrf.mxu0
    %v2815 = vadd.f32 0.0, %v2814
    %2816 = vmatmul.f32.gmra.mxu0 %v401
    %v2817 = vpop.f32.mrf.mxu0
    %v2818 = vadd.f32 0.0, %v2817
    %2819 = vmatmul.f32.gmra.mxu0 %v404
    %v2820 = vpop.f32.mrf.mxu0
    %v2821 = vadd.f32 0.0, %v2820
    %2822 = vmatmul.f32.gmra.mxu0 %v406
    %v2823 = vpop.f32.mrf.mxu0
    %v2824 = vadd.f32 0.0, %v2823
    %2825 = vmatmul.f32.gmra.mxu0 %v409
    %v2826 = vpop.f32.mrf.mxu0
    %v2827 = vadd.f32 0.0, %v2826
    %2828 = vmatmul.f32.gmra.mxu0 %v411
    %v2829 = vpop.f32.mrf.mxu0
    %v2830 = vadd.f32 0.0, %v2829
    %2831 = vmatmul.f32.gmra.mxu0 %v414
    %v2832 = vpop.f32.mrf.mxu0
    %v2833 = vadd.f32 0.0, %v2832
    %2834 = vmatmul.f32.gmra.mxu0 %v416
    %v2835 = vpop.f32.mrf.mxu0
    %v2836 = vadd.f32 0.0, %v2835
    %2837 = vmatmul.f32.gmra.mxu0 %v419
    %v2838 = vpop.f32.mrf.mxu0
    %v2839 = vadd.f32 0.0, %v2838
    %2840 = vmatmul.f32.gmra.mxu0 %v421
    %v2841 = vpop.f32.mrf.mxu0
    %v2842 = vadd.f32 0.0, %v2841
    %2843 = vmatmul.f32.gmra.mxu0 %v424
    %v2844 = vpop.f32.mrf.mxu0
    %v2845 = vadd.f32 0.0, %v2844
    %2846 = vmatmul.f32.gmra.mxu0 %v426
    %v2847 = vpop.f32.mrf.mxu0
    %v2848 = vadd.f32 0.0, %v2847
    %2849 = vmatmul.f32.gmra.mxu0 %v429
    %v2850 = vpop.f32.mrf.mxu0
    %v2851 = vadd.f32 0.0, %v2850
    %2852 = vmatmul.f32.gmra.mxu0 %v431
    %v2853 = vpop.f32.mrf.mxu0
    %v2854 = vadd.f32 0.0, %v2853
    %2855 = vmatmul.f32.gmra.mxu0 %v434
    %v2856 = vpop.f32.mrf.mxu0
    %v2857 = vadd.f32 0.0, %v2856
    %2858 = vmatmul.f32.gmra.mxu0 %v436
    %v2859 = vpop.f32.mrf.mxu0
    %v2860 = vadd.f32 0.0, %v2859
    %2861 = vmatmul.f32.gmra.mxu0 %v439
    %v2862 = vpop.f32.mrf.mxu0
    %v2863 = vadd.f32 0.0, %v2862
    %2864 = vmatmul.f32.gmra.mxu0 %v441
    %v2865 = vpop.f32.mrf.mxu0
    %v2866 = vadd.f32 0.0, %v2865
    %2867 = vmatmul.f32.gmra.mxu0 %v1834
    %v2868 = vpop.f32.mrf.mxu0
    %v2869 = vadd.f32 0.0, %v2868
    %2870 = vmatmul.f32.gmra.mxu0 %v1836
    %v2871 = vpop.f32.mrf.mxu0
    %v2872 = vadd.f32 0.0, %v2871
    %2873 = vmatmul.f32.gmra.mxu0 %v2738
    %v2874 = vpop.f32.mrf.mxu0
    %v2875 = vadd.f32 0.0, %v2874
    %2876 = vmatmul.f32.gmra.mxu0 %v2740
    %v2877 = vpop.f32.mrf.mxu0
    %v2878 = vadd.f32 0.0, %v2877
    %2879 = vmatmul.f32.gmra.mxu0 %v454
    %v2880 = vpop.f32.mrf.mxu0
    %v2881 = vadd.f32 0.0, %v2880
    %2882 = vmatmul.f32.gmra.mxu0 %v456
    %v2883 = vpop.f32.mrf.mxu0
    %v2884 = vadd.f32 0.0, %v2883
    %2885 = vmatmul.f32.gmra.mxu0 %v459
    %v2886 = vpop.f32.mrf.mxu0
    %v2887 = vadd.f32 0.0, %v2886
    %2888 = vmatmul.f32.gmra.mxu0 %v461
    %v2889 = vpop.f32.mrf.mxu0
    %v2890 = vadd.f32 0.0, %v2889
    %2891 = vmatmul.f32.gmra.mxu0 %v464
    %v2892 = vpop.f32.mrf.mxu0
    %v2893 = vadd.f32 0.0, %v2892
    %2894 = vmatmul.f32.gmra.mxu0 %v466
    %v2895 = vpop.f32.mrf.mxu0
    %v2896 = vadd.f32 0.0, %v2895
    %2897 = vmatmul.f32.gmra.mxu0 %v469
    %v2898 = vpop.f32.mrf.mxu0
    %v2899 = vadd.f32 0.0, %v2898
    %2900 = vmatmul.f32.gmra.mxu0 %v471
    %v2901 = vpop.f32.mrf.mxu0
    %v2902 = vadd.f32 0.0, %v2901
    %2903 = vmatmul.f32.gmra.mxu0 %v474
    %v2904 = vpop.f32.mrf.mxu0
    %v2905 = vadd.f32 0.0, %v2904
    %2906 = vmatmul.f32.gmra.mxu0 %v476
    %v2907 = vpop.f32.mrf.mxu0
    %v2908 = vadd.f32 0.0, %v2907
    %2909 = vmatmul.f32.gmra.mxu0 %v479
    %v2910 = vpop.f32.mrf.mxu0
    %v2911 = vadd.f32 0.0, %v2910
    %2912 = vmatmul.f32.gmra.mxu0 %v481
    %v2913 = vpop.f32.mrf.mxu0
    %v2914 = vadd.f32 0.0, %v2913
    %2915 = vmatmul.f32.gmra.mxu0 %v484
    %v2916 = vpop.f32.mrf.mxu0
    %v2917 = vadd.f32 0.0, %v2916
    %2918 = vmatmul.f32.gmra.mxu0 %v486
    %v2919 = vpop.f32.mrf.mxu0
    %v2920 = vadd.f32 0.0, %v2919
    %2921 = vmatmul.f32.gmra.mxu0 %v489
    %v2922 = vpop.f32.mrf.mxu0
    %v2923 = vadd.f32 0.0, %v2922
    %2924 = vmatmul.f32.gmra.mxu0 %v491
    %v2925 = vpop.f32.mrf.mxu0
    %v2926 = vadd.f32 0.0, %v2925
    %2927 = vmatmul.f32.gmra.mxu0 %v494
    %v2928 = vpop.f32.mrf.mxu0
    %v2929 = vadd.f32 0.0, %v2928
    %2930 = vmatmul.f32.gmra.mxu0 %v496
    %v2931 = vpop.f32.mrf.mxu0
    %v2932 = vadd.f32 0.0, %v2931
    %2933 = vmatmul.f32.gmra.mxu0 %v499
    %v2934 = vpop.f32.mrf.mxu0
    %v2935 = vadd.f32 0.0, %v2934
    %2936 = vmatmul.f32.gmra.mxu0 %v501
    %v2937 = vpop.f32.mrf.mxu0
    %v2938 = vadd.f32 0.0, %v2937
    %2939 = vmatmul.f32.gmra.mxu0 %v504
    %v2940 = vpop.f32.mrf.mxu0
    %v2941 = vadd.f32 0.0, %v2940
    %2942 = vmatmul.f32.gmra.mxu0 %v506
    %v2943 = vpop.f32.mrf.mxu0
    %v2944 = vadd.f32 0.0, %v2943
    %2945 = vmatmul.f32.gmra.mxu0 %v509
    %v2946 = vpop.f32.mrf.mxu0
    %v2947 = vadd.f32 0.0, %v2946
    %2948 = vmatmul.f32.gmra.mxu0 %v511
    %v2949 = vpop.f32.mrf.mxu0
    %v2950 = vadd.f32 0.0, %v2949
    %2951 = vmatmul.f32.gmra.mxu0 %v514
    %v2952 = vpop.f32.mrf.mxu0
    %v2953 = vadd.f32 0.0, %v2952
    %2954 = vmatmul.f32.gmra.mxu0 %v516
    %v2955 = vpop.f32.mrf.mxu0
    %v2956 = vadd.f32 0.0, %v2955
    %2957 = vmatmul.f32.gmra.mxu0 %v519
    %v2958 = vpop.f32.mrf.mxu0
    %v2959 = vadd.f32 0.0, %v2958
    %2960 = vmatmul.f32.gmra.mxu0 %v521
    %v2961 = vpop.f32.mrf.mxu0
    %v2962 = vadd.f32 0.0, %v2961
    %2963 = vmatmul.f32.gmra.mxu0 %v1839
    %v2964 = vpop.f32.mrf.mxu0
    %v2965 = vadd.f32 0.0, %v2964
    %2966 = vmatmul.f32.gmra.mxu0 %v1841
    %v2967 = vpop.f32.mrf.mxu0
    %v2968 = vadd.f32 0.0, %v2967
    %2969 = vmatmul.f32.gmra.mxu0 %v2743
    %v2970 = vpop.f32.mrf.mxu0
    %v2971 = vadd.f32 0.0, %v2970
    %2972 = vmatmul.f32.gmra.mxu0 %v2745
    %v2973 = vpop.f32.mrf.mxu0
    %v2974 = vadd.f32 0.0, %v2973
    %2975 = vdwg.mxu0
    %v2976 = vadd.f32 %v2666, %v2785
    %v2977 = vadd.f32 %v2667, %v2788
    %v2978 = vadd.f32 %v2668, %v2791
    %v2979 = vadd.f32 %v2669, %v2794
    %v2980 = vadd.f32 %v2670, %v2797
    %v2981 = vadd.f32 %v2671, %v2800
    %v2982 = vadd.f32 %v2672, %v2803
    %v2983 = vadd.f32 %v2673, %v2806
    %v2984 = vadd.f32 %v2674, %v2809
    %v2985 = vadd.f32 %v2675, %v2812
    %v2986 = vadd.f32 %v2676, %v2815
    %v2987 = vadd.f32 %v2677, %v2818
    %v2988 = vadd.f32 %v2678, %v2821
    %v2989 = vadd.f32 %v2679, %v2824
    %v2990 = vadd.f32 %v2680, %v2827
    %v2991 = vadd.f32 %v2681, %v2830
    %v2992 = vadd.f32 %v2682, %v2833
    %v2993 = vadd.f32 %v2683, %v2836
    %v2994 = vadd.f32 %v2684, %v2839
    %v2995 = vadd.f32 %v2685, %v2842
    %v2996 = vadd.f32 %v2686, %v2845
    %v2997 = vadd.f32 %v2687, %v2848
    %v2998 = vadd.f32 %v2688, %v2851
    %v2999 = vadd.f32 %v2689, %v2854
    %v3000 = vadd.f32 %v2690, %v2857
    %v3001 = vadd.f32 %v2691, %v2860
    %v3002 = vadd.f32 %v2692, %v2863
    %v3003 = vadd.f32 %v2693, %v2866
    %v3004 = vadd.f32 %v2694, %v2869
    %v3005 = vadd.f32 %v2695, %v2872
    %v3006 = vadd.f32 %v2696, %v2875
    %v3007 = vadd.f32 %v2697, %v2878
    %v3008 = vadd.f32 %v2698, %v2881
    %v3009 = vadd.f32 %v2699, %v2884
    %v3010 = vadd.f32 %v2700, %v2887
    %v3011 = vadd.f32 %v2701, %v2890
    %v3012 = vadd.f32 %v2702, %v2893
    %v3013 = vadd.f32 %v2703, %v2896
    %v3014 = vadd.f32 %v2704, %v2899
    %v3015 = vadd.f32 %v2705, %v2902
    %v3016 = vadd.f32 %v2706, %v2905
    %v3017 = vadd.f32 %v2707, %v2908
    %v3018 = vadd.f32 %v2708, %v2911
    %v3019 = vadd.f32 %v2709, %v2914
    %v3020 = vadd.f32 %v2710, %v2917
    %v3021 = vadd.f32 %v2711, %v2920
    %v3022 = vadd.f32 %v2712, %v2923
    %v3023 = vadd.f32 %v2713, %v2926
    %v3024 = vadd.f32 %v2714, %v2929
    %v3025 = vadd.f32 %v2715, %v2932
    %v3026 = vadd.f32 %v2716, %v2935
    %v3027 = vadd.f32 %v2717, %v2938
    %v3028 = vadd.f32 %v2718, %v2941
    %v3029 = vadd.f32 %v2719, %v2944
    %v3030 = vadd.f32 %v2720, %v2947
    %v3031 = vadd.f32 %v2721, %v2950
    %v3032 = vadd.f32 %v2722, %v2953
    %v3033 = vadd.f32 %v2723, %v2956
    %v3034 = vadd.f32 %v2724, %v2959
    %v3035 = vadd.f32 %v2725, %v2962
    %v3036 = vadd.f32 %v2726, %v2965
    %v3037 = vadd.f32 %v2727, %v2968
    %v3038 = vadd.f32 %v2728, %v2971
    %v3039 = vadd.f32 %v2729, %v2974
    %v3040 = vrot.slane %v192, 2
    %v3041 = vrot.slane %v193, 2
    %v3042 = vsel %vm1021, %v3040, %v3041
    %v3043 = vrot.slane %v194, 2
    %v3044 = vsel %vm1021, %v3041, %v3043
    %v3045 = vrot.slane %v246, 2
    %v3046 = vrot.slane %v247, 2
    %v3047 = vsel %vm1021, %v3045, %v3046
    %v3048 = vrot.slane %v248, 2
    %v3049 = vsel %vm1021, %v3046, %v3048
    %s3054 = scalar_lea.vmem %s1, 1024
    %v3055 = vld [vmem:[%s3054] sm:$0xff]
    %v3056 = vld [vmem:[%s3054 + $0x8] sm:$0xff]
    %v3057 = vld [vmem:[%s3054 + $0x10] sm:$0xff]
    %v3058 = vld [vmem:[%s3054 + $0x18] sm:$0xff]
    %v3059 = vld [vmem:[%s3054 + $0x20] sm:$0xff]
    %v3060 = vld [vmem:[%s3054 + $0x28] sm:$0xff]
    %v3061 = vld [vmem:[%s3054 + $0x30] sm:$0xff]
    %v3062 = vld [vmem:[%s3054 + $0x38] sm:$0xff]
    %v3063 = vld [vmem:[%s3054 + $0x40] sm:$0xff]
    %v3064 = vld [vmem:[%s3054 + $0x48] sm:$0xff]
    %v3065 = vld [vmem:[%s3054 + $0x50] sm:$0xff]
    %v3066 = vld [vmem:[%s3054 + $0x58] sm:$0xff]
    %v3067 = vld [vmem:[%s3054 + $0x60] sm:$0xff]
    %v3068 = vld [vmem:[%s3054 + $0x68] sm:$0xff]
    %v3069 = vld [vmem:[%s3054 + $0x70] sm:$0xff]
    %v3070 = vld [vmem:[%s3054 + $0x78] sm:$0xff]
    %3071 = vmatpush.msra.mxu0 %v3070
    %3072 = vmatpush.msra.mxu0 %v3069
    %3073 = vmatpush.msra.mxu0 %v3068
    %3074 = vmatpush.msra.mxu0 %v3067
    %3075 = vmatpush.msra.mxu0 %v3066
    %3076 = vmatpush.msra.mxu0 %v3065
    %3077 = vmatpush.msra.mxu0 %v3064
    %3078 = vmatpush.msra.mxu0 %v3063
    %3079 = vmatpush.msra.mxu0 %v3062
    %3080 = vmatpush.msra.mxu0 %v3061
    %3081 = vmatpush.msra.mxu0 %v3060
    %3082 = vmatpush.msra.mxu0 %v3059
    %3083 = vmatpush.msra.mxu0 %v3058
    %3084 = vmatpush.msra.mxu0 %v3057
    %3085 = vmatpush.msra.mxu0 %v3056
    %3086 = vmatpush.msra.mxu0 %v3055
    %3087 = vmatmul.f32.gmra.mxu0 %v1034
    %v3088 = vpop.f32.mrf.mxu0
    %v3089 = vadd.f32 0.0, %v3088
    %3090 = vmatmul.f32.gmra.mxu0 %v1036
    %v3091 = vpop.f32.mrf.mxu0
    %v3092 = vadd.f32 0.0, %v3091
    %3093 = vmatmul.f32.gmra.mxu0 %v1039
    %v3094 = vpop.f32.mrf.mxu0
    %v3095 = vadd.f32 0.0, %v3094
    %3096 = vmatmul.f32.gmra.mxu0 %v1041
    %v3097 = vpop.f32.mrf.mxu0
    %v3098 = vadd.f32 0.0, %v3097
    %3099 = vmatmul.f32.gmra.mxu0 %v1044
    %v3100 = vpop.f32.mrf.mxu0
    %v3101 = vadd.f32 0.0, %v3100
    %3102 = vmatmul.f32.gmra.mxu0 %v1046
    %v3103 = vpop.f32.mrf.mxu0
    %v3104 = vadd.f32 0.0, %v3103
    %3105 = vmatmul.f32.gmra.mxu0 %v1049
    %v3106 = vpop.f32.mrf.mxu0
    %v3107 = vadd.f32 0.0, %v3106
    %3108 = vmatmul.f32.gmra.mxu0 %v1051
    %v3109 = vpop.f32.mrf.mxu0
    %v3110 = vadd.f32 0.0, %v3109
    %3111 = vmatmul.f32.gmra.mxu0 %v1054
    %v3112 = vpop.f32.mrf.mxu0
    %v3113 = vadd.f32 0.0, %v3112
    %3114 = vmatmul.f32.gmra.mxu0 %v1056
    %v3115 = vpop.f32.mrf.mxu0
    %v3116 = vadd.f32 0.0, %v3115
    %3117 = vmatmul.f32.gmra.mxu0 %v1059
    %v3118 = vpop.f32.mrf.mxu0
    %v3119 = vadd.f32 0.0, %v3118
    %3120 = vmatmul.f32.gmra.mxu0 %v1061
    %v3121 = vpop.f32.mrf.mxu0
    %v3122 = vadd.f32 0.0, %v3121
    %3123 = vmatmul.f32.gmra.mxu0 %v1064
    %v3124 = vpop.f32.mrf.mxu0
    %v3125 = vadd.f32 0.0, %v3124
    %3126 = vmatmul.f32.gmra.mxu0 %v1066
    %v3127 = vpop.f32.mrf.mxu0
    %v3128 = vadd.f32 0.0, %v3127
    %3129 = vmatmul.f32.gmra.mxu0 %v1069
    %v3130 = vpop.f32.mrf.mxu0
    %v3131 = vadd.f32 0.0, %v3130
    %3132 = vmatmul.f32.gmra.mxu0 %v1071
    %v3133 = vpop.f32.mrf.mxu0
    %v3134 = vadd.f32 0.0, %v3133
    %3135 = vmatmul.f32.gmra.mxu0 %v1074
    %v3136 = vpop.f32.mrf.mxu0
    %v3137 = vadd.f32 0.0, %v3136
    %3138 = vmatmul.f32.gmra.mxu0 %v1076
    %v3139 = vpop.f32.mrf.mxu0
    %v3140 = vadd.f32 0.0, %v3139
    %3141 = vmatmul.f32.gmra.mxu0 %v1079
    %v3142 = vpop.f32.mrf.mxu0
    %v3143 = vadd.f32 0.0, %v3142
    %3144 = vmatmul.f32.gmra.mxu0 %v1081
    %v3145 = vpop.f32.mrf.mxu0
    %v3146 = vadd.f32 0.0, %v3145
    %3147 = vmatmul.f32.gmra.mxu0 %v1084
    %v3148 = vpop.f32.mrf.mxu0
    %v3149 = vadd.f32 0.0, %v3148
    %3150 = vmatmul.f32.gmra.mxu0 %v1086
    %v3151 = vpop.f32.mrf.mxu0
    %v3152 = vadd.f32 0.0, %v3151
    %3153 = vmatmul.f32.gmra.mxu0 %v1089
    %v3154 = vpop.f32.mrf.mxu0
    %v3155 = vadd.f32 0.0, %v3154
    %3156 = vmatmul.f32.gmra.mxu0 %v1091
    %v3157 = vpop.f32.mrf.mxu0
    %v3158 = vadd.f32 0.0, %v3157
    %3159 = vmatmul.f32.gmra.mxu0 %v1094
    %v3160 = vpop.f32.mrf.mxu0
    %v3161 = vadd.f32 0.0, %v3160
    %3162 = vmatmul.f32.gmra.mxu0 %v1096
    %v3163 = vpop.f32.mrf.mxu0
    %v3164 = vadd.f32 0.0, %v3163
    %3165 = vmatmul.f32.gmra.mxu0 %v1099
    %v3166 = vpop.f32.mrf.mxu0
    %v3167 = vadd.f32 0.0, %v3166
    %3168 = vmatmul.f32.gmra.mxu0 %v1101
    %v3169 = vpop.f32.mrf.mxu0
    %v3170 = vadd.f32 0.0, %v3169
    %3171 = vmatmul.f32.gmra.mxu0 %v2138
    %v3172 = vpop.f32.mrf.mxu0
    %v3173 = vadd.f32 0.0, %v3172
    %3174 = vmatmul.f32.gmra.mxu0 %v2140
    %v3175 = vpop.f32.mrf.mxu0
    %v3176 = vadd.f32 0.0, %v3175
    %3177 = vmatmul.f32.gmra.mxu0 %v3042
    %v3178 = vpop.f32.mrf.mxu0
    %v3179 = vadd.f32 0.0, %v3178
    %3180 = vmatmul.f32.gmra.mxu0 %v3044
    %v3181 = vpop.f32.mrf.mxu0
    %v3182 = vadd.f32 0.0, %v3181
    %3183 = vmatmul.f32.gmra.mxu0 %v1114
    %v3184 = vpop.f32.mrf.mxu0
    %v3185 = vadd.f32 0.0, %v3184
    %3186 = vmatmul.f32.gmra.mxu0 %v1116
    %v3187 = vpop.f32.mrf.mxu0
    %v3188 = vadd.f32 0.0, %v3187
    %3189 = vmatmul.f32.gmra.mxu0 %v1119
    %v3190 = vpop.f32.mrf.mxu0
    %v3191 = vadd.f32 0.0, %v3190
    %3192 = vmatmul.f32.gmra.mxu0 %v1121
    %v3193 = vpop.f32.mrf.mxu0
    %v3194 = vadd.f32 0.0, %v3193
    %3195 = vmatmul.f32.gmra.mxu0 %v1124
    %v3196 = vpop.f32.mrf.mxu0
    %v3197 = vadd.f32 0.0, %v3196
    %3198 = vmatmul.f32.gmra.mxu0 %v1126
    %v3199 = vpop.f32.mrf.mxu0
    %v3200 = vadd.f32 0.0, %v3199
    %3201 = vmatmul.f32.gmra.mxu0 %v1129
    %v3202 = vpop.f32.mrf.mxu0
    %v3203 = vadd.f32 0.0, %v3202
    %3204 = vmatmul.f32.gmra.mxu0 %v1131
    %v3205 = vpop.f32.mrf.mxu0
    %v3206 = vadd.f32 0.0, %v3205
    %3207 = vmatmul.f32.gmra.mxu0 %v1134
    %v3208 = vpop.f32.mrf.mxu0
    %v3209 = vadd.f32 0.0, %v3208
    %3210 = vmatmul.f32.gmra.mxu0 %v1136
    %v3211 = vpop.f32.mrf.mxu0
    %v3212 = vadd.f32 0.0, %v3211
    %3213 = vmatmul.f32.gmra.mxu0 %v1139
    %v3214 = vpop.f32.mrf.mxu0
    %v3215 = vadd.f32 0.0, %v3214
    %3216 = vmatmul.f32.gmra.mxu0 %v1141
    %v3217 = vpop.f32.mrf.mxu0
    %v3218 = vadd.f32 0.0, %v3217
    %3219 = vmatmul.f32.gmra.mxu0 %v1144
    %v3220 = vpop.f32.mrf.mxu0
    %v3221 = vadd.f32 0.0, %v3220
    %3222 = vmatmul.f32.gmra.mxu0 %v1146
    %v3223 = vpop.f32.mrf.mxu0
    %v3224 = vadd.f32 0.0, %v3223
    %3225 = vmatmul.f32.gmra.mxu0 %v1149
    %v3226 = vpop.f32.mrf.mxu0
    %v3227 = vadd.f32 0.0, %v3226
    %3228 = vmatmul.f32.gmra.mxu0 %v1151
    %v3229 = vpop.f32.mrf.mxu0
    %v3230 = vadd.f32 0.0, %v3229
    %3231 = vmatmul.f32.gmra.mxu0 %v1154
    %v3232 = vpop.f32.mrf.mxu0
    %v3233 = vadd.f32 0.0, %v3232
    %3234 = vmatmul.f32.gmra.mxu0 %v1156
    %v3235 = vpop.f32.mrf.mxu0
    %v3236 = vadd.f32 0.0, %v3235
    %3237 = vmatmul.f32.gmra.mxu0 %v1159
    %v3238 = vpop.f32.mrf.mxu0
    %v3239 = vadd.f32 0.0, %v3238
    %3240 = vmatmul.f32.gmra.mxu0 %v1161
    %v3241 = vpop.f32.mrf.mxu0
    %v3242 = vadd.f32 0.0, %v3241
    %3243 = vmatmul.f32.gmra.mxu0 %v1164
    %v3244 = vpop.f32.mrf.mxu0
    %v3245 = vadd.f32 0.0, %v3244
    %3246 = vmatmul.f32.gmra.mxu0 %v1166
    %v3247 = vpop.f32.mrf.mxu0
    %v3248 = vadd.f32 0.0, %v3247
    %3249 = vmatmul.f32.gmra.mxu0 %v1169
    %v3250 = vpop.f32.mrf.mxu0
    %v3251 = vadd.f32 0.0, %v3250
    %3252 = vmatmul.f32.gmra.mxu0 %v1171
    %v3253 = vpop.f32.mrf.mxu0
    %v3254 = vadd.f32 0.0, %v3253
    %3255 = vmatmul.f32.gmra.mxu0 %v1174
    %v3256 = vpop.f32.mrf.mxu0
    %v3257 = vadd.f32 0.0, %v3256
    %3258 = vmatmul.f32.gmra.mxu0 %v1176
    %v3259 = vpop.f32.mrf.mxu0
    %v3260 = vadd.f32 0.0, %v3259
    %3261 = vmatmul.f32.gmra.mxu0 %v1179
    %v3262 = vpop.f32.mrf.mxu0
    %v3263 = vadd.f32 0.0, %v3262
    %3264 = vmatmul.f32.gmra.mxu0 %v1181
    %v3265 = vpop.f32.mrf.mxu0
    %v3266 = vadd.f32 0.0, %v3265
    %3267 = vmatmul.f32.gmra.mxu0 %v2143
    %v3268 = vpop.f32.mrf.mxu0
    %v3269 = vadd.f32 0.0, %v3268
    %3270 = vmatmul.f32.gmra.mxu0 %v2145
    %v3271 = vpop.f32.mrf.mxu0
    %v3272 = vadd.f32 0.0, %v3271
    %3273 = vmatmul.f32.gmra.mxu0 %v3047
    %v3274 = vpop.f32.mrf.mxu0
    %v3275 = vadd.f32 0.0, %v3274
    %3276 = vmatmul.f32.gmra.mxu0 %v3049
    %v3277 = vpop.f32.mrf.mxu0
    %v3278 = vadd.f32 0.0, %v3277
    %3279 = vdwg.mxu0
    %v3280 = vadd.f32 %v2976, %v3089
    %v3281 = vadd.f32 %v2977, %v3092
    %v3282 = vadd.f32 %v2978, %v3095
    %v3283 = vadd.f32 %v2979, %v3098
    %v3284 = vadd.f32 %v2980, %v3101
    %v3285 = vadd.f32 %v2981, %v3104
    %v3286 = vadd.f32 %v2982, %v3107
    %v3287 = vadd.f32 %v2983, %v3110
    %v3288 = vadd.f32 %v2984, %v3113
    %v3289 = vadd.f32 %v2985, %v3116
    %v3290 = vadd.f32 %v2986, %v3119
    %v3291 = vadd.f32 %v2987, %v3122
    %v3292 = vadd.f32 %v2988, %v3125
    %v3293 = vadd.f32 %v2989, %v3128
    %v3294 = vadd.f32 %v2990, %v3131
    %v3295 = vadd.f32 %v2991, %v3134
    %v3296 = vadd.f32 %v2992, %v3137
    %v3297 = vadd.f32 %v2993, %v3140
    %v3298 = vadd.f32 %v2994, %v3143
    %v3299 = vadd.f32 %v2995, %v3146
    %v3300 = vadd.f32 %v2996, %v3149
    %v3301 = vadd.f32 %v2997, %v3152
    %v3302 = vadd.f32 %v2998, %v3155
    %v3303 = vadd.f32 %v2999, %v3158
    %v3304 = vadd.f32 %v3000, %v3161
    %v3305 = vadd.f32 %v3001, %v3164
    %v3306 = vadd.f32 %v3002, %v3167
    %v3307 = vadd.f32 %v3003, %v3170
    %v3308 = vadd.f32 %v3004, %v3173
    %v3309 = vadd.f32 %v3005, %v3176
    %v3310 = vadd.f32 %v3006, %v3179
    %v3311 = vadd.f32 %v3007, %v3182
    %v3312 = vadd.f32 %v3008, %v3185
    %v3313 = vadd.f32 %v3009, %v3188
    %v3314 = vadd.f32 %v3010, %v3191
    %v3315 = vadd.f32 %v3011, %v3194
    %v3316 = vadd.f32 %v3012, %v3197
    %v3317 = vadd.f32 %v3013, %v3200
    %v3318 = vadd.f32 %v3014, %v3203
    %v3319 = vadd.f32 %v3015, %v3206
    %v3320 = vadd.f32 %v3016, %v3209
    %v3321 = vadd.f32 %v3017, %v3212
    %v3322 = vadd.f32 %v3018, %v3215
    %v3323 = vadd.f32 %v3019, %v3218
    %v3324 = vadd.f32 %v3020, %v3221
    %v3325 = vadd.f32 %v3021, %v3224
    %v3326 = vadd.f32 %v3022, %v3227
    %v3327 = vadd.f32 %v3023, %v3230
    %v3328 = vadd.f32 %v3024, %v3233
    %v3329 = vadd.f32 %v3025, %v3236
    %v3330 = vadd.f32 %v3026, %v3239
    %v3331 = vadd.f32 %v3027, %v3242
    %v3332 = vadd.f32 %v3028, %v3245
    %v3333 = vadd.f32 %v3029, %v3248
    %v3334 = vadd.f32 %v3030, %v3251
    %v3335 = vadd.f32 %v3031, %v3254
    %v3336 = vadd.f32 %v3032, %v3257
    %v3337 = vadd.f32 %v3033, %v3260
    %v3338 = vadd.f32 %v3034, %v3263
    %v3339 = vadd.f32 %v3035, %v3266
    %v3340 = vadd.f32 %v3036, %v3269
    %v3341 = vadd.f32 %v3037, %v3272
    %v3342 = vadd.f32 %v3038, %v3275
    %v3343 = vadd.f32 %v3039, %v3278
    %v3344 = vld [vmem:[%s2] sm:$0x1]
    %v3346 = vperm.slane %v3344, 0
    %v3348 = vadd.f32 %v3280, %v3346
    %v3349 = vadd.f32 %v3281, %v3346
    %v3350 = vadd.f32 %v3282, %v3346
    %v3351 = vadd.f32 %v3283, %v3346
    %v3352 = vadd.f32 %v3284, %v3346
    %v3353 = vadd.f32 %v3285, %v3346
    %v3354 = vadd.f32 %v3286, %v3346
    %v3355 = vadd.f32 %v3287, %v3346
    %v3356 = vadd.f32 %v3288, %v3346
    %v3357 = vadd.f32 %v3289, %v3346
    %v3358 = vadd.f32 %v3290, %v3346
    %v3359 = vadd.f32 %v3291, %v3346
    %v3360 = vadd.f32 %v3292, %v3346
    %v3361 = vadd.f32 %v3293, %v3346
    %v3362 = vadd.f32 %v3294, %v3346
    %v3363 = vadd.f32 %v3295, %v3346
    %v3364 = vadd.f32 %v3296, %v3346
    %v3365 = vadd.f32 %v3297, %v3346
    %v3366 = vadd.f32 %v3298, %v3346
    %v3367 = vadd.f32 %v3299, %v3346
    %v3368 = vadd.f32 %v3300, %v3346
    %v3369 = vadd.f32 %v3301, %v3346
    %v3370 = vadd.f32 %v3302, %v3346
    %v3371 = vadd.f32 %v3303, %v3346
    %v3372 = vadd.f32 %v3304, %v3346
    %v3373 = vadd.f32 %v3305, %v3346
    %v3374 = vadd.f32 %v3306, %v3346
    %v3375 = vadd.f32 %v3307, %v3346
    %v3376 = vadd.f32 %v3308, %v3346
    %v3377 = vadd.f32 %v3309, %v3346
    %v3378 = vadd.f32 %v3310, %v3346
    %v3379 = vadd.f32 %v3311, %v3346
    %v3380 = vadd.f32 %v3312, %v3346
    %v3381 = vadd.f32 %v3313, %v3346
    %v3382 = vadd.f32 %v3314, %v3346
    %v3383 = vadd.f32 %v3315, %v3346
    %v3384 = vadd.f32 %v3316, %v3346
    %v3385 = vadd.f32 %v3317, %v3346
    %v3386 = vadd.f32 %v3318, %v3346
    %v3387 = vadd.f32 %v3319, %v3346
    %v3388 = vadd.f32 %v3320, %v3346
    %v3389 = vadd.f32 %v3321, %v3346
    %v3390 = vadd.f32 %v3322, %v3346
    %v3391 = vadd.f32 %v3323, %v3346
    %v3392 = vadd.f32 %v3324, %v3346
    %v3393 = vadd.f32 %v3325, %v3346
    %v3394 = vadd.f32 %v3326, %v3346
    %v3395 = vadd.f32 %v3327, %v3346
    %v3396 = vadd.f32 %v3328, %v3346
    %v3397 = vadd.f32 %v3329, %v3346
    %v3398 = vadd.f32 %v3330, %v3346
    %v3399 = vadd.f32 %v3331, %v3346
    %v3400 = vadd.f32 %v3332, %v3346
    %v3401 = vadd.f32 %v3333, %v3346
    %v3402 = vadd.f32 %v3334, %v3346
    %v3403 = vadd.f32 %v3335, %v3346
    %v3404 = vadd.f32 %v3336, %v3346
    %v3405 = vadd.f32 %v3337, %v3346
    %v3406 = vadd.f32 %v3338, %v3346
    %v3407 = vadd.f32 %v3339, %v3346
    %v3408 = vadd.f32 %v3340, %v3346
    %v3409 = vadd.f32 %v3341, %v3346
    %v3410 = vadd.f32 %v3342, %v3346
    %v3411 = vadd.f32 %v3343, %v3346
    %v3412 = vadd.f32 %v3348, %v3349
    %v3413 = vadd.f32 %v3412, %v3350
    %v3414 = vadd.f32 %v3413, %v3351
    %v3415 = vadd.f32 %v3414, %v3352
    %v3416 = vadd.f32 %v3415, %v3353
    %v3417 = vadd.f32 %v3416, %v3354
    %v3418 = vadd.f32 %v3417, %v3355
    %v3419 = vadd.f32 %v3418, %v3356
    %v3420 = vadd.f32 %v3419, %v3357
    %v3421 = vadd.f32 %v3420, %v3358
    %v3422 = vadd.f32 %v3421, %v3359
    %v3423 = vadd.f32 %v3422, %v3360
    %v3424 = vadd.f32 %v3423, %v3361
    %v3425 = vadd.f32 %v3424, %v3362
    %v3426 = vadd.f32 %v3425, %v3363
    %v3427 = vadd.f32 %v3426, %v3364
    %v3428 = vadd.f32 %v3427, %v3365
    %v3429 = vadd.f32 %v3428, %v3366
    %v3430 = vadd.f32 %v3429, %v3367
    %v3431 = vadd.f32 %v3430, %v3368
    %v3432 = vadd.f32 %v3431, %v3369
    %v3433 = vadd.f32 %v3432, %v3370
    %v3434 = vadd.f32 %v3433, %v3371
    %v3435 = vadd.f32 %v3434, %v3372
    %v3436 = vadd.f32 %v3435, %v3373
    %v3437 = vadd.f32 %v3436, %v3374
    %v3438 = vadd.f32 %v3437, %v3375
    %v3439 = vadd.f32 %v3438, %v3376
    %v3440 = vadd.f32 %v3439, %v3377
    %v3441 = vadd.f32 %v3440, %v3378
    %v3442 = vadd.f32 %v3441, %v3379
    %v3443 = vadd.f32 %v3442, %v3380
    %v3444 = vadd.f32 %v3443, %v3381
    %v3445 = vadd.f32 %v3444, %v3382
    %v3446 = vadd.f32 %v3445, %v3383
    %v3447 = vadd.f32 %v3446, %v3384
    %v3448 = vadd.f32 %v3447, %v3385
    %v3449 = vadd.f32 %v3448, %v3386
    %v3450 = vadd.f32 %v3449, %v3387
    %v3451 = vadd.f32 %v3450, %v3388
    %v3452 = vadd.f32 %v3451, %v3389
    %v3453 = vadd.f32 %v3452, %v3390
    %v3454 = vadd.f32 %v3453, %v3391
    %v3455 = vadd.f32 %v3454, %v3392
    %v3456 = vadd.f32 %v3455, %v3393
    %v3457 = vadd.f32 %v3456, %v3394
    %v3458 = vadd.f32 %v3457, %v3395
    %v3459 = vadd.f32 %v3458, %v3396
    %v3460 = vadd.f32 %v3459, %v3397
    %v3461 = vadd.f32 %v3460, %v3398
    %v3462 = vadd.f32 %v3461, %v3399
    %v3463 = vadd.f32 %v3462, %v3400
    %v3464 = vadd.f32 %v3463, %v3401
    %v3465 = vadd.f32 %v3464, %v3402
    %v3466 = vadd.f32 %v3465, %v3403
    %v3467 = vadd.f32 %v3466, %v3404
    %v3468 = vadd.f32 %v3467, %v3405
    %v3469 = vadd.f32 %v3468, %v3406
    %v3470 = vadd.f32 %v3469, %v3407
    %v3471 = vadd.f32 %v3470, %v3408
    %v3472 = vadd.f32 %v3471, %v3409
    %v3473 = vadd.f32 %v3472, %v3410
    %v3474 = vadd.f32 %v3473, %v3411
    %v3475 = vrot.slane %v3474, 4
    %v3476 = vadd.f32 %v3474, %v3475
    %v3477 = vrot.slane %v3476, 2
    %v3478 = vadd.f32 %v3476, %v3477
    %v3479 = vrot.slane %v3478, 1
    %v3480 = vadd.f32 %v3478, %v3479
    %v3481 = vrcp.pop 512.0
    %v3482 = vmul.f32 512.0, %v3481
    %v3483 = vsub.f32 1.0, %v3482
    %v3484 = vmul.f32 %v3481, %v3483
    %v3485 = vadd.f32 %v3481, %v3484
    %vm3486 = vweird.f32 %v3481
    %v3487 = vsel %vm3486, %v3481, %v3485
    %v3488 = vmul.f32 %v3480, %v3487
    %v3489 = vsub.f32 %v3348, %v3488
    %v3490 = vsub.f32 %v3349, %v3488
    %v3491 = vsub.f32 %v3350, %v3488
    %v3492 = vsub.f32 %v3351, %v3488
    %v3493 = vsub.f32 %v3352, %v3488
    %v3494 = vsub.f32 %v3353, %v3488
    %v3495 = vsub.f32 %v3354, %v3488
    %v3496 = vsub.f32 %v3355, %v3488
    %v3497 = vsub.f32 %v3356, %v3488
    %v3498 = vsub.f32 %v3357, %v3488
    %v3499 = vsub.f32 %v3358, %v3488
    %v3500 = vsub.f32 %v3359, %v3488
    %v3501 = vsub.f32 %v3360, %v3488
    %v3502 = vsub.f32 %v3361, %v3488
    %v3503 = vsub.f32 %v3362, %v3488
    %v3504 = vsub.f32 %v3363, %v3488
    %v3505 = vsub.f32 %v3364, %v3488
    %v3506 = vsub.f32 %v3365, %v3488
    %v3507 = vsub.f32 %v3366, %v3488
    %v3508 = vsub.f32 %v3367, %v3488
    %v3509 = vsub.f32 %v3368, %v3488
    %v3510 = vsub.f32 %v3369, %v3488
    %v3511 = vsub.f32 %v3370, %v3488
    %v3512 = vsub.f32 %v3371, %v3488
    %v3513 = vsub.f32 %v3372, %v3488
    %v3514 = vsub.f32 %v3373, %v3488
    %v3515 = vsub.f32 %v3374, %v3488
    %v3516 = vsub.f32 %v3375, %v3488
    %v3517 = vsub.f32 %v3376, %v3488
    %v3518 = vsub.f32 %v3377, %v3488
    %v3519 = vsub.f32 %v3378, %v3488
    %v3520 = vsub.f32 %v3379, %v3488
    %v3521 = vsub.f32 %v3380, %v3488
    %v3522 = vsub.f32 %v3381, %v3488
    %v3523 = vsub.f32 %v3382, %v3488
    %v3524 = vsub.f32 %v3383, %v3488
    %v3525 = vsub.f32 %v3384, %v3488
    %v3526 = vsub.f32 %v3385, %v3488
    %v3527 = vsub.f32 %v3386, %v3488
    %v3528 = vsub.f32 %v3387, %v3488
    %v3529 = vsub.f32 %v3388, %v3488
    %v3530 = vsub.f32 %v3389, %v3488
    %v3531 = vsub.f32 %v3390, %v3488
    %v3532 = vsub.f32 %v3391, %v3488
    %v3533 = vsub.f32 %v3392, %v3488
    %v3534 = vsub.f32 %v3393, %v3488
    %v3535 = vsub.f32 %v3394, %v3488
    %v3536 = vsub.f32 %v3395, %v3488
    %v3537 = vsub.f32 %v3396, %v3488
    %v3538 = vsub.f32 %v3397, %v3488
    %v3539 = vsub.f32 %v3398, %v3488
    %v3540 = vsub.f32 %v3399, %v3488
    %v3541 = vsub.f32 %v3400, %v3488
    %v3542 = vsub.f32 %v3401, %v3488
    %v3543 = vsub.f32 %v3402, %v3488
    %v3544 = vsub.f32 %v3403, %v3488
    %v3545 = vsub.f32 %v3404, %v3488
    %v3546 = vsub.f32 %v3405, %v3488
    %v3547 = vsub.f32 %v3406, %v3488
    %v3548 = vsub.f32 %v3407, %v3488
    %v3549 = vsub.f32 %v3408, %v3488
    %v3550 = vsub.f32 %v3409, %v3488
    %v3551 = vsub.f32 %v3410, %v3488
    %v3552 = vsub.f32 %v3411, %v3488
    %v3553 = vmul.f32 %v3489, %v3489
    %v3554 = vmul.f32 %v3490, %v3490
    %v3555 = vmul.f32 %v3491, %v3491
    %v3556 = vmul.f32 %v3492, %v3492
    %v3557 = vmul.f32 %v3493, %v3493
    %v3558 = vmul.f32 %v3494, %v3494
    %v3559 = vmul.f32 %v3495, %v3495
    %v3560 = vmul.f32 %v3496, %v3496
    %v3561 = vmul.f32 %v3497, %v3497
    %v3562 = vmul.f32 %v3498, %v3498
    %v3563 = vmul.f32 %v3499, %v3499
    %v3564 = vmul.f32 %v3500, %v3500
    %v3565 = vmul.f32 %v3501, %v3501
    %v3566 = vmul.f32 %v3502, %v3502
    %v3567 = vmul.f32 %v3503, %v3503
    %v3568 = vmul.f32 %v3504, %v3504
    %v3569 = vmul.f32 %v3505, %v3505
    %v3570 = vmul.f32 %v3506, %v3506
    %v3571 = vmul.f32 %v3507, %v3507
    %v3572 = vmul.f32 %v3508, %v3508
    %v3573 = vmul.f32 %v3509, %v3509
    %v3574 = vmul.f32 %v3510, %v3510
    %v3575 = vmul.f32 %v3511, %v3511
    %v3576 = vmul.f32 %v3512, %v3512
    %v3577 = vmul.f32 %v3513, %v3513
    %v3578 = vmul.f32 %v3514, %v3514
    %v3579 = vmul.f32 %v3515, %v3515
    %v3580 = vmul.f32 %v3516, %v3516
    %v3581 = vmul.f32 %v3517, %v3517
    %v3582 = vmul.f32 %v3518, %v3518
    %v3583 = vmul.f32 %v3519, %v3519
    %v3584 = vmul.f32 %v3520, %v3520
    %v3585 = vmul.f32 %v3521, %v3521
    %v3586 = vmul.f32 %v3522, %v3522
    %v3587 = vmul.f32 %v3523, %v3523
    %v3588 = vmul.f32 %v3524, %v3524
    %v3589 = vmul.f32 %v3525, %v3525
    %v3590 = vmul.f32 %v3526, %v3526
    %v3591 = vmul.f32 %v3527, %v3527
    %v3592 = vmul.f32 %v3528, %v3528
    %v3593 = vmul.f32 %v3529, %v3529
    %v3594 = vmul.f32 %v3530, %v3530
    %v3595 = vmul.f32 %v3531, %v3531
    %v3596 = vmul.f32 %v3532, %v3532
    %v3597 = vmul.f32 %v3533, %v3533
    %v3598 = vmul.f32 %v3534, %v3534
    %v3599 = vmul.f32 %v3535, %v3535
    %v3600 = vmul.f32 %v3536, %v3536
    %v3601 = vmul.f32 %v3537, %v3537
    %v3602 = vmul.f32 %v3538, %v3538
    %v3603 = vmul.f32 %v3539, %v3539
    %v3604 = vmul.f32 %v3540, %v3540
    %v3605 = vmul.f32 %v3541, %v3541
    %v3606 = vmul.f32 %v3542, %v3542
    %v3607 = vmul.f32 %v3543, %v3543
    %v3608 = vmul.f32 %v3544, %v3544
    %v3609 = vmul.f32 %v3545, %v3545
    %v3610 = vmul.f32 %v3546, %v3546
    %v3611 = vmul.f32 %v3547, %v3547
    %v3612 = vmul.f32 %v3548, %v3548
    %v3613 = vmul.f32 %v3549, %v3549
    %v3614 = vmul.f32 %v3550, %v3550
    %v3615 = vmul.f32 %v3551, %v3551
    %v3616 = vmul.f32 %v3552, %v3552
    %v3617 = vadd.f32 %v3553, %v3554
    %v3618 = vadd.f32 %v3617, %v3555
    %v3619 = vadd.f32 %v3618, %v3556
    %v3620 = vadd.f32 %v3619, %v3557
    %v3621 = vadd.f32 %v3620, %v3558
    %v3622 = vadd.f32 %v3621, %v3559
    %v3623 = vadd.f32 %v3622, %v3560
    %v3624 = vadd.f32 %v3623, %v3561
    %v3625 = vadd.f32 %v3624, %v3562
    %v3626 = vadd.f32 %v3625, %v3563
    %v3627 = vadd.f32 %v3626, %v3564
    %v3628 = vadd.f32 %v3627, %v3565
    %v3629 = vadd.f32 %v3628, %v3566
    %v3630 = vadd.f32 %v3629, %v3567
    %v3631 = vadd.f32 %v3630, %v3568
    %v3632 = vadd.f32 %v3631, %v3569
    %v3633 = vadd.f32 %v3632, %v3570
    %v3634 = vadd.f32 %v3633, %v3571
    %v3635 = vadd.f32 %v3634, %v3572
    %v3636 = vadd.f32 %v3635, %v3573
    %v3637 = vadd.f32 %v3636, %v3574
    %v3638 = vadd.f32 %v3637, %v3575
    %v3639 = vadd.f32 %v3638, %v3576
    %v3640 = vadd.f32 %v3639, %v3577
    %v3641 = vadd.f32 %v3640, %v3578
    %v3642 = vadd.f32 %v3641, %v3579
    %v3643 = vadd.f32 %v3642, %v3580
    %v3644 = vadd.f32 %v3643, %v3581
    %v3645 = vadd.f32 %v3644, %v3582
    %v3646 = vadd.f32 %v3645, %v3583
    %v3647 = vadd.f32 %v3646, %v3584
    %v3648 = vadd.f32 %v3647, %v3585
    %v3649 = vadd.f32 %v3648, %v3586
    %v3650 = vadd.f32 %v3649, %v3587
    %v3651 = vadd.f32 %v3650, %v3588
    %v3652 = vadd.f32 %v3651, %v3589
    %v3653 = vadd.f32 %v3652, %v3590
    %v3654 = vadd.f32 %v3653, %v3591
    %v3655 = vadd.f32 %v3654, %v3592
    %v3656 = vadd.f32 %v3655, %v3593
    %v3657 = vadd.f32 %v3656, %v3594
    %v3658 = vadd.f32 %v3657, %v3595
    %v3659 = vadd.f32 %v3658, %v3596
    %v3660 = vadd.f32 %v3659, %v3597
    %v3661 = vadd.f32 %v3660, %v3598
    %v3662 = vadd.f32 %v3661, %v3599
    %v3663 = vadd.f32 %v3662, %v3600
    %v3664 = vadd.f32 %v3663, %v3601
    %v3665 = vadd.f32 %v3664, %v3602
    %v3666 = vadd.f32 %v3665, %v3603
    %v3667 = vadd.f32 %v3666, %v3604
    %v3668 = vadd.f32 %v3667, %v3605
    %v3669 = vadd.f32 %v3668, %v3606
    %v3670 = vadd.f32 %v3669, %v3607
    %v3671 = vadd.f32 %v3670, %v3608
    %v3672 = vadd.f32 %v3671, %v3609
    %v3673 = vadd.f32 %v3672, %v3610
    %v3674 = vadd.f32 %v3673, %v3611
    %v3675 = vadd.f32 %v3674, %v3612
    %v3676 = vadd.f32 %v3675, %v3613
    %v3677 = vadd.f32 %v3676, %v3614
    %v3678 = vadd.f32 %v3677, %v3615
    %v3679 = vadd.f32 %v3678, %v3616
    %v3680 = vrot.slane %v3679, 4
    %v3681 = vadd.f32 %v3679, %v3680
    %v3682 = vrot.slane %v3681, 2
    %v3683 = vadd.f32 %v3681, %v3682
    %v3684 = vrot.slane %v3683, 1
    %v3685 = vadd.f32 %v3683, %v3684
    %v3686 = vmul.f32 %v3685, %v3487
    %v3687 = vadd.f32 %v3686, 1e-05
    %v3688 = vrsqrt.pop %v3687
    %v3689 = vmul.f32 %v3688, %v3687
    %v3690 = vmul.f32 %v3689, %v3688
    %v3691 = vmul.f32 0.5, %v3690
    %v3692 = vsub.f32 1.5, %v3691
    %v3693 = vmul.f32 %v3688, %v3692
    %vm3694 = vweird.f32 %v3687
    %vm3695 = vweird.f32 %v3688
    %vm3696 = vmor %vm3694, %vm3695
    %v3697 = vsel %vm3696, %v3688, %v3693
    %v3698 = vmul.f32 %v3489, %v3697
    %v3699 = vmul.f32 %v3490, %v3697
    %v3700 = vmul.f32 %v3491, %v3697
    %v3701 = vmul.f32 %v3492, %v3697
    %v3702 = vmul.f32 %v3493, %v3697
    %v3703 = vmul.f32 %v3494, %v3697
    %v3704 = vmul.f32 %v3495, %v3697
    %v3705 = vmul.f32 %v3496, %v3697
    %v3706 = vmul.f32 %v3497, %v3697
    %v3707 = vmul.f32 %v3498, %v3697
    %v3708 = vmul.f32 %v3499, %v3697
    %v3709 = vmul.f32 %v3500, %v3697
    %v3710 = vmul.f32 %v3501, %v3697
    %v3711 = vmul.f32 %v3502, %v3697
    %v3712 = vmul.f32 %v3503, %v3697
    %v3713 = vmul.f32 %v3504, %v3697
    %v3714 = vmul.f32 %v3505, %v3697
    %v3715 = vmul.f32 %v3506, %v3697
    %v3716 = vmul.f32 %v3507, %v3697
    %v3717 = vmul.f32 %v3508, %v3697
    %v3718 = vmul.f32 %v3509, %v3697
    %v3719 = vmul.f32 %v3510, %v3697
    %v3720 = vmul.f32 %v3511, %v3697
    %v3721 = vmul.f32 %v3512, %v3697
    %v3722 = vmul.f32 %v3513, %v3697
    %v3723 = vmul.f32 %v3514, %v3697
    %v3724 = vmul.f32 %v3515, %v3697
    %v3725 = vmul.f32 %v3516, %v3697
    %v3726 = vmul.f32 %v3517, %v3697
    %v3727 = vmul.f32 %v3518, %v3697
    %v3728 = vmul.f32 %v3519, %v3697
    %v3729 = vmul.f32 %v3520, %v3697
    %v3730 = vmul.f32 %v3521, %v3697
    %v3731 = vmul.f32 %v3522, %v3697
    %v3732 = vmul.f32 %v3523, %v3697
    %v3733 = vmul.f32 %v3524, %v3697
    %v3734 = vmul.f32 %v3525, %v3697
    %v3735 = vmul.f32 %v3526, %v3697
    %v3736 = vmul.f32 %v3527, %v3697
    %v3737 = vmul.f32 %v3528, %v3697
    %v3738 = vmul.f32 %v3529, %v3697
    %v3739 = vmul.f32 %v3530, %v3697
    %v3740 = vmul.f32 %v3531, %v3697
    %v3741 = vmul.f32 %v3532, %v3697
    %v3742 = vmul.f32 %v3533, %v3697
    %v3743 = vmul.f32 %v3534, %v3697
    %v3744 = vmul.f32 %v3535, %v3697
    %v3745 = vmul.f32 %v3536, %v3697
    %v3746 = vmul.f32 %v3537, %v3697
    %v3747 = vmul.f32 %v3538, %v3697
    %v3748 = vmul.f32 %v3539, %v3697
    %v3749 = vmul.f32 %v3540, %v3697
    %v3750 = vmul.f32 %v3541, %v3697
    %v3751 = vmul.f32 %v3542, %v3697
    %v3752 = vmul.f32 %v3543, %v3697
    %v3753 = vmul.f32 %v3544, %v3697
    %v3754 = vmul.f32 %v3545, %v3697
    %v3755 = vmul.f32 %v3546, %v3697
    %v3756 = vmul.f32 %v3547, %v3697
    %v3757 = vmul.f32 %v3548, %v3697
    %v3758 = vmul.f32 %v3549, %v3697
    %v3759 = vmul.f32 %v3550, %v3697
    %v3760 = vmul.f32 %v3551, %v3697
    %v3761 = vmul.f32 %v3552, %v3697
    %v3762 = vld [vmem:[%s3] sm:$0x1]
    %v3764 = vperm.slane %v3762, 0
    %v3766 = vmul.f32 %v3698, %v3764
    %v3767 = vmul.f32 %v3699, %v3764
    %v3768 = vmul.f32 %v3700, %v3764
    %v3769 = vmul.f32 %v3701, %v3764
    %v3770 = vmul.f32 %v3702, %v3764
    %v3771 = vmul.f32 %v3703, %v3764
    %v3772 = vmul.f32 %v3704, %v3764
    %v3773 = vmul.f32 %v3705, %v3764
    %v3774 = vmul.f32 %v3706, %v3764
    %v3775 = vmul.f32 %v3707, %v3764
    %v3776 = vmul.f32 %v3708, %v3764
    %v3777 = vmul.f32 %v3709, %v3764
    %v3778 = vmul.f32 %v3710, %v3764
    %v3779 = vmul.f32 %v3711, %v3764
    %v3780 = vmul.f32 %v3712, %v3764
    %v3781 = vmul.f32 %v3713, %v3764
    %v3782 = vmul.f32 %v3714, %v3764
    %v3783 = vmul.f32 %v3715, %v3764
    %v3784 = vmul.f32 %v3716, %v3764
    %v3785 = vmul.f32 %v3717, %v3764
    %v3786 = vmul.f32 %v3718, %v3764
    %v3787 = vmul.f32 %v3719, %v3764
    %v3788 = vmul.f32 %v3720, %v3764
    %v3789 = vmul.f32 %v3721, %v3764
    %v3790 = vmul.f32 %v3722, %v3764
    %v3791 = vmul.f32 %v3723, %v3764
    %v3792 = vmul.f32 %v3724, %v3764
    %v3793 = vmul.f32 %v3725, %v3764
    %v3794 = vmul.f32 %v3726, %v3764
    %v3795 = vmul.f32 %v3727, %v3764
    %v3796 = vmul.f32 %v3728, %v3764
    %v3797 = vmul.f32 %v3729, %v3764
    %v3798 = vmul.f32 %v3730, %v3764
    %v3799 = vmul.f32 %v3731, %v3764
    %v3800 = vmul.f32 %v3732, %v3764
    %v3801 = vmul.f32 %v3733, %v3764
    %v3802 = vmul.f32 %v3734, %v3764
    %v3803 = vmul.f32 %v3735, %v3764
    %v3804 = vmul.f32 %v3736, %v3764
    %v3805 = vmul.f32 %v3737, %v3764
    %v3806 = vmul.f32 %v3738, %v3764
    %v3807 = vmul.f32 %v3739, %v3764
    %v3808 = vmul.f32 %v3740, %v3764
    %v3809 = vmul.f32 %v3741, %v3764
    %v3810 = vmul.f32 %v3742, %v3764
    %v3811 = vmul.f32 %v3743, %v3764
    %v3812 = vmul.f32 %v3744, %v3764
    %v3813 = vmul.f32 %v3745, %v3764
    %v3814 = vmul.f32 %v3746, %v3764
    %v3815 = vmul.f32 %v3747, %v3764
    %v3816 = vmul.f32 %v3748, %v3764
    %v3817 = vmul.f32 %v3749, %v3764
    %v3818 = vmul.f32 %v3750, %v3764
    %v3819 = vmul.f32 %v3751, %v3764
    %v3820 = vmul.f32 %v3752, %v3764
    %v3821 = vmul.f32 %v3753, %v3764
    %v3822 = vmul.f32 %v3754, %v3764
    %v3823 = vmul.f32 %v3755, %v3764
    %v3824 = vmul.f32 %v3756, %v3764
    %v3825 = vmul.f32 %v3757, %v3764
    %v3826 = vmul.f32 %v3758, %v3764
    %v3827 = vmul.f32 %v3759, %v3764
    %v3828 = vmul.f32 %v3760, %v3764
    %v3829 = vmul.f32 %v3761, %v3764
    %v3830 = vld [vmem:[%s4] sm:$0x1]
    %v3832 = vperm.slane %v3830, 0
    %v3834 = vadd.f32 %v3766, %v3832
    %v3835 = vadd.f32 %v3767, %v3832
    %v3836 = vadd.f32 %v3768, %v3832
    %v3837 = vadd.f32 %v3769, %v3832
    %v3838 = vadd.f32 %v3770, %v3832
    %v3839 = vadd.f32 %v3771, %v3832
    %v3840 = vadd.f32 %v3772, %v3832
    %v3841 = vadd.f32 %v3773, %v3832
    %v3842 = vadd.f32 %v3774, %v3832
    %v3843 = vadd.f32 %v3775, %v3832
    %v3844 = vadd.f32 %v3776, %v3832
    %v3845 = vadd.f32 %v3777, %v3832
    %v3846 = vadd.f32 %v3778, %v3832
    %v3847 = vadd.f32 %v3779, %v3832
    %v3848 = vadd.f32 %v3780, %v3832
    %v3849 = vadd.f32 %v3781, %v3832
    %v3850 = vadd.f32 %v3782, %v3832
    %v3851 = vadd.f32 %v3783, %v3832
    %v3852 = vadd.f32 %v3784, %v3832
    %v3853 = vadd.f32 %v3785, %v3832
    %v3854 = vadd.f32 %v3786, %v3832
    %v3855 = vadd.f32 %v3787, %v3832
    %v3856 = vadd.f32 %v3788, %v3832
    %v3857 = vadd.f32 %v3789, %v3832
    %v3858 = vadd.f32 %v3790, %v3832
    %v3859 = vadd.f32 %v3791, %v3832
    %v3860 = vadd.f32 %v3792, %v3832
    %v3861 = vadd.f32 %v3793, %v3832
    %v3862 = vadd.f32 %v3794, %v3832
    %v3863 = vadd.f32 %v3795, %v3832
    %v3864 = vadd.f32 %v3796, %v3832
    %v3865 = vadd.f32 %v3797, %v3832
    %v3866 = vadd.f32 %v3798, %v3832
    %v3867 = vadd.f32 %v3799, %v3832
    %v3868 = vadd.f32 %v3800, %v3832
    %v3869 = vadd.f32 %v3801, %v3832
    %v3870 = vadd.f32 %v3802, %v3832
    %v3871 = vadd.f32 %v3803, %v3832
    %v3872 = vadd.f32 %v3804, %v3832
    %v3873 = vadd.f32 %v3805, %v3832
    %v3874 = vadd.f32 %v3806, %v3832
    %v3875 = vadd.f32 %v3807, %v3832
    %v3876 = vadd.f32 %v3808, %v3832
    %v3877 = vadd.f32 %v3809, %v3832
    %v3878 = vadd.f32 %v3810, %v3832
    %v3879 = vadd.f32 %v3811, %v3832
    %v3880 = vadd.f32 %v3812, %v3832
    %v3881 = vadd.f32 %v3813, %v3832
    %v3882 = vadd.f32 %v3814, %v3832
    %v3883 = vadd.f32 %v3815, %v3832
    %v3884 = vadd.f32 %v3816, %v3832
    %v3885 = vadd.f32 %v3817, %v3832
    %v3886 = vadd.f32 %v3818, %v3832
    %v3887 = vadd.f32 %v3819, %v3832
    %v3888 = vadd.f32 %v3820, %v3832
    %v3889 = vadd.f32 %v3821, %v3832
    %v3890 = vadd.f32 %v3822, %v3832
    %v3891 = vadd.f32 %v3823, %v3832
    %v3892 = vadd.f32 %v3824, %v3832
    %v3893 = vadd.f32 %v3825, %v3832
    %v3894 = vadd.f32 %v3826, %v3832
    %v3895 = vadd.f32 %v3827, %v3832
    %v3896 = vadd.f32 %v3828, %v3832
    %v3897 = vadd.f32 %v3829, %v3832
    %v3898 = vmax.f32 %v3834, 0.0
    %v3899 = vmax.f32 %v3835, 0.0
    %v3900 = vmax.f32 %v3836, 0.0
    %v3901 = vmax.f32 %v3837, 0.0
    %v3902 = vmax.f32 %v3838, 0.0
    %v3903 = vmax.f32 %v3839, 0.0
    %v3904 = vmax.f32 %v3840, 0.0
    %v3905 = vmax.f32 %v3841, 0.0
    %v3906 = vmax.f32 %v3842, 0.0
    %v3907 = vmax.f32 %v3843, 0.0
    %v3908 = vmax.f32 %v3844, 0.0
    %v3909 = vmax.f32 %v3845, 0.0
    %v3910 = vmax.f32 %v3846, 0.0
    %v3911 = vmax.f32 %v3847, 0.0
    %v3912 = vmax.f32 %v3848, 0.0
    %v3913 = vmax.f32 %v3849, 0.0
    %v3914 = vmax.f32 %v3850, 0.0
    %v3915 = vmax.f32 %v3851, 0.0
    %v3916 = vmax.f32 %v3852, 0.0
    %v3917 = vmax.f32 %v3853, 0.0
    %v3918 = vmax.f32 %v3854, 0.0
    %v3919 = vmax.f32 %v3855, 0.0
    %v3920 = vmax.f32 %v3856, 0.0
    %v3921 = vmax.f32 %v3857, 0.0
    %v3922 = vmax.f32 %v3858, 0.0
    %v3923 = vmax.f32 %v3859, 0.0
    %v3924 = vmax.f32 %v3860, 0.0
    %v3925 = vmax.f32 %v3861, 0.0
    %v3926 = vmax.f32 %v3862, 0.0
    %v3927 = vmax.f32 %v3863, 0.0
    %v3928 = vmax.f32 %v3864, 0.0
    %v3929 = vmax.f32 %v3865, 0.0
    %v3930 = vmax.f32 %v3866, 0.0
    %v3931 = vmax.f32 %v3867, 0.0
    %v3932 = vmax.f32 %v3868, 0.0
    %v3933 = vmax.f32 %v3869, 0.0
    %v3934 = vmax.f32 %v3870, 0.0
    %v3935 = vmax.f32 %v3871, 0.0
    %v3936 = vmax.f32 %v3872, 0.0
    %v3937 = vmax.f32 %v3873, 0.0
    %v3938 = vmax.f32 %v3874, 0.0
    %v3939 = vmax.f32 %v3875, 0.0
    %v3940 = vmax.f32 %v3876, 0.0
    %v3941 = vmax.f32 %v3877, 0.0
    %v3942 = vmax.f32 %v3878, 0.0
    %v3943 = vmax.f32 %v3879, 0.0
    %v3944 = vmax.f32 %v3880, 0.0
    %v3945 = vmax.f32 %v3881, 0.0
    %v3946 = vmax.f32 %v3882, 0.0
    %v3947 = vmax.f32 %v3883, 0.0
    %v3948 = vmax.f32 %v3884, 0.0
    %v3949 = vmax.f32 %v3885, 0.0
    %v3950 = vmax.f32 %v3886, 0.0
    %v3951 = vmax.f32 %v3887, 0.0
    %v3952 = vmax.f32 %v3888, 0.0
    %v3953 = vmax.f32 %v3889, 0.0
    %v3954 = vmax.f32 %v3890, 0.0
    %v3955 = vmax.f32 %v3891, 0.0
    %v3956 = vmax.f32 %v3892, 0.0
    %v3957 = vmax.f32 %v3893, 0.0
    %v3958 = vmax.f32 %v3894, 0.0
    %v3959 = vmax.f32 %v3895, 0.0
    %v3960 = vmax.f32 %v3896, 0.0
    %v3961 = vmax.f32 %v3897, 0.0
    %v3962 = vld [vmem:[%s5] sm:$0xff]
    %v3963 = vld [vmem:[%s5 + $0x8] sm:$0xff]
    %v3964 = vld [vmem:[%s5 + $0x10] sm:$0xff]
    %v3965 = vld [vmem:[%s5 + $0x18] sm:$0xff]
    %v3966 = vld [vmem:[%s5 + $0x20] sm:$0xff]
    %v3967 = vld [vmem:[%s5 + $0x28] sm:$0xff]
    %v3968 = vld [vmem:[%s5 + $0x30] sm:$0xff]
    %v3969 = vld [vmem:[%s5 + $0x38] sm:$0xff]
    %v3970 = vld [vmem:[%s5 + $0x40] sm:$0xff]
    %v3971 = vld [vmem:[%s5 + $0x48] sm:$0xff]
    %v3972 = vld [vmem:[%s5 + $0x50] sm:$0xff]
    %v3973 = vld [vmem:[%s5 + $0x58] sm:$0xff]
    %v3974 = vld [vmem:[%s5 + $0x60] sm:$0xff]
    %v3975 = vld [vmem:[%s5 + $0x68] sm:$0xff]
    %v3976 = vld [vmem:[%s5 + $0x70] sm:$0xff]
    %v3977 = vld [vmem:[%s5 + $0x78] sm:$0xff]
    %v3978 = vld [vmem:[%s6] sm:$0x1]
    %v3980 = vperm.slane %v3978, 0
    %3982 = vmatpush.msra.mxu0 %v3977
    %3983 = vmatpush.msra.mxu0 %v3976
    %3984 = vmatpush.msra.mxu0 %v3975
    %3985 = vmatpush.msra.mxu0 %v3974
    %3986 = vmatpush.msra.mxu0 %v3973
    %3987 = vmatpush.msra.mxu0 %v3972
    %3988 = vmatpush.msra.mxu0 %v3971
    %3989 = vmatpush.msra.mxu0 %v3970
    %3990 = vmatpush.msra.mxu0 %v3969
    %3991 = vmatpush.msra.mxu0 %v3968
    %3992 = vmatpush.msra.mxu0 %v3967
    %3993 = vmatpush.msra.mxu0 %v3966
    %3994 = vmatpush.msra.mxu0 %v3965
    %3995 = vmatpush.msra.mxu0 %v3964
    %3996 = vmatpush.msra.mxu0 %v3963
    %3997 = vmatpush.msra.mxu0 %v3962
    %3998 = vmatmul.f32.gmra.mxu0 %v3898
    %v3999 = vpop.f32.mrf.mxu0
    %v4000 = vadd.f32 %v3980, %v3999
    %4001 = vmatmul.f32.gmra.mxu0 %v3899
    %v4002 = vpop.f32.mrf.mxu0
    %v4003 = vadd.f32 %v3980, %v4002
    %4004 = vmatmul.f32.gmra.mxu0 %v3900
    %v4005 = vpop.f32.mrf.mxu0
    %v4006 = vadd.f32 %v3980, %v4005
    %4007 = vmatmul.f32.gmra.mxu0 %v3901
    %v4008 = vpop.f32.mrf.mxu0
    %v4009 = vadd.f32 %v3980, %v4008
    %4010 = vmatmul.f32.gmra.mxu0 %v3902
    %v4011 = vpop.f32.mrf.mxu0
    %v4012 = vadd.f32 %v3980, %v4011
    %4013 = vmatmul.f32.gmra.mxu0 %v3903
    %v4014 = vpop.f32.mrf.mxu0
    %v4015 = vadd.f32 %v3980, %v4014
    %4016 = vmatmul.f32.gmra.mxu0 %v3904
    %v4017 = vpop.f32.mrf.mxu0
    %v4018 = vadd.f32 %v3980, %v4017
    %4019 = vmatmul.f32.gmra.mxu0 %v3905
    %v4020 = vpop.f32.mrf.mxu0
    %v4021 = vadd.f32 %v3980, %v4020
    %4022 = vmatmul.f32.gmra.mxu0 %v3906
    %v4023 = vpop.f32.mrf.mxu0
    %v4024 = vadd.f32 %v3980, %v4023
    %4025 = vmatmul.f32.gmra.mxu0 %v3907
    %v4026 = vpop.f32.mrf.mxu0
    %v4027 = vadd.f32 %v3980, %v4026
    %4028 = vmatmul.f32.gmra.mxu0 %v3908
    %v4029 = vpop.f32.mrf.mxu0
    %v4030 = vadd.f32 %v3980, %v4029
    %4031 = vmatmul.f32.gmra.mxu0 %v3909
    %v4032 = vpop.f32.mrf.mxu0
    %v4033 = vadd.f32 %v3980, %v4032
    %4034 = vmatmul.f32.gmra.mxu0 %v3910
    %v4035 = vpop.f32.mrf.mxu0
    %v4036 = vadd.f32 %v3980, %v4035
    %4037 = vmatmul.f32.gmra.mxu0 %v3911
    %v4038 = vpop.f32.mrf.mxu0
    %v4039 = vadd.f32 %v3980, %v4038
    %4040 = vmatmul.f32.gmra.mxu0 %v3912
    %v4041 = vpop.f32.mrf.mxu0
    %v4042 = vadd.f32 %v3980, %v4041
    %4043 = vmatmul.f32.gmra.mxu0 %v3913
    %v4044 = vpop.f32.mrf.mxu0
    %v4045 = vadd.f32 %v3980, %v4044
    %4046 = vmatmul.f32.gmra.mxu0 %v3914
    %v4047 = vpop.f32.mrf.mxu0
    %v4048 = vadd.f32 %v3980, %v4047
    %4049 = vmatmul.f32.gmra.mxu0 %v3915
    %v4050 = vpop.f32.mrf.mxu0
    %v4051 = vadd.f32 %v3980, %v4050
    %4052 = vmatmul.f32.gmra.mxu0 %v3916
    %v4053 = vpop.f32.mrf.mxu0
    %v4054 = vadd.f32 %v3980, %v4053
    %4055 = vmatmul.f32.gmra.mxu0 %v3917
    %v4056 = vpop.f32.mrf.mxu0
    %v4057 = vadd.f32 %v3980, %v4056
    %4058 = vmatmul.f32.gmra.mxu0 %v3918
    %v4059 = vpop.f32.mrf.mxu0
    %v4060 = vadd.f32 %v3980, %v4059
    %4061 = vmatmul.f32.gmra.mxu0 %v3919
    %v4062 = vpop.f32.mrf.mxu0
    %v4063 = vadd.f32 %v3980, %v4062
    %4064 = vmatmul.f32.gmra.mxu0 %v3920
    %v4065 = vpop.f32.mrf.mxu0
    %v4066 = vadd.f32 %v3980, %v4065
    %4067 = vmatmul.f32.gmra.mxu0 %v3921
    %v4068 = vpop.f32.mrf.mxu0
    %v4069 = vadd.f32 %v3980, %v4068
    %4070 = vmatmul.f32.gmra.mxu0 %v3922
    %v4071 = vpop.f32.mrf.mxu0
    %v4072 = vadd.f32 %v3980, %v4071
    %4073 = vmatmul.f32.gmra.mxu0 %v3923
    %v4074 = vpop.f32.mrf.mxu0
    %v4075 = vadd.f32 %v3980, %v4074
    %4076 = vmatmul.f32.gmra.mxu0 %v3924
    %v4077 = vpop.f32.mrf.mxu0
    %v4078 = vadd.f32 %v3980, %v4077
    %4079 = vmatmul.f32.gmra.mxu0 %v3925
    %v4080 = vpop.f32.mrf.mxu0
    %v4081 = vadd.f32 %v3980, %v4080
    %4082 = vmatmul.f32.gmra.mxu0 %v3926
    %v4083 = vpop.f32.mrf.mxu0
    %v4084 = vadd.f32 %v3980, %v4083
    %4085 = vmatmul.f32.gmra.mxu0 %v3927
    %v4086 = vpop.f32.mrf.mxu0
    %v4087 = vadd.f32 %v3980, %v4086
    %4088 = vmatmul.f32.gmra.mxu0 %v3928
    %v4089 = vpop.f32.mrf.mxu0
    %v4090 = vadd.f32 %v3980, %v4089
    %4091 = vmatmul.f32.gmra.mxu0 %v3929
    %v4092 = vpop.f32.mrf.mxu0
    %v4093 = vadd.f32 %v3980, %v4092
    %4094 = vmatmul.f32.gmra.mxu0 %v3930
    %v4095 = vpop.f32.mrf.mxu0
    %v4096 = vadd.f32 %v3980, %v4095
    %4097 = vmatmul.f32.gmra.mxu0 %v3931
    %v4098 = vpop.f32.mrf.mxu0
    %v4099 = vadd.f32 %v3980, %v4098
    %4100 = vmatmul.f32.gmra.mxu0 %v3932
    %v4101 = vpop.f32.mrf.mxu0
    %v4102 = vadd.f32 %v3980, %v4101
    %4103 = vmatmul.f32.gmra.mxu0 %v3933
    %v4104 = vpop.f32.mrf.mxu0
    %v4105 = vadd.f32 %v3980, %v4104
    %4106 = vmatmul.f32.gmra.mxu0 %v3934
    %v4107 = vpop.f32.mrf.mxu0
    %v4108 = vadd.f32 %v3980, %v4107
    %4109 = vmatmul.f32.gmra.mxu0 %v3935
    %v4110 = vpop.f32.mrf.mxu0
    %v4111 = vadd.f32 %v3980, %v4110
    %4112 = vmatmul.f32.gmra.mxu0 %v3936
    %v4113 = vpop.f32.mrf.mxu0
    %v4114 = vadd.f32 %v3980, %v4113
    %4115 = vmatmul.f32.gmra.mxu0 %v3937
    %v4116 = vpop.f32.mrf.mxu0
    %v4117 = vadd.f32 %v3980, %v4116
    %4118 = vmatmul.f32.gmra.mxu0 %v3938
    %v4119 = vpop.f32.mrf.mxu0
    %v4120 = vadd.f32 %v3980, %v4119
    %4121 = vmatmul.f32.gmra.mxu0 %v3939
    %v4122 = vpop.f32.mrf.mxu0
    %v4123 = vadd.f32 %v3980, %v4122
    %4124 = vmatmul.f32.gmra.mxu0 %v3940
    %v4125 = vpop.f32.mrf.mxu0
    %v4126 = vadd.f32 %v3980, %v4125
    %4127 = vmatmul.f32.gmra.mxu0 %v3941
    %v4128 = vpop.f32.mrf.mxu0
    %v4129 = vadd.f32 %v3980, %v4128
    %4130 = vmatmul.f32.gmra.mxu0 %v3942
    %v4131 = vpop.f32.mrf.mxu0
    %v4132 = vadd.f32 %v3980, %v4131
    %4133 = vmatmul.f32.gmra.mxu0 %v3943
    %v4134 = vpop.f32.mrf.mxu0
    %v4135 = vadd.f32 %v3980, %v4134
    %4136 = vmatmul.f32.gmra.mxu0 %v3944
    %v4137 = vpop.f32.mrf.mxu0
    %v4138 = vadd.f32 %v3980, %v4137
    %4139 = vmatmul.f32.gmra.mxu0 %v3945
    %v4140 = vpop.f32.mrf.mxu0
    %v4141 = vadd.f32 %v3980, %v4140
    %4142 = vmatmul.f32.gmra.mxu0 %v3946
    %v4143 = vpop.f32.mrf.mxu0
    %v4144 = vadd.f32 %v3980, %v4143
    %4145 = vmatmul.f32.gmra.mxu0 %v3947
    %v4146 = vpop.f32.mrf.mxu0
    %v4147 = vadd.f32 %v3980, %v4146
    %4148 = vmatmul.f32.gmra.mxu0 %v3948
    %v4149 = vpop.f32.mrf.mxu0
    %v4150 = vadd.f32 %v3980, %v4149
    %4151 = vmatmul.f32.gmra.mxu0 %v3949
    %v4152 = vpop.f32.mrf.mxu0
    %v4153 = vadd.f32 %v3980, %v4152
    %4154 = vmatmul.f32.gmra.mxu0 %v3950
    %v4155 = vpop.f32.mrf.mxu0
    %v4156 = vadd.f32 %v3980, %v4155
    %4157 = vmatmul.f32.gmra.mxu0 %v3951
    %v4158 = vpop.f32.mrf.mxu0
    %v4159 = vadd.f32 %v3980, %v4158
    %4160 = vmatmul.f32.gmra.mxu0 %v3952
    %v4161 = vpop.f32.mrf.mxu0
    %v4162 = vadd.f32 %v3980, %v4161
    %4163 = vmatmul.f32.gmra.mxu0 %v3953
    %v4164 = vpop.f32.mrf.mxu0
    %v4165 = vadd.f32 %v3980, %v4164
    %4166 = vmatmul.f32.gmra.mxu0 %v3954
    %v4167 = vpop.f32.mrf.mxu0
    %v4168 = vadd.f32 %v3980, %v4167
    %4169 = vmatmul.f32.gmra.mxu0 %v3955
    %v4170 = vpop.f32.mrf.mxu0
    %v4171 = vadd.f32 %v3980, %v4170
    %4172 = vmatmul.f32.gmra.mxu0 %v3956
    %v4173 = vpop.f32.mrf.mxu0
    %v4174 = vadd.f32 %v3980, %v4173
    %4175 = vmatmul.f32.gmra.mxu0 %v3957
    %v4176 = vpop.f32.mrf.mxu0
    %v4177 = vadd.f32 %v3980, %v4176
    %4178 = vmatmul.f32.gmra.mxu0 %v3958
    %v4179 = vpop.f32.mrf.mxu0
    %v4180 = vadd.f32 %v3980, %v4179
    %4181 = vmatmul.f32.gmra.mxu0 %v3959
    %v4182 = vpop.f32.mrf.mxu0
    %v4183 = vadd.f32 %v3980, %v4182
    %4184 = vmatmul.f32.gmra.mxu0 %v3960
    %v4185 = vpop.f32.mrf.mxu0
    %v4186 = vadd.f32 %v3980, %v4185
    %4187 = vmatmul.f32.gmra.mxu0 %v3961
    %v4188 = vpop.f32.mrf.mxu0
    %v4189 = vadd.f32 %v3980, %v4188
    %4190 = vdwg.mxu0
    %v4191 = vadd.f32 %v4000, %v4003
    %v4192 = vadd.f32 %v4191, %v4006
    %v4193 = vadd.f32 %v4192, %v4009
    %v4194 = vadd.f32 %v4193, %v4012
    %v4195 = vadd.f32 %v4194, %v4015
    %v4196 = vadd.f32 %v4195, %v4018
    %v4197 = vadd.f32 %v4196, %v4021
    %v4198 = vadd.f32 %v4197, %v4024
    %v4199 = vadd.f32 %v4198, %v4027
    %v4200 = vadd.f32 %v4199, %v4030
    %v4201 = vadd.f32 %v4200, %v4033
    %v4202 = vadd.f32 %v4201, %v4036
    %v4203 = vadd.f32 %v4202, %v4039
    %v4204 = vadd.f32 %v4203, %v4042
    %v4205 = vadd.f32 %v4204, %v4045
    %v4206 = vadd.f32 %v4205, %v4048
    %v4207 = vadd.f32 %v4206, %v4051
    %v4208 = vadd.f32 %v4207, %v4054
    %v4209 = vadd.f32 %v4208, %v4057
    %v4210 = vadd.f32 %v4209, %v4060
    %v4211 = vadd.f32 %v4210, %v4063
    %v4212 = vadd.f32 %v4211, %v4066
    %v4213 = vadd.f32 %v4212, %v4069
    %v4214 = vadd.f32 %v4213, %v4072
    %v4215 = vadd.f32 %v4214, %v4075
    %v4216 = vadd.f32 %v4215, %v4078
    %v4217 = vadd.f32 %v4216, %v4081
    %v4218 = vadd.f32 %v4217, %v4084
    %v4219 = vadd.f32 %v4218, %v4087
    %v4220 = vadd.f32 %v4219, %v4090
    %v4221 = vadd.f32 %v4220, %v4093
    %v4222 = vadd.f32 %v4221, %v4096
    %v4223 = vadd.f32 %v4222, %v4099
    %v4224 = vadd.f32 %v4223, %v4102
    %v4225 = vadd.f32 %v4224, %v4105
    %v4226 = vadd.f32 %v4225, %v4108
    %v4227 = vadd.f32 %v4226, %v4111
    %v4228 = vadd.f32 %v4227, %v4114
    %v4229 = vadd.f32 %v4228, %v4117
    %v4230 = vadd.f32 %v4229, %v4120
    %v4231 = vadd.f32 %v4230, %v4123
    %v4232 = vadd.f32 %v4231, %v4126
    %v4233 = vadd.f32 %v4232, %v4129
    %v4234 = vadd.f32 %v4233, %v4132
    %v4235 = vadd.f32 %v4234, %v4135
    %v4236 = vadd.f32 %v4235, %v4138
    %v4237 = vadd.f32 %v4236, %v4141
    %v4238 = vadd.f32 %v4237, %v4144
    %v4239 = vadd.f32 %v4238, %v4147
    %v4240 = vadd.f32 %v4239, %v4150
    %v4241 = vadd.f32 %v4240, %v4153
    %v4242 = vadd.f32 %v4241, %v4156
    %v4243 = vadd.f32 %v4242, %v4159
    %v4244 = vadd.f32 %v4243, %v4162
    %v4245 = vadd.f32 %v4244, %v4165
    %v4246 = vadd.f32 %v4245, %v4168
    %v4247 = vadd.f32 %v4246, %v4171
    %v4248 = vadd.f32 %v4247, %v4174
    %v4249 = vadd.f32 %v4248, %v4177
    %v4250 = vadd.f32 %v4249, %v4180
    %v4251 = vadd.f32 %v4250, %v4183
    %v4252 = vadd.f32 %v4251, %v4186
    %v4253 = vadd.f32 %v4252, %v4189
    %v4254 = vrot.slane %v4253, 4
    %v4255 = vadd.f32 %v4253, %v4254
    %v4256 = vrot.slane %v4255, 2
    %v4257 = vadd.f32 %v4255, %v4256
    %v4258 = vrot.slane %v4257, 1
    %v4259 = vadd.f32 %v4257, %v4258
    %v4260 = vmul.f32 %v4259, %v3487
    %v4261 = vsub.f32 %v4000, %v4260
    %v4262 = vsub.f32 %v4003, %v4260
    %v4263 = vsub.f32 %v4006, %v4260
    %v4264 = vsub.f32 %v4009, %v4260
    %v4265 = vsub.f32 %v4012, %v4260
    %v4266 = vsub.f32 %v4015, %v4260
    %v4267 = vsub.f32 %v4018, %v4260
    %v4268 = vsub.f32 %v4021, %v4260
    %v4269 = vsub.f32 %v4024, %v4260
    %v4270 = vsub.f32 %v4027, %v4260
    %v4271 = vsub.f32 %v4030, %v4260
    %v4272 = vsub.f32 %v4033, %v4260
    %v4273 = vsub.f32 %v4036, %v4260
    %v4274 = vsub.f32 %v4039, %v4260
    %v4275 = vsub.f32 %v4042, %v4260
    %v4276 = vsub.f32 %v4045, %v4260
    %v4277 = vsub.f32 %v4048, %v4260
    %v4278 = vsub.f32 %v4051, %v4260
    %v4279 = vsub.f32 %v4054, %v4260
    %v4280 = vsub.f32 %v4057, %v4260
    %v4281 = vsub.f32 %v4060, %v4260
    %v4282 = vsub.f32 %v4063, %v4260
    %v4283 = vsub.f32 %v4066, %v4260
    %v4284 = vsub.f32 %v4069, %v4260
    %v4285 = vsub.f32 %v4072, %v4260
    %v4286 = vsub.f32 %v4075, %v4260
    %v4287 = vsub.f32 %v4078, %v4260
    %v4288 = vsub.f32 %v4081, %v4260
    %v4289 = vsub.f32 %v4084, %v4260
    %v4290 = vsub.f32 %v4087, %v4260
    %v4291 = vsub.f32 %v4090, %v4260
    %v4292 = vsub.f32 %v4093, %v4260
    %v4293 = vsub.f32 %v4096, %v4260
    %v4294 = vsub.f32 %v4099, %v4260
    %v4295 = vsub.f32 %v4102, %v4260
    %v4296 = vsub.f32 %v4105, %v4260
    %v4297 = vsub.f32 %v4108, %v4260
    %v4298 = vsub.f32 %v4111, %v4260
    %v4299 = vsub.f32 %v4114, %v4260
    %v4300 = vsub.f32 %v4117, %v4260
    %v4301 = vsub.f32 %v4120, %v4260
    %v4302 = vsub.f32 %v4123, %v4260
    %v4303 = vsub.f32 %v4126, %v4260
    %v4304 = vsub.f32 %v4129, %v4260
    %v4305 = vsub.f32 %v4132, %v4260
    %v4306 = vsub.f32 %v4135, %v4260
    %v4307 = vsub.f32 %v4138, %v4260
    %v4308 = vsub.f32 %v4141, %v4260
    %v4309 = vsub.f32 %v4144, %v4260
    %v4310 = vsub.f32 %v4147, %v4260
    %v4311 = vsub.f32 %v4150, %v4260
    %v4312 = vsub.f32 %v4153, %v4260
    %v4313 = vsub.f32 %v4156, %v4260
    %v4314 = vsub.f32 %v4159, %v4260
    %v4315 = vsub.f32 %v4162, %v4260
    %v4316 = vsub.f32 %v4165, %v4260
    %v4317 = vsub.f32 %v4168, %v4260
    %v4318 = vsub.f32 %v4171, %v4260
    %v4319 = vsub.f32 %v4174, %v4260
    %v4320 = vsub.f32 %v4177, %v4260
    %v4321 = vsub.f32 %v4180, %v4260
    %v4322 = vsub.f32 %v4183, %v4260
    %v4323 = vsub.f32 %v4186, %v4260
    %v4324 = vsub.f32 %v4189, %v4260
    %v4325 = vmul.f32 %v4261, %v4261
    %v4326 = vmul.f32 %v4262, %v4262
    %v4327 = vmul.f32 %v4263, %v4263
    %v4328 = vmul.f32 %v4264, %v4264
    %v4329 = vmul.f32 %v4265, %v4265
    %v4330 = vmul.f32 %v4266, %v4266
    %v4331 = vmul.f32 %v4267, %v4267
    %v4332 = vmul.f32 %v4268, %v4268
    %v4333 = vmul.f32 %v4269, %v4269
    %v4334 = vmul.f32 %v4270, %v4270
    %v4335 = vmul.f32 %v4271, %v4271
    %v4336 = vmul.f32 %v4272, %v4272
    %v4337 = vmul.f32 %v4273, %v4273
    %v4338 = vmul.f32 %v4274, %v4274
    %v4339 = vmul.f32 %v4275, %v4275
    %v4340 = vmul.f32 %v4276, %v4276
    %v4341 = vmul.f32 %v4277, %v4277
    %v4342 = vmul.f32 %v4278, %v4278
    %v4343 = vmul.f32 %v4279, %v4279
    %v4344 = vmul.f32 %v4280, %v4280
    %v4345 = vmul.f32 %v4281, %v4281
    %v4346 = vmul.f32 %v4282, %v4282
    %v4347 = vmul.f32 %v4283, %v4283
    %v4348 = vmul.f32 %v4284, %v4284
    %v4349 = vmul.f32 %v4285, %v4285
    %v4350 = vmul.f32 %v4286, %v4286
    %v4351 = vmul.f32 %v4287, %v4287
    %v4352 = vmul.f32 %v4288, %v4288
    %v4353 = vmul.f32 %v4289, %v4289
    %v4354 = vmul.f32 %v4290, %v4290
    %v4355 = vmul.f32 %v4291, %v4291
    %v4356 = vmul.f32 %v4292, %v4292
    %v4357 = vmul.f32 %v4293, %v4293
    %v4358 = vmul.f32 %v4294, %v4294
    %v4359 = vmul.f32 %v4295, %v4295
    %v4360 = vmul.f32 %v4296, %v4296
    %v4361 = vmul.f32 %v4297, %v4297
    %v4362 = vmul.f32 %v4298, %v4298
    %v4363 = vmul.f32 %v4299, %v4299
    %v4364 = vmul.f32 %v4300, %v4300
    %v4365 = vmul.f32 %v4301, %v4301
    %v4366 = vmul.f32 %v4302, %v4302
    %v4367 = vmul.f32 %v4303, %v4303
    %v4368 = vmul.f32 %v4304, %v4304
    %v4369 = vmul.f32 %v4305, %v4305
    %v4370 = vmul.f32 %v4306, %v4306
    %v4371 = vmul.f32 %v4307, %v4307
    %v4372 = vmul.f32 %v4308, %v4308
    %v4373 = vmul.f32 %v4309, %v4309
    %v4374 = vmul.f32 %v4310, %v4310
    %v4375 = vmul.f32 %v4311, %v4311
    %v4376 = vmul.f32 %v4312, %v4312
    %v4377 = vmul.f32 %v4313, %v4313
    %v4378 = vmul.f32 %v4314, %v4314
    %v4379 = vmul.f32 %v4315, %v4315
    %v4380 = vmul.f32 %v4316, %v4316
    %v4381 = vmul.f32 %v4317, %v4317
    %v4382 = vmul.f32 %v4318, %v4318
    %v4383 = vmul.f32 %v4319, %v4319
    %v4384 = vmul.f32 %v4320, %v4320
    %v4385 = vmul.f32 %v4321, %v4321
    %v4386 = vmul.f32 %v4322, %v4322
    %v4387 = vmul.f32 %v4323, %v4323
    %v4388 = vmul.f32 %v4324, %v4324
    %v4389 = vadd.f32 %v4325, %v4326
    %v4390 = vadd.f32 %v4389, %v4327
    %v4391 = vadd.f32 %v4390, %v4328
    %v4392 = vadd.f32 %v4391, %v4329
    %v4393 = vadd.f32 %v4392, %v4330
    %v4394 = vadd.f32 %v4393, %v4331
    %v4395 = vadd.f32 %v4394, %v4332
    %v4396 = vadd.f32 %v4395, %v4333
    %v4397 = vadd.f32 %v4396, %v4334
    %v4398 = vadd.f32 %v4397, %v4335
    %v4399 = vadd.f32 %v4398, %v4336
    %v4400 = vadd.f32 %v4399, %v4337
    %v4401 = vadd.f32 %v4400, %v4338
    %v4402 = vadd.f32 %v4401, %v4339
    %v4403 = vadd.f32 %v4402, %v4340
    %v4404 = vadd.f32 %v4403, %v4341
    %v4405 = vadd.f32 %v4404, %v4342
    %v4406 = vadd.f32 %v4405, %v4343
    %v4407 = vadd.f32 %v4406, %v4344
    %v4408 = vadd.f32 %v4407, %v4345
    %v4409 = vadd.f32 %v4408, %v4346
    %v4410 = vadd.f32 %v4409, %v4347
    %v4411 = vadd.f32 %v4410, %v4348
    %v4412 = vadd.f32 %v4411, %v4349
    %v4413 = vadd.f32 %v4412, %v4350
    %v4414 = vadd.f32 %v4413, %v4351
    %v4415 = vadd.f32 %v4414, %v4352
    %v4416 = vadd.f32 %v4415, %v4353
    %v4417 = vadd.f32 %v4416, %v4354
    %v4418 = vadd.f32 %v4417, %v4355
    %v4419 = vadd.f32 %v4418, %v4356
    %v4420 = vadd.f32 %v4419, %v4357
    %v4421 = vadd.f32 %v4420, %v4358
    %v4422 = vadd.f32 %v4421, %v4359
    %v4423 = vadd.f32 %v4422, %v4360
    %v4424 = vadd.f32 %v4423, %v4361
    %v4425 = vadd.f32 %v4424, %v4362
    %v4426 = vadd.f32 %v4425, %v4363
    %v4427 = vadd.f32 %v4426, %v4364
    %v4428 = vadd.f32 %v4427, %v4365
    %v4429 = vadd.f32 %v4428, %v4366
    %v4430 = vadd.f32 %v4429, %v4367
    %v4431 = vadd.f32 %v4430, %v4368
    %v4432 = vadd.f32 %v4431, %v4369
    %v4433 = vadd.f32 %v4432, %v4370
    %v4434 = vadd.f32 %v4433, %v4371
    %v4435 = vadd.f32 %v4434, %v4372
    %v4436 = vadd.f32 %v4435, %v4373
    %v4437 = vadd.f32 %v4436, %v4374
    %v4438 = vadd.f32 %v4437, %v4375
    %v4439 = vadd.f32 %v4438, %v4376
    %v4440 = vadd.f32 %v4439, %v4377
    %v4441 = vadd.f32 %v4440, %v4378
    %v4442 = vadd.f32 %v4441, %v4379
    %v4443 = vadd.f32 %v4442, %v4380
    %v4444 = vadd.f32 %v4443, %v4381
    %v4445 = vadd.f32 %v4444, %v4382
    %v4446 = vadd.f32 %v4445, %v4383
    %v4447 = vadd.f32 %v4446, %v4384
    %v4448 = vadd.f32 %v4447, %v4385
    %v4449 = vadd.f32 %v4448, %v4386
    %v4450 = vadd.f32 %v4449, %v4387
    %v4451 = vadd.f32 %v4450, %v4388
    %v4452 = vrot.slane %v4451, 4
    %v4453 = vadd.f32 %v4451, %v4452
    %v4454 = vrot.slane %v4453, 2
    %v4455 = vadd.f32 %v4453, %v4454
    %v4456 = vrot.slane %v4455, 1
    %v4457 = vadd.f32 %v4455, %v4456
    %v4458 = vmul.f32 %v4457, %v3487
    %v4459 = vadd.f32 %v4458, 1e-05
    %v4460 = vrsqrt.pop %v4459
    %v4461 = vmul.f32 %v4460, %v4459
    %v4462 = vmul.f32 %v4461, %v4460
    %v4463 = vmul.f32 0.5, %v4462
    %v4464 = vsub.f32 1.5, %v4463
    %v4465 = vmul.f32 %v4460, %v4464
    %vm4466 = vweird.f32 %v4459
    %vm4467 = vweird.f32 %v4460
    %vm4468 = vmor %vm4466, %vm4467
    %v4469 = vsel %vm4468, %v4460, %v4465
    %v4470 = vmul.f32 %v4261, %v4469
    %v4471 = vmul.f32 %v4262, %v4469
    %v4472 = vmul.f32 %v4263, %v4469
    %v4473 = vmul.f32 %v4264, %v4469
    %v4474 = vmul.f32 %v4265, %v4469
    %v4475 = vmul.f32 %v4266, %v4469
    %v4476 = vmul.f32 %v4267, %v4469
    %v4477 = vmul.f32 %v4268, %v4469
    %v4478 = vmul.f32 %v4269, %v4469
    %v4479 = vmul.f32 %v4270, %v4469
    %v4480 = vmul.f32 %v4271, %v4469
    %v4481 = vmul.f32 %v4272, %v4469
    %v4482 = vmul.f32 %v4273, %v4469
    %v4483 = vmul.f32 %v4274, %v4469
    %v4484 = vmul.f32 %v4275, %v4469
    %v4485 = vmul.f32 %v4276, %v4469
    %v4486 = vmul.f32 %v4277, %v4469
    %v4487 = vmul.f32 %v4278, %v4469
    %v4488 = vmul.f32 %v4279, %v4469
    %v4489 = vmul.f32 %v4280, %v4469
    %v4490 = vmul.f32 %v4281, %v4469
    %v4491 = vmul.f32 %v4282, %v4469
    %v4492 = vmul.f32 %v4283, %v4469
    %v4493 = vmul.f32 %v4284, %v4469
    %v4494 = vmul.f32 %v4285, %v4469
    %v4495 = vmul.f32 %v4286, %v4469
    %v4496 = vmul.f32 %v4287, %v4469
    %v4497 = vmul.f32 %v4288, %v4469
    %v4498 = vmul.f32 %v4289, %v4469
    %v4499 = vmul.f32 %v4290, %v4469
    %v4500 = vmul.f32 %v4291, %v4469
    %v4501 = vmul.f32 %v4292, %v4469
    %v4502 = vmul.f32 %v4293, %v4469
    %v4503 = vmul.f32 %v4294, %v4469
    %v4504 = vmul.f32 %v4295, %v4469
    %v4505 = vmul.f32 %v4296, %v4469
    %v4506 = vmul.f32 %v4297, %v4469
    %v4507 = vmul.f32 %v4298, %v4469
    %v4508 = vmul.f32 %v4299, %v4469
    %v4509 = vmul.f32 %v4300, %v4469
    %v4510 = vmul.f32 %v4301, %v4469
    %v4511 = vmul.f32 %v4302, %v4469
    %v4512 = vmul.f32 %v4303, %v4469
    %v4513 = vmul.f32 %v4304, %v4469
    %v4514 = vmul.f32 %v4305, %v4469
    %v4515 = vmul.f32 %v4306, %v4469
    %v4516 = vmul.f32 %v4307, %v4469
    %v4517 = vmul.f32 %v4308, %v4469
    %v4518 = vmul.f32 %v4309, %v4469
    %v4519 = vmul.f32 %v4310, %v4469
    %v4520 = vmul.f32 %v4311, %v4469
    %v4521 = vmul.f32 %v4312, %v4469
    %v4522 = vmul.f32 %v4313, %v4469
    %v4523 = vmul.f32 %v4314, %v4469
    %v4524 = vmul.f32 %v4315, %v4469
    %v4525 = vmul.f32 %v4316, %v4469
    %v4526 = vmul.f32 %v4317, %v4469
    %v4527 = vmul.f32 %v4318, %v4469
    %v4528 = vmul.f32 %v4319, %v4469
    %v4529 = vmul.f32 %v4320, %v4469
    %v4530 = vmul.f32 %v4321, %v4469
    %v4531 = vmul.f32 %v4322, %v4469
    %v4532 = vmul.f32 %v4323, %v4469
    %v4533 = vmul.f32 %v4324, %v4469
    %v4534 = vld [vmem:[%s7] sm:$0x1]
    %v4536 = vperm.slane %v4534, 0
    %v4538 = vmul.f32 %v4470, %v4536
    %v4539 = vmul.f32 %v4471, %v4536
    %v4540 = vmul.f32 %v4472, %v4536
    %v4541 = vmul.f32 %v4473, %v4536
    %v4542 = vmul.f32 %v4474, %v4536
    %v4543 = vmul.f32 %v4475, %v4536
    %v4544 = vmul.f32 %v4476, %v4536
    %v4545 = vmul.f32 %v4477, %v4536
    %v4546 = vmul.f32 %v4478, %v4536
    %v4547 = vmul.f32 %v4479, %v4536
    %v4548 = vmul.f32 %v4480, %v4536
    %v4549 = vmul.f32 %v4481, %v4536
    %v4550 = vmul.f32 %v4482, %v4536
    %v4551 = vmul.f32 %v4483, %v4536
    %v4552 = vmul.f32 %v4484, %v4536
    %v4553 = vmul.f32 %v4485, %v4536
    %v4554 = vmul.f32 %v4486, %v4536
    %v4555 = vmul.f32 %v4487, %v4536
    %v4556 = vmul.f32 %v4488, %v4536
    %v4557 = vmul.f32 %v4489, %v4536
    %v4558 = vmul.f32 %v4490, %v4536
    %v4559 = vmul.f32 %v4491, %v4536
    %v4560 = vmul.f32 %v4492, %v4536
    %v4561 = vmul.f32 %v4493, %v4536
    %v4562 = vmul.f32 %v4494, %v4536
    %v4563 = vmul.f32 %v4495, %v4536
    %v4564 = vmul.f32 %v4496, %v4536
    %v4565 = vmul.f32 %v4497, %v4536
    %v4566 = vmul.f32 %v4498, %v4536
    %v4567 = vmul.f32 %v4499, %v4536
    %v4568 = vmul.f32 %v4500, %v4536
    %v4569 = vmul.f32 %v4501, %v4536
    %v4570 = vmul.f32 %v4502, %v4536
    %v4571 = vmul.f32 %v4503, %v4536
    %v4572 = vmul.f32 %v4504, %v4536
    %v4573 = vmul.f32 %v4505, %v4536
    %v4574 = vmul.f32 %v4506, %v4536
    %v4575 = vmul.f32 %v4507, %v4536
    %v4576 = vmul.f32 %v4508, %v4536
    %v4577 = vmul.f32 %v4509, %v4536
    %v4578 = vmul.f32 %v4510, %v4536
    %v4579 = vmul.f32 %v4511, %v4536
    %v4580 = vmul.f32 %v4512, %v4536
    %v4581 = vmul.f32 %v4513, %v4536
    %v4582 = vmul.f32 %v4514, %v4536
    %v4583 = vmul.f32 %v4515, %v4536
    %v4584 = vmul.f32 %v4516, %v4536
    %v4585 = vmul.f32 %v4517, %v4536
    %v4586 = vmul.f32 %v4518, %v4536
    %v4587 = vmul.f32 %v4519, %v4536
    %v4588 = vmul.f32 %v4520, %v4536
    %v4589 = vmul.f32 %v4521, %v4536
    %v4590 = vmul.f32 %v4522, %v4536
    %v4591 = vmul.f32 %v4523, %v4536
    %v4592 = vmul.f32 %v4524, %v4536
    %v4593 = vmul.f32 %v4525, %v4536
    %v4594 = vmul.f32 %v4526, %v4536
    %v4595 = vmul.f32 %v4527, %v4536
    %v4596 = vmul.f32 %v4528, %v4536
    %v4597 = vmul.f32 %v4529, %v4536
    %v4598 = vmul.f32 %v4530, %v4536
    %v4599 = vmul.f32 %v4531, %v4536
    %v4600 = vmul.f32 %v4532, %v4536
    %v4601 = vmul.f32 %v4533, %v4536
    %v4602 = vld [vmem:[%s8] sm:$0x1]
    %v4604 = vperm.slane %v4602, 0
    %v4606 = vadd.f32 %v4538, %v4604
    %v4607 = vadd.f32 %v4539, %v4604
    %v4608 = vadd.f32 %v4540, %v4604
    %v4609 = vadd.f32 %v4541, %v4604
    %v4610 = vadd.f32 %v4542, %v4604
    %v4611 = vadd.f32 %v4543, %v4604
    %v4612 = vadd.f32 %v4544, %v4604
    %v4613 = vadd.f32 %v4545, %v4604
    %v4614 = vadd.f32 %v4546, %v4604
    %v4615 = vadd.f32 %v4547, %v4604
    %v4616 = vadd.f32 %v4548, %v4604
    %v4617 = vadd.f32 %v4549, %v4604
    %v4618 = vadd.f32 %v4550, %v4604
    %v4619 = vadd.f32 %v4551, %v4604
    %v4620 = vadd.f32 %v4552, %v4604
    %v4621 = vadd.f32 %v4553, %v4604
    %v4622 = vadd.f32 %v4554, %v4604
    %v4623 = vadd.f32 %v4555, %v4604
    %v4624 = vadd.f32 %v4556, %v4604
    %v4625 = vadd.f32 %v4557, %v4604
    %v4626 = vadd.f32 %v4558, %v4604
    %v4627 = vadd.f32 %v4559, %v4604
    %v4628 = vadd.f32 %v4560, %v4604
    %v4629 = vadd.f32 %v4561, %v4604
    %v4630 = vadd.f32 %v4562, %v4604
    %v4631 = vadd.f32 %v4563, %v4604
    %v4632 = vadd.f32 %v4564, %v4604
    %v4633 = vadd.f32 %v4565, %v4604
    %v4634 = vadd.f32 %v4566, %v4604
    %v4635 = vadd.f32 %v4567, %v4604
    %v4636 = vadd.f32 %v4568, %v4604
    %v4637 = vadd.f32 %v4569, %v4604
    %v4638 = vadd.f32 %v4570, %v4604
    %v4639 = vadd.f32 %v4571, %v4604
    %v4640 = vadd.f32 %v4572, %v4604
    %v4641 = vadd.f32 %v4573, %v4604
    %v4642 = vadd.f32 %v4574, %v4604
    %v4643 = vadd.f32 %v4575, %v4604
    %v4644 = vadd.f32 %v4576, %v4604
    %v4645 = vadd.f32 %v4577, %v4604
    %v4646 = vadd.f32 %v4578, %v4604
    %v4647 = vadd.f32 %v4579, %v4604
    %v4648 = vadd.f32 %v4580, %v4604
    %v4649 = vadd.f32 %v4581, %v4604
    %v4650 = vadd.f32 %v4582, %v4604
    %v4651 = vadd.f32 %v4583, %v4604
    %v4652 = vadd.f32 %v4584, %v4604
    %v4653 = vadd.f32 %v4585, %v4604
    %v4654 = vadd.f32 %v4586, %v4604
    %v4655 = vadd.f32 %v4587, %v4604
    %v4656 = vadd.f32 %v4588, %v4604
    %v4657 = vadd.f32 %v4589, %v4604
    %v4658 = vadd.f32 %v4590, %v4604
    %v4659 = vadd.f32 %v4591, %v4604
    %v4660 = vadd.f32 %v4592, %v4604
    %v4661 = vadd.f32 %v4593, %v4604
    %v4662 = vadd.f32 %v4594, %v4604
    %v4663 = vadd.f32 %v4595, %v4604
    %v4664 = vadd.f32 %v4596, %v4604
    %v4665 = vadd.f32 %v4597, %v4604
    %v4666 = vadd.f32 %v4598, %v4604
    %v4667 = vadd.f32 %v4599, %v4604
    %v4668 = vadd.f32 %v4600, %v4604
    %v4669 = vadd.f32 %v4601, %v4604
    %v4766 = vrot.slane %v36, 1
    %v4767 = vrot.slane %v37, 1
    %v4768 = vsel %vm361, %v4766, %v4767
    %v4769 = vrot.slane %v38, 1
    %v4770 = vsel %vm361, %v4767, %v4769
    %v4771 = vrot.slane %v39, 1
    %v4772 = vrot.slane %v40, 1
    %v4773 = vsel %vm361, %v4771, %v4772
    %v4774 = vrot.slane %v41, 1
    %v4775 = vsel %vm361, %v4772, %v4774
    %v4776 = vrot.slane %v42, 1
    %v4777 = vrot.slane %v43, 1
    %v4778 = vsel %vm361, %v4776, %v4777
    %v4779 = vrot.slane %v44, 1
    %v4780 = vsel %vm361, %v4777, %v4779
    %v4781 = vrot.slane %v45, 1
    %v4782 = vrot.slane %v46, 1
    %v4783 = vsel %vm361, %v4781, %v4782
    %v4784 = vrot.slane %v47, 1
    %v4785 = vsel %vm361, %v4782, %v4784
    %v4786 = vrot.slane %v48, 1
    %v4787 = vrot.slane %v49, 1
    %v4788 = vsel %vm361, %v4786, %v4787
    %v4789 = vrot.slane %v50, 1
    %v4790 = vsel %vm361, %v4787, %v4789
    %v4791 = vrot.slane %v51, 1
    %v4792 = vrot.slane %v52, 1
    %v4793 = vsel %vm361, %v4791, %v4792
    %v4794 = vrot.slane %v53, 1
    %v4795 = vsel %vm361, %v4792, %v4794
    %v4796 = vrot.slane %v54, 1
    %v4797 = vrot.slane %v55, 1
    %v4798 = vsel %vm361, %v4796, %v4797
    %v4799 = vrot.slane %v56, 1
    %v4800 = vsel %vm361, %v4797, %v4799
    %v4801 = vrot.slane %v57, 1
    %v4802 = vrot.slane %v58, 1
    %v4803 = vsel %vm361, %v4801, %v4802
    %v4804 = vrot.slane %v59, 1
    %v4805 = vsel %vm361, %v4802, %v4804
    %v4806 = vrot.slane %v60, 1
    %v4807 = vrot.slane %v61, 1
    %v4808 = vsel %vm361, %v4806, %v4807
    %v4809 = vrot.slane %v62, 1
    %v4810 = vsel %vm361, %v4807, %v4809
    %v4811 = vrot.slane %v63, 1
    %v4812 = vrot.slane %v64, 1
    %v4813 = vsel %vm361, %v4811, %v4812
    %v4814 = vrot.slane %v65, 1
    %v4815 = vsel %vm361, %v4812, %v4814
    %v4816 = vrot.slane %v66, 1
    %v4817 = vrot.slane %v67, 1
    %v4818 = vsel %vm361, %v4816, %v4817
    %v4819 = vrot.slane %v68, 1
    %v4820 = vsel %vm361, %v4817, %v4819
    %v4821 = vrot.slane %v69, 1
    %v4822 = vrot.slane %v70, 1
    %v4823 = vsel %vm361, %v4821, %v4822
    %v4824 = vrot.slane %v71, 1
    %v4825 = vsel %vm361, %v4822, %v4824
    %v4826 = vrot.slane %v72, 1
    %v4827 = vrot.slane %v73, 1
    %v4828 = vsel %vm361, %v4826, %v4827
    %v4829 = vrot.slane %v74, 1
    %v4830 = vsel %vm361, %v4827, %v4829
    %v4831 = vrot.slane %v75, 1
    %v4832 = vrot.slane %v76, 1
    %v4833 = vsel %vm361, %v4831, %v4832
    %v4834 = vrot.slane %v77, 1
    %v4835 = vsel %vm361, %v4832, %v4834
    %v4836 = vrot.slane %v78, 1
    %v4837 = vrot.slane %v79, 1
    %v4838 = vsel %vm361, %v4836, %v4837
    %v4839 = vrot.slane %v80, 1
    %v4840 = vsel %vm361, %v4837, %v4839
    %v4841 = vrot.slane %v81, 1
    %v4842 = vrot.slane %v82, 1
    %v4843 = vsel %vm361, %v4841, %v4842
    %v4844 = vrot.slane %v83, 1
    %v4845 = vsel %vm361, %v4842, %v4844
    %v4846 = vrot.slane %v90, 1
    %v4847 = vrot.slane %v91, 1
    %v4848 = vsel %vm361, %v4846, %v4847
    %v4849 = vrot.slane %v92, 1
    %v4850 = vsel %vm361, %v4847, %v4849
    %v4851 = vrot.slane %v93, 1
    %v4852 = vrot.slane %v94, 1
    %v4853 = vsel %vm361, %v4851, %v4852
    %v4854 = vrot.slane %v95, 1
    %v4855 = vsel %vm361, %v4852, %v4854
    %v4856 = vrot.slane %v96, 1
    %v4857 = vrot.slane %v97, 1
    %v4858 = vsel %vm361, %v4856, %v4857
    %v4859 = vrot.slane %v98, 1
    %v4860 = vsel %vm361, %v4857, %v4859
    %v4861 = vrot.slane %v99, 1
    %v4862 = vrot.slane %v100, 1
    %v4863 = vsel %vm361, %v4861, %v4862
    %v4864 = vrot.slane %v101, 1
    %v4865 = vsel %vm361, %v4862, %v4864
    %v4866 = vrot.slane %v102, 1
    %v4867 = vrot.slane %v103, 1
    %v4868 = vsel %vm361, %v4866, %v4867
    %v4869 = vrot.slane %v104, 1
    %v4870 = vsel %vm361, %v4867, %v4869
    %v4871 = vrot.slane %v105, 1
    %v4872 = vrot.slane %v106, 1
    %v4873 = vsel %vm361, %v4871, %v4872
    %v4874 = vrot.slane %v107, 1
    %v4875 = vsel %vm361, %v4872, %v4874
    %v4876 = vrot.slane %v108, 1
    %v4877 = vrot.slane %v109, 1
    %v4878 = vsel %vm361, %v4876, %v4877
    %v4879 = vrot.slane %v110, 1
    %v4880 = vsel %vm361, %v4877, %v4879
    %v4881 = vrot.slane %v111, 1
    %v4882 = vrot.slane %v112, 1
    %v4883 = vsel %vm361, %v4881, %v4882
    %v4884 = vrot.slane %v113, 1
    %v4885 = vsel %vm361, %v4882, %v4884
    %v4886 = vrot.slane %v114, 1
    %v4887 = vrot.slane %v115, 1
    %v4888 = vsel %vm361, %v4886, %v4887
    %v4889 = vrot.slane %v116, 1
    %v4890 = vsel %vm361, %v4887, %v4889
    %v4891 = vrot.slane %v117, 1
    %v4892 = vrot.slane %v118, 1
    %v4893 = vsel %vm361, %v4891, %v4892
    %v4894 = vrot.slane %v119, 1
    %v4895 = vsel %vm361, %v4892, %v4894
    %v4896 = vrot.slane %v120, 1
    %v4897 = vrot.slane %v121, 1
    %v4898 = vsel %vm361, %v4896, %v4897
    %v4899 = vrot.slane %v122, 1
    %v4900 = vsel %vm361, %v4897, %v4899
    %v4901 = vrot.slane %v123, 1
    %v4902 = vrot.slane %v124, 1
    %v4903 = vsel %vm361, %v4901, %v4902
    %v4904 = vrot.slane %v125, 1
    %v4905 = vsel %vm361, %v4902, %v4904
    %v4906 = vrot.slane %v126, 1
    %v4907 = vrot.slane %v127, 1
    %v4908 = vsel %vm361, %v4906, %v4907
    %v4909 = vrot.slane %v128, 1
    %v4910 = vsel %vm361, %v4907, %v4909
    %v4911 = vrot.slane %v129, 1
    %v4912 = vrot.slane %v130, 1
    %v4913 = vsel %vm361, %v4911, %v4912
    %v4914 = vrot.slane %v131, 1
    %v4915 = vsel %vm361, %v4912, %v4914
    %v4916 = vrot.slane %v132, 1
    %v4917 = vrot.slane %v133, 1
    %v4918 = vsel %vm361, %v4916, %v4917
    %v4919 = vrot.slane %v134, 1
    %v4920 = vsel %vm361, %v4917, %v4919
    %v4921 = vrot.slane %v135, 1
    %v4922 = vrot.slane %v136, 1
    %v4923 = vsel %vm361, %v4921, %v4922
    %v4924 = vrot.slane %v137, 1
    %v4925 = vsel %vm361, %v4922, %v4924
    %v4990 = vadd.f32 %v4768, %v4606
    %v4991 = vadd.f32 %v4770, %v4607
    %v4992 = vadd.f32 %v4773, %v4608
    %v4993 = vadd.f32 %v4775, %v4609
    %v4994 = vadd.f32 %v4778, %v4610
    %v4995 = vadd.f32 %v4780, %v4611
    %v4996 = vadd.f32 %v4783, %v4612
    %v4997 = vadd.f32 %v4785, %v4613
    %v4998 = vadd.f32 %v4788, %v4614
    %v4999 = vadd.f32 %v4790, %v4615
    %v5000 = vadd.f32 %v4793, %v4616
    %v5001 = vadd.f32 %v4795, %v4617
    %v5002 = vadd.f32 %v4798, %v4618
    %v5003 = vadd.f32 %v4800, %v4619
    %v5004 = vadd.f32 %v4803, %v4620
    %v5005 = vadd.f32 %v4805, %v4621
    %v5006 = vadd.f32 %v4808, %v4622
    %v5007 = vadd.f32 %v4810, %v4623
    %v5008 = vadd.f32 %v4813, %v4624
    %v5009 = vadd.f32 %v4815, %v4625
    %v5010 = vadd.f32 %v4818, %v4626
    %v5011 = vadd.f32 %v4820, %v4627
    %v5012 = vadd.f32 %v4823, %v4628
    %v5013 = vadd.f32 %v4825, %v4629
    %v5014 = vadd.f32 %v4828, %v4630
    %v5015 = vadd.f32 %v4830, %v4631
    %v5016 = vadd.f32 %v4833, %v4632
    %v5017 = vadd.f32 %v4835, %v4633
    %v5018 = vadd.f32 %v4838, %v4634
    %v5019 = vadd.f32 %v4840, %v4635
    %v5020 = vadd.f32 %v4843, %v4636
    %v5021 = vadd.f32 %v4845, %v4637
    %v5022 = vadd.f32 %v4848, %v4638
    %v5023 = vadd.f32 %v4850, %v4639
    %v5024 = vadd.f32 %v4853, %v4640
    %v5025 = vadd.f32 %v4855, %v4641
    %v5026 = vadd.f32 %v4858, %v4642
    %v5027 = vadd.f32 %v4860, %v4643
    %v5028 = vadd.f32 %v4863, %v4644
    %v5029 = vadd.f32 %v4865, %v4645
    %v5030 = vadd.f32 %v4868, %v4646
    %v5031 = vadd.f32 %v4870, %v4647
    %v5032 = vadd.f32 %v4873, %v4648
    %v5033 = vadd.f32 %v4875, %v4649
    %v5034 = vadd.f32 %v4878, %v4650
    %v5035 = vadd.f32 %v4880, %v4651
    %v5036 = vadd.f32 %v4883, %v4652
    %v5037 = vadd.f32 %v4885, %v4653
    %v5038 = vadd.f32 %v4888, %v4654
    %v5039 = vadd.f32 %v4890, %v4655
    %v5040 = vadd.f32 %v4893, %v4656
    %v5041 = vadd.f32 %v4895, %v4657
    %v5042 = vadd.f32 %v4898, %v4658
    %v5043 = vadd.f32 %v4900, %v4659
    %v5044 = vadd.f32 %v4903, %v4660
    %v5045 = vadd.f32 %v4905, %v4661
    %v5046 = vadd.f32 %v4908, %v4662
    %v5047 = vadd.f32 %v4910, %v4663
    %v5048 = vadd.f32 %v4913, %v4664
    %v5049 = vadd.f32 %v4915, %v4665
    %v5050 = vadd.f32 %v4918, %v4666
    %v5051 = vadd.f32 %v4920, %v4667
    %v5052 = vadd.f32 %v4923, %v4668
    %v5053 = vadd.f32 %v4925, %v4669
    %5054 = vst [vmem:[#allocation2] sm:$0xff] %v4990
    %5055 = vst [vmem:[#allocation2 + $0x8] sm:$0xff] %v4991
    %5056 = vst [vmem:[#allocation2 + $0x10] sm:$0xff] %v4992
    %5057 = vst [vmem:[#allocation2 + $0x18] sm:$0xff] %v4993
    %5058 = vst [vmem:[#allocation2 + $0x20] sm:$0xff] %v4994
    %5059 = vst [vmem:[#allocation2 + $0x28] sm:$0xff] %v4995
    %5060 = vst [vmem:[#allocation2 + $0x30] sm:$0xff] %v4996
    %5061 = vst [vmem:[#allocation2 + $0x38] sm:$0xff] %v4997
    %5062 = vst [vmem:[#allocation2 + $0x40] sm:$0xff] %v4998
    %5063 = vst [vmem:[#allocation2 + $0x48] sm:$0xff] %v4999
    %5064 = vst [vmem:[#allocation2 + $0x50] sm:$0xff] %v5000
    %5065 = vst [vmem:[#allocation2 + $0x58] sm:$0xff] %v5001
    %5066 = vst [vmem:[#allocation2 + $0x60] sm:$0xff] %v5002
    %5067 = vst [vmem:[#allocation2 + $0x68] sm:$0xff] %v5003
    %5068 = vst [vmem:[#allocation2 + $0x70] sm:$0xff] %v5004
    %5069 = vst [vmem:[#allocation2 + $0x78] sm:$0xff] %v5005
    %5070 = vst [vmem:[#allocation2 + $0x80] sm:$0xff] %v5006
    %5071 = vst [vmem:[#allocation2 + $0x88] sm:$0xff] %v5007
    %5072 = vst [vmem:[#allocation2 + $0x90] sm:$0xff] %v5008
    %5073 = vst [vmem:[#allocation2 + $0x98] sm:$0xff] %v5009
    %5074 = vst [vmem:[#allocation2 + $0xa0] sm:$0xff] %v5010
    %5075 = vst [vmem:[#allocation2 + $0xa8] sm:$0xff] %v5011
    %5076 = vst [vmem:[#allocation2 + $0xb0] sm:$0xff] %v5012
    %5077 = vst [vmem:[#allocation2 + $0xb8] sm:$0xff] %v5013
    %5078 = vst [vmem:[#allocation2 + $0xc0] sm:$0xff] %v5014
    %5079 = vst [vmem:[#allocation2 + $0xc8] sm:$0xff] %v5015
    %5080 = vst [vmem:[#allocation2 + $0xd0] sm:$0xff] %v5016
    %5081 = vst [vmem:[#allocation2 + $0xd8] sm:$0xff] %v5017
    %5082 = vst [vmem:[#allocation2 + $0xe0] sm:$0xff] %v5018
    %5083 = vst [vmem:[#allocation2 + $0xe8] sm:$0xff] %v5019
    %5084 = vst [vmem:[#allocation2 + $0xf0] sm:$0xff] %v5020
    %5085 = vst [vmem:[#allocation2 + $0xf8] sm:$0xff] %v5021
    %5086 = vst [vmem:[#allocation2 + $0x100] sm:$0xff] %v5022
    %5087 = vst [vmem:[#allocation2 + $0x108] sm:$0xff] %v5023
    %5088 = vst [vmem:[#allocation2 + $0x110] sm:$0xff] %v5024
    %5089 = vst [vmem:[#allocation2 + $0x118] sm:$0xff] %v5025
    %5090 = vst [vmem:[#allocation2 + $0x120] sm:$0xff] %v5026
    %5091 = vst [vmem:[#allocation2 + $0x128] sm:$0xff] %v5027
    %5092 = vst [vmem:[#allocation2 + $0x130] sm:$0xff] %v5028
    %5093 = vst [vmem:[#allocation2 + $0x138] sm:$0xff] %v5029
    %5094 = vst [vmem:[#allocation2 + $0x140] sm:$0xff] %v5030
    %5095 = vst [vmem:[#allocation2 + $0x148] sm:$0xff] %v5031
    %5096 = vst [vmem:[#allocation2 + $0x150] sm:$0xff] %v5032
    %5097 = vst [vmem:[#allocation2 + $0x158] sm:$0xff] %v5033
    %5098 = vst [vmem:[#allocation2 + $0x160] sm:$0xff] %v5034
    %5099 = vst [vmem:[#allocation2 + $0x168] sm:$0xff] %v5035
    %5100 = vst [vmem:[#allocation2 + $0x170] sm:$0xff] %v5036
    %5101 = vst [vmem:[#allocation2 + $0x178] sm:$0xff] %v5037
    %5102 = vst [vmem:[#allocation2 + $0x180] sm:$0xff] %v5038
    %5103 = vst [vmem:[#allocation2 + $0x188] sm:$0xff] %v5039
    %5104 = vst [vmem:[#allocation2 + $0x190] sm:$0xff] %v5040
    %5105 = vst [vmem:[#allocation2 + $0x198] sm:$0xff] %v5041
    %5106 = vst [vmem:[#allocation2 + $0x1a0] sm:$0xff] %v5042
    %5107 = vst [vmem:[#allocation2 + $0x1a8] sm:$0xff] %v5043
    %5108 = vst [vmem:[#allocation2 + $0x1b0] sm:$0xff] %v5044
    %5109 = vst [vmem:[#allocation2 + $0x1b8] sm:$0xff] %v5045
    %5110 = vst [vmem:[#allocation2 + $0x1c0] sm:$0xff] %v5046
    %5111 = vst [vmem:[#allocation2 + $0x1c8] sm:$0xff] %v5047
    %5112 = vst [vmem:[#allocation2 + $0x1d0] sm:$0xff] %v5048
    %5113 = vst [vmem:[#allocation2 + $0x1d8] sm:$0xff] %v5049
    %5114 = vst [vmem:[#allocation2 + $0x1e0] sm:$0xff] %v5050
    %5115 = vst [vmem:[#allocation2 + $0x1e8] sm:$0xff] %v5051
    %5116 = vst [vmem:[#allocation2 + $0x1f0] sm:$0xff] %v5052
    %5117 = vst [vmem:[#allocation2 + $0x1f8] sm:$0xff] %v5053
    // Predicated region
    $region38: #{resblock_forward.1} parent=1 // pred_check
      _
    $region39: #{resblock_forward.1} parent=1 // pred_check_branch
      %5119 = sbr.rel (0) target = $region41
    $region40: #{resblock_forward.1} parent=1 // pred_region
      %5121 = vsyncadd [#allocation3], 0
      %s5122 = sshll.u32 [#allocation2], 4
      %s5123 = int_to_ptr.vmem [resolvable:$true] %s5122
      %s5124 = sshll.u32 %s9, 4
      %s5125 = int_to_ptr.hbm [resolvable:$true] %s5124
      %5130 = dma.vmem_to_hbm [thread:$0]  %s5123, 8192, %s5125, [#allocation3], 128, 128, 8
    $region41: #{resblock_forward.1} parent=1 // pred_fallthru
      _
    // Predicated region
    $region42: #{resblock_forward.1} parent=1 // pred_check
      _
    $region43: #{resblock_forward.1} parent=1 // pred_check_branch
      %5132 = sbr.rel (0) target = $region45
    $region44: #{resblock_forward.1} parent=1 // pred_region
      %5134 = dma.done [#allocation3], 8192
    $region45: #{resblock_forward.1} parent=1 // pred_fallthru
      _
    %5135 = vsyncpa [#allocation3], 1

</llo_original>
